<compile_context>
chip_gen: v5e
topology: v5e:2x2
jax: 0.10.0
libtpu: 0.0.40
codegen_flags: <defaults>
</compile_context>

<pallas_src>
import functools

import numpy as np
import jax
import jax.numpy as jnp
from jax.experimental import pallas as pl
from jax.experimental.pallas import tpu as pltpu

# ---- model hyper-parameters (small, consistent with the module) -------------
HIDDEN = 32        # hidden_dim
KSIZE = 3          # kernel_size (odd -> symmetric 'same' padding)
PATCH = 2          # patch_size
NUM_LAYERS = 4     # num_layers
NUM_CLASSES = 10   # num_classes
NUM_STAGES = 4     # fixed in BayesConvMixer2.__init__
BN_EPS = 1e-5      # PyTorch BatchNorm2d default eps

_INV_SQRT2 = 0.7071067811865476


def _gelu_exact(x):
    # PyTorch nn.GELU() default: 0.5 * x * (1 + erf(x / sqrt(2)))
    return 0.5 * x * (1.0 + jax.lax.erf(x * _INV_SQRT2))


# ----------------------------------------------------------------------------
# Single fused kernel: embed -> 4 x (dw-conv residual, 1x1 conv, digup/Bayes)
# Activations stay in VMEM as lane-dense channels-first (C, RB) values.
# ----------------------------------------------------------------------------
def _fused_forward_kernel(
        patches_ref, we_ref, be_ref, se_ref, te_ref,
        masks_ref, dww_ref, dwb_ref, dws_ref, dwt_ref,
        pww_ref, pwb_ref, pws_ref, pwt_ref,
        digw_ref, digb_ref, lb_ref, pool_ref,
        out_ref, *, num_layers, k, wp):
    f32 = jnp.float32

    # ---- patch embedding: Conv2d(3, C, p, stride=p) as (C,F)@(F,RB) + GELU + BN
    h = jnp.dot(we_ref[...], patches_ref[...], preferred_element_type=f32)
    h = _gelu_exact(h + be_ref[...]) * se_ref[...] + te_ref[...]        # (C, RB)

    _, ncls, bb = out_ref.shape
    rb = h.shape[1]
    off = (k - 1) // 2

    # self.log_prior buffer is zeros(1, ncls), repeated over the batch
    # (stored here column-wise: (ncls, images_in_block)).
    log_prior = jnp.zeros((ncls, bb), f32)
    lb = lb_ref[...]                      # (ncls, 1)
    pool = pool_ref[...]                  # (RB, bb) per-image mean-pool matrix

    for i in range(num_layers):
        # -- Residual( depthwise kxk 'same' conv -> GELU -> BN ) --------------
        # Each tap (u, v) gathers the (h+du, w+dv) neighbour of every pixel as a
        # static lane-roll (XLU), with a precomputed 0/1 mask encoding the
        # 'same' zero-padding (and killing any cross-image wrap-around).
        w_taps = dww_ref[i]                                   # (C, k*k)
        acc = jnp.zeros_like(h)
        for u in range(k):
            for v in range(k):
                j = u * k + v
                d = (u - off) * wp + (v - off)                # lane offset of tap
                shifted = h if d == 0 else pltpu.roll(h, (-d) % rb, axis=1)
                acc = acc + (shifted * masks_ref[j]) * w_taps[:, j:j + 1]
        y = _gelu_exact(acc + dwb_ref[i]) * dws_ref[i] + dwt_ref[i]
        h = y + h                                             # residual

        # -- 1x1 conv -> GELU -> BN  (channels-first: (C,C)@(C,RB)) -----------
        h = jnp.dot(pww_ref[i], h, preferred_element_type=f32)
        h = _gelu_exact(h + pwb_ref[i]) * pws_ref[i] + pwt_ref[i]

        # -- digup: per-image global avg-pool (tiny matmul) + Linear ----------
        pooled = jnp.dot(h, pool, preferred_element_type=f32)            # (C, bb)
        logits = (jnp.dot(digw_ref[i], pooled, preferred_element_type=f32)
                  + digb_ref[i])                                         # (ncls, bb)

        # -- Bayesian log-prior update + log_softmax over classes -------------
        lp = log_prior + logits
        lp = lp - jnp.mean(lp, axis=0, keepdims=True) + lb
        m = jnp.max(lp, axis=0, keepdims=True)
        z = lp - m
        log_prior = z - jnp.log(jnp.sum(jnp.exp(z), axis=0, keepdims=True))

    out_ref[...] = log_prior.reshape(1, ncls, bb)


# ----------------------------------------------------------------------------
# Deterministic parameter init (shapes follow the PyTorch module __init__)
# ----------------------------------------------------------------------------
def init_params(key):
    keys = iter(jax.random.split(key, 96))

    def nrm(shape, scale=0.1):
        return scale * jax.random.normal(next(keys), shape, jnp.float32)

    def bn_fold(c):
        gamma = 1.0 + 0.1 * jax.random.normal(next(keys), (c,), jnp.float32)
        beta = 0.1 * jax.random.normal(next(keys), (c,), jnp.float32)
        run_mean = 0.1 * jax.random.normal(next(keys), (c,), jnp.float32)
        run_var = 0.5 + jax.random.uniform(next(keys), (c,), jnp.float32)
        scale = gamma / jnp.sqrt(run_var + BN_EPS)
        shift = beta - run_mean * scale
        return scale, shift

    params = {
        "embed_w": nrm((HIDDEN, 3, PATCH, PATCH), 0.2),   # Conv2d(3, C, p, stride=p)
        "embed_b": nrm((HIDDEN,), 0.1),
        "embed_bn": bn_fold(HIDDEN),
        "layers": [],
        "digups": [],
        "logits_bias": jnp.zeros((1, NUM_CLASSES), jnp.float32),  # nn.Parameter(zeros)
    }
    for _ in range(NUM_LAYERS):
        params["layers"].append({
            "dw_w": nrm((HIDDEN, 1, KSIZE, KSIZE), 0.2),  # depthwise Conv2d
            "dw_b": nrm((HIDDEN,), 0.1),
            "dw_bn": bn_fold(HIDDEN),
            "pw_w": nrm((HIDDEN, HIDDEN, 1, 1), 0.2),     # 1x1 Conv2d
            "pw_b": nrm((HIDDEN,), 0.1),
            "pw_bn": bn_fold(HIDDEN),
        })
    for _ in range(NUM_STAGES):
        params["digups"].append({
            "w": nrm((NUM_CLASSES, HIDDEN), 0.2),         # nn.Linear(C, num_classes)
            "b": nrm((NUM_CLASSES,), 0.1),
        })
    return params


# ----------------------------------------------------------------------------
# Full forward pass: one-time layout prep in JAX/numpy (constant-folded under
# jit), everything else in one fused Pallas kernel.
# ----------------------------------------------------------------------------
def bayes_convmixer2_forward(x_nchw, params):
    B, Cin, H, W = x_nchw.shape
    p, C, k = PATCH, HIDDEN, KSIZE
    Hp, Wp = H // p, W // p
    hw = Hp * Wp
    F = Cin * p * p
    L = NUM_LAYERS

    # Images per grid block: pack whole images until the block is >=128 lanes
    # (lane-dense), keeping an even split of the batch.  Larger batches give
    # multiple blocks -> "parallel" grid (both TensorCores on v7x).
    bb = max(1, min(B, (128 + hw - 1) // hw))
    while B % bb:
        bb -= 1
    if B // bb > 1 and (bb * hw) % 128 != 0:
        bb = B
    G = B // bb
    RB = bb * hw

    # One-time patch extraction, channels-first: rows are (cin, ph, pw)
    # features, columns are (b, hp, wp) pixels -- matching the embed weight
    # reshape and the lane layout used for the rolls/masks/pool below.
    patches = (x_nchw.reshape(B, Cin, Hp, p, Wp, p)
               .transpose(1, 3, 5, 0, 2, 4)
               .reshape(F, B * hw))

    we = params["embed_w"].reshape(C, F)
    be = params["embed_b"].reshape(C, 1)
    se = params["embed_bn"][0].reshape(C, 1)
    te = params["embed_bn"][1].reshape(C, 1)

    if NUM_LAYERS % NUM_STAGES == 0:
        stage_depth = NUM_LAYERS // NUM_STAGES
    else:
        stage_depth = NUM_LAYERS // NUM_STAGES + 1

    lay = params["layers"]
    dww = jnp.stack([lay[i]["dw_w"].reshape(C, k * k) for i in range(L)])   # (L,C,k*k)
    dwb = jnp.stack([lay[i]["dw_b"].reshape(C, 1) for i in range(L)])       # (L,C,1)
    dws = jnp.stack([lay[i]["dw_bn"][0].reshape(C, 1) for i in range(L)])
    dwt = jnp.stack([lay[i]["dw_bn"][1].reshape(C, 1) for i in range(L)])
    pww = jnp.stack([lay[i]["pw_w"].reshape(C, C) for i in range(L)])       # (L,C,C)
    pwb = jnp.stack([lay[i]["pw_b"].reshape(C, 1) for i in range(L)])
    pws = jnp.stack([lay[i]["pw_bn"][0].reshape(C, 1) for i in range(L)])
    pwt = jnp.stack([lay[i]["pw_bn"][1].reshape(C, 1) for i in range(L)])
    # digup selected per layer (i // stage_depth), resolved here.
    digw = jnp.stack([params["digups"][i // stage_depth]["w"] for i in range(L)])
    digb = jnp.stack([params["digups"][i // stage_depth]["b"].reshape(NUM_CLASSES, 1)
                      for i in range(L)])
    lb = params["logits_bias"].reshape(NUM_CLASSES, 1)

    # Per-tap 'same'-padding masks over the (b, h, w) lane layout (tiny,
    # ~k*k*RB floats) and a per-image mean-pool matrix (RB, bb).
    off = (k - 1) // 2
    masks_np = np.zeros((k * k, 1, RB), np.float32)
    for u in range(k):
        for v in range(k):
            du, dv = u - off, v - off
            mimg = np.zeros((Hp, Wp), np.float32)
            mimg[max(0, -du):min(Hp, Hp - du), max(0, -dv):min(Wp, Wp - dv)] = 1.0
            masks_np[u * k + v, 0, :] = np.tile(mimg.reshape(-1), bb)
    pool_np = np.zeros((RB, bb), np.float32)
    for jimg in range(bb):
        pool_np[jimg * hw:(jimg + 1) * hw, jimg] = 1.0 / hw
    masks = jnp.asarray(masks_np)
    pool = jnp.asarray(pool_np)

    kern = functools.partial(_fused_forward_kernel, num_layers=L, k=k, wp=Wp)

    def full_spec(a):
        nd = a.ndim
        return pl.BlockSpec(a.shape, lambda g, nd=nd: (0,) * nd)

    weights = (we, be, se, te, masks, dww, dwb, dws, dwt,
               pww, pwb, pws, pwt, digw, digb, lb, pool)
    in_specs = [pl.BlockSpec((F, RB), lambda g: (0, g))] + [full_spec(a) for a in weights]

    out = pl.pallas_call(
        kern,
        out_shape=jax.ShapeDtypeStruct((G, NUM_CLASSES, bb), jnp.float32),
        grid=(G,),
        in_specs=in_specs,
        out_specs=pl.BlockSpec((1, NUM_CLASSES, bb), lambda g: (g, 0, 0)),
        compiler_params=pltpu.CompilerParams(dimension_semantics=("parallel",)),
    )(patches, *weights)

    # (G, ncls, bb) -> (B, ncls); trivial wrapper-side layout plumbing.
    return out.transpose(0, 2, 1).reshape(B, NUM_CLASSES)


if __name__ == "__main__":
    key = jax.random.PRNGKey(0)
    pkey, xkey = jax.random.split(key)
    params = init_params(pkey)
    x = jax.random.normal(xkey, (2, 3, 16, 16), jnp.float32)   # NCHW, like PyTorch

    out = jax.jit(bayes_convmixer2_forward)(x, params)
    out = jax.block_until_ready(out)

    assert out.shape == (2, NUM_CLASSES), out.shape
    assert bool(jnp.all(jnp.isfinite(out)))
    # rows are log-probabilities -> exp sums to 1
    row_sums = jnp.sum(jnp.exp(out), axis=-1)
    assert bool(jnp.all(jnp.abs(row_sums - 1.0) < 1e-4)), row_sums
    print("KERNEL_OK")
</pallas_src>

<mosaic_0001>
module attributes {stable_mosaic.version = 11 : i64} {
  func.func @_fused_forward_kernel(%arg0: i32, %arg1: memref<12x128xf32, #tpu.memory_space<vmem>>, %arg2: memref<32x12xf32, #tpu.memory_space<vmem>>, %arg3: memref<32x1xf32, #tpu.memory_space<vmem>>, %arg4: memref<32x1xf32, #tpu.memory_space<vmem>>, %arg5: memref<32x1xf32, #tpu.memory_space<vmem>>, %arg6: memref<9x1x128xf32, #tpu.memory_space<vmem>>, %arg7: memref<4x32x9xf32, #tpu.memory_space<vmem>>, %arg8: memref<4x32x1xf32, #tpu.memory_space<vmem>>, %arg9: memref<4x32x1xf32, #tpu.memory_space<vmem>>, %arg10: memref<4x32x1xf32, #tpu.memory_space<vmem>>, %arg11: memref<4x32x32xf32, #tpu.memory_space<vmem>>, %arg12: memref<4x32x1xf32, #tpu.memory_space<vmem>>, %arg13: memref<4x32x1xf32, #tpu.memory_space<vmem>>, %arg14: memref<4x32x1xf32, #tpu.memory_space<vmem>>, %arg15: memref<4x10x32xf32, #tpu.memory_space<vmem>>, %arg16: memref<4x10x1xf32, #tpu.memory_space<vmem>>, %arg17: memref<10x1xf32, #tpu.memory_space<vmem>>, %arg18: memref<128x2xf32, #tpu.memory_space<vmem>>, %arg19: memref<1x10x2xf32, #tpu.memory_space<vmem>>) attributes {dimension_semantics = [#tpu.dimension_semantics<parallel>], iteration_bounds = array<i64: 1>, scalar_prefetch = 0 : i64, scratch_operands = 0 : i64, tpu.core_type = #tpu.core_type<tc>, window_params = [{transform_indices = @transform_0, window_bounds = array<i64: 12, 128>}, {pipeline_mode = #tpu.pipeline_mode<synchronous>, transform_indices = @transform_1, window_bounds = array<i64: 32, 12>}, {pipeline_mode = #tpu.pipeline_mode<synchronous>, transform_indices = @transform_2, window_bounds = array<i64: 32, 1>}, {pipeline_mode = #tpu.pipeline_mode<synchronous>, transform_indices = @transform_3, window_bounds = array<i64: 32, 1>}, {pipeline_mode = #tpu.pipeline_mode<synchronous>, transform_indices = @transform_4, window_bounds = array<i64: 32, 1>}, {pipeline_mode = #tpu.pipeline_mode<synchronous>, transform_indices = @transform_5, window_bounds = array<i64: 9, 1, 128>}, {pipeline_mode = #tpu.pipeline_mode<synchronous>, transform_indices = @transform_6, window_bounds = array<i64: 4, 32, 9>}, {pipeline_mode = #tpu.pipeline_mode<synchronous>, transform_indices = @transform_7, window_bounds = array<i64: 4, 32, 1>}, {pipeline_mode = #tpu.pipeline_mode<synchronous>, transform_indices = @transform_8, window_bounds = array<i64: 4, 32, 1>}, {pipeline_mode = #tpu.pipeline_mode<synchronous>, transform_indices = @transform_9, window_bounds = array<i64: 4, 32, 1>}, {pipeline_mode = #tpu.pipeline_mode<synchronous>, transform_indices = @transform_10, window_bounds = array<i64: 4, 32, 32>}, {pipeline_mode = #tpu.pipeline_mode<synchronous>, transform_indices = @transform_11, window_bounds = array<i64: 4, 32, 1>}, {pipeline_mode = #tpu.pipeline_mode<synchronous>, transform_indices = @transform_12, window_bounds = array<i64: 4, 32, 1>}, {pipeline_mode = #tpu.pipeline_mode<synchronous>, transform_indices = @transform_13, window_bounds = array<i64: 4, 32, 1>}, {pipeline_mode = #tpu.pipeline_mode<synchronous>, transform_indices = @transform_14, window_bounds = array<i64: 4, 10, 32>}, {pipeline_mode = #tpu.pipeline_mode<synchronous>, transform_indices = @transform_15, window_bounds = array<i64: 4, 10, 1>}, {pipeline_mode = #tpu.pipeline_mode<synchronous>, transform_indices = @transform_16, window_bounds = array<i64: 10, 1>}, {pipeline_mode = #tpu.pipeline_mode<synchronous>, transform_indices = @transform_17, window_bounds = array<i64: 128, 2>}, {transform_indices = @transform_18, window_bounds = array<i64: 1, 10, 2>}]} {
    %c0 = arith.constant 0 : index
    %c0_0 = arith.constant 0 : index
    %0 = vector.load %arg2[%c0, %c0_0] : memref<32x12xf32, #tpu.memory_space<vmem>>, vector<32x12xf32>
    %c0_1 = arith.constant 0 : index
    %c0_2 = arith.constant 0 : index
    %1 = vector.load %arg1[%c0_1, %c0_2] : memref<12x128xf32, #tpu.memory_space<vmem>>, vector<12x128xf32>
    %cst = arith.constant dense<0.000000e+00> : vector<32x128xf32>
    %2 = tpu.matmul %0, %1, %cst {dimension_numbers = #tpu.dot_dimension_numbers<[1], [0], [0], [1], [0, 0, 1, 1], [], []>} : vector<32x12xf32>, vector<12x128xf32>, vector<32x128xf32> -> vector<32x128xf32>
    %c0_3 = arith.constant 0 : index
    %c0_4 = arith.constant 0 : index
    %3 = vector.load %arg3[%c0_3, %c0_4] : memref<32x1xf32, #tpu.memory_space<vmem>>, vector<32x1xf32>
    %4 = vector.broadcast %3 : vector<32x1xf32> to vector<32x128xf32>
    %5 = arith.addf %2, %4 : vector<32x128xf32>
    %cst_5 = arith.constant 5.000000e-01 : f32
    %6 = vector.broadcast %cst_5 : f32 to vector<32x128xf32>
    %7 = arith.mulf %6, %5 : vector<32x128xf32>
    %cst_6 = arith.constant 0.707106769 : f32
    %8 = vector.broadcast %cst_6 : f32 to vector<32x128xf32>
    %9 = arith.mulf %5, %8 : vector<32x128xf32>
    %10 = math.erf %9 : vector<32x128xf32>
    %cst_7 = arith.constant 1.000000e+00 : f32
    %11 = vector.broadcast %cst_7 : f32 to vector<32x128xf32>
    %12 = arith.addf %11, %10 : vector<32x128xf32>
    %13 = arith.mulf %7, %12 : vector<32x128xf32>
    %c0_8 = arith.constant 0 : index
    %c0_9 = arith.constant 0 : index
    %14 = vector.load %arg4[%c0_8, %c0_9] : memref<32x1xf32, #tpu.memory_space<vmem>>, vector<32x1xf32>
    %15 = vector.broadcast %14 : vector<32x1xf32> to vector<32x128xf32>
    %16 = arith.mulf %13, %15 : vector<32x128xf32>
    %c0_10 = arith.constant 0 : index
    %c0_11 = arith.constant 0 : index
    %17 = vector.load %arg5[%c0_10, %c0_11] : memref<32x1xf32, #tpu.memory_space<vmem>>, vector<32x1xf32>
    %18 = vector.broadcast %17 : vector<32x1xf32> to vector<32x128xf32>
    %19 = arith.addf %16, %18 : vector<32x128xf32>
    %cst_12 = arith.constant 0.000000e+00 : f32
    %20 = vector.broadcast %cst_12 : f32 to vector<10x2xf32>
    %c0_13 = arith.constant 0 : index
    %c0_14 = arith.constant 0 : index
    %21 = vector.load %arg17[%c0_13, %c0_14] : memref<10x1xf32, #tpu.memory_space<vmem>>, vector<10x1xf32>
    %c0_15 = arith.constant 0 : index
    %c0_16 = arith.constant 0 : index
    %22 = vector.load %arg18[%c0_15, %c0_16] : memref<128x2xf32, #tpu.memory_space<vmem>>, vector<128x2xf32>
    %c0_17 = arith.constant 0 : index
    %c0_18 = arith.constant 0 : index
    %c0_19 = arith.constant 0 : index
    %23 = vector.load %arg7[%c0_17, %c0_18, %c0_19] : memref<4x32x9xf32, #tpu.memory_space<vmem>>, vector<1x32x9xf32>
    %24 = vector.shape_cast %23 : vector<1x32x9xf32> to vector<32x9xf32>
    %cst_20 = arith.constant 0.000000e+00 : f32
    %25 = vector.broadcast %cst_20 : f32 to vector<32x128xf32>
    %c9_i32 = arith.constant 9 : i32
    %26 = tpu.dynamic_rotate %19 by %c9_i32 dim 1 : vector<32x128xf32>, i32 -> vector<32x128xf32>
    %c0_21 = arith.constant 0 : index
    %c0_22 = arith.constant 0 : index
    %c0_23 = arith.constant 0 : index
    %27 = vector.load %arg6[%c0_21, %c0_22, %c0_23] : memref<9x1x128xf32, #tpu.memory_space<vmem>>, vector<1x1x128xf32>
    %28 = vector.shape_cast %27 : vector<1x1x128xf32> to vector<1x128xf32>
    %29 = vector.broadcast %28 : vector<1x128xf32> to vector<32x128xf32>
    %30 = arith.mulf %26, %29 : vector<32x128xf32>
    %31 = vector.extract_strided_slice %24 {offsets = [0, 0], sizes = [32, 1], strides = [1, 1]} : vector<32x9xf32> to vector<32x1xf32>
    %32 = vector.broadcast %31 : vector<32x1xf32> to vector<32x128xf32>
    %33 = arith.mulf %30, %32 : vector<32x128xf32>
    %34 = arith.addf %25, %33 : vector<32x128xf32>
    %c8_i32 = arith.constant 8 : i32
    %35 = tpu.dynamic_rotate %19 by %c8_i32 dim 1 : vector<32x128xf32>, i32 -> vector<32x128xf32>
    %c1 = arith.constant 1 : index
    %c0_24 = arith.constant 0 : index
    %c0_25 = arith.constant 0 : index
    %36 = vector.load %arg6[%c1, %c0_24, %c0_25] : memref<9x1x128xf32, #tpu.memory_space<vmem>>, vector<1x1x128xf32>
    %37 = vector.shape_cast %36 : vector<1x1x128xf32> to vector<1x128xf32>
    %38 = vector.broadcast %37 : vector<1x128xf32> to vector<32x128xf32>
    %39 = arith.mulf %35, %38 : vector<32x128xf32>
    %40 = vector.extract_strided_slice %24 {offsets = [0, 1], sizes = [32, 1], strides = [1, 1]} : vector<32x9xf32> to vector<32x1xf32>
    %41 = vector.broadcast %40 : vector<32x1xf32> to vector<32x128xf32>
    %42 = arith.mulf %39, %41 : vector<32x128xf32>
    %43 = arith.addf %34, %42 : vector<32x128xf32>
    %c7_i32 = arith.constant 7 : i32
    %44 = tpu.dynamic_rotate %19 by %c7_i32 dim 1 : vector<32x128xf32>, i32 -> vector<32x128xf32>
    %c2 = arith.constant 2 : index
    %c0_26 = arith.constant 0 : index
    %c0_27 = arith.constant 0 : index
    %45 = vector.load %arg6[%c2, %c0_26, %c0_27] : memref<9x1x128xf32, #tpu.memory_space<vmem>>, vector<1x1x128xf32>
    %46 = vector.shape_cast %45 : vector<1x1x128xf32> to vector<1x128xf32>
    %47 = vector.broadcast %46 : vector<1x128xf32> to vector<32x128xf32>
    %48 = arith.mulf %44, %47 : vector<32x128xf32>
    %49 = vector.extract_strided_slice %24 {offsets = [0, 2], sizes = [32, 1], strides = [1, 1]} : vector<32x9xf32> to vector<32x1xf32>
    %50 = vector.broadcast %49 : vector<32x1xf32> to vector<32x128xf32>
    %51 = arith.mulf %48, %50 : vector<32x128xf32>
    %52 = arith.addf %43, %51 : vector<32x128xf32>
    %c1_i32 = arith.constant 1 : i32
    %53 = tpu.dynamic_rotate %19 by %c1_i32 dim 1 : vector<32x128xf32>, i32 -> vector<32x128xf32>
    %c3 = arith.constant 3 : index
    %c0_28 = arith.constant 0 : index
    %c0_29 = arith.constant 0 : index
    %54 = vector.load %arg6[%c3, %c0_28, %c0_29] : memref<9x1x128xf32, #tpu.memory_space<vmem>>, vector<1x1x128xf32>
    %55 = vector.shape_cast %54 : vector<1x1x128xf32> to vector<1x128xf32>
    %56 = vector.broadcast %55 : vector<1x128xf32> to vector<32x128xf32>
    %57 = arith.mulf %53, %56 : vector<32x128xf32>
    %58 = vector.extract_strided_slice %24 {offsets = [0, 3], sizes = [32, 1], strides = [1, 1]} : vector<32x9xf32> to vector<32x1xf32>
    %59 = vector.broadcast %58 : vector<32x1xf32> to vector<32x128xf32>
    %60 = arith.mulf %57, %59 : vector<32x128xf32>
    %61 = arith.addf %52, %60 : vector<32x128xf32>
    %c4 = arith.constant 4 : index
    %c0_30 = arith.constant 0 : index
    %c0_31 = arith.constant 0 : index
    %62 = vector.load %arg6[%c4, %c0_30, %c0_31] : memref<9x1x128xf32, #tpu.memory_space<vmem>>, vector<1x1x128xf32>
    %63 = vector.shape_cast %62 : vector<1x1x128xf32> to vector<1x128xf32>
    %64 = vector.broadcast %63 : vector<1x128xf32> to vector<32x128xf32>
    %65 = arith.mulf %19, %64 : vector<32x128xf32>
    %66 = vector.extract_strided_slice %24 {offsets = [0, 4], sizes = [32, 1], strides = [1, 1]} : vector<32x9xf32> to vector<32x1xf32>
    %67 = vector.broadcast %66 : vector<32x1xf32> to vector<32x128xf32>
    %68 = arith.mulf %65, %67 : vector<32x128xf32>
    %69 = arith.addf %61, %68 : vector<32x128xf32>
    %c127_i32 = arith.constant 127 : i32
    %70 = tpu.dynamic_rotate %19 by %c127_i32 dim 1 : vector<32x128xf32>, i32 -> vector<32x128xf32>
    %c5 = arith.constant 5 : index
    %c0_32 = arith.constant 0 : index
    %c0_33 = arith.constant 0 : index
    %71 = vector.load %arg6[%c5, %c0_32, %c0_33] : memref<9x1x128xf32, #tpu.memory_space<vmem>>, vector<1x1x128xf32>
    %72 = vector.shape_cast %71 : vector<1x1x128xf32> to vector<1x128xf32>
    %73 = vector.broadcast %72 : vector<1x128xf32> to vector<32x128xf32>
    %74 = arith.mulf %70, %73 : vector<32x128xf32>
    %75 = vector.extract_strided_slice %24 {offsets = [0, 5], sizes = [32, 1], strides = [1, 1]} : vector<32x9xf32> to vector<32x1xf32>
    %76 = vector.broadcast %75 : vector<32x1xf32> to vector<32x128xf32>
    %77 = arith.mulf %74, %76 : vector<32x128xf32>
    %78 = arith.addf %69, %77 : vector<32x128xf32>
    %c121_i32 = arith.constant 121 : i32
    %79 = tpu.dynamic_rotate %19 by %c121_i32 dim 1 : vector<32x128xf32>, i32 -> vector<32x128xf32>
    %c6 = arith.constant 6 : index
    %c0_34 = arith.constant 0 : index
    %c0_35 = arith.constant 0 : index
    %80 = vector.load %arg6[%c6, %c0_34, %c0_35] : memref<9x1x128xf32, #tpu.memory_space<vmem>>, vector<1x1x128xf32>
    %81 = vector.shape_cast %80 : vector<1x1x128xf32> to vector<1x128xf32>
    %82 = vector.broadcast %81 : vector<1x128xf32> to vector<32x128xf32>
    %83 = arith.mulf %79, %82 : vector<32x128xf32>
    %84 = vector.extract_strided_slice %24 {offsets = [0, 6], sizes = [32, 1], strides = [1, 1]} : vector<32x9xf32> to vector<32x1xf32>
    %85 = vector.broadcast %84 : vector<32x1xf32> to vector<32x128xf32>
    %86 = arith.mulf %83, %85 : vector<32x128xf32>
    %87 = arith.addf %78, %86 : vector<32x128xf32>
    %c120_i32 = arith.constant 120 : i32
    %88 = tpu.dynamic_rotate %19 by %c120_i32 dim 1 : vector<32x128xf32>, i32 -> vector<32x128xf32>
    %c7 = arith.constant 7 : index
    %c0_36 = arith.constant 0 : index
    %c0_37 = arith.constant 0 : index
    %89 = vector.load %arg6[%c7, %c0_36, %c0_37] : memref<9x1x128xf32, #tpu.memory_space<vmem>>, vector<1x1x128xf32>
    %90 = vector.shape_cast %89 : vector<1x1x128xf32> to vector<1x128xf32>
    %91 = vector.broadcast %90 : vector<1x128xf32> to vector<32x128xf32>
    %92 = arith.mulf %88, %91 : vector<32x128xf32>
    %93 = vector.extract_strided_slice %24 {offsets = [0, 7], sizes = [32, 1], strides = [1, 1]} : vector<32x9xf32> to vector<32x1xf32>
    %94 = vector.broadcast %93 : vector<32x1xf32> to vector<32x128xf32>
    %95 = arith.mulf %92, %94 : vector<32x128xf32>
    %96 = arith.addf %87, %95 : vector<32x128xf32>
    %c119_i32 = arith.constant 119 : i32
    %97 = tpu.dynamic_rotate %19 by %c119_i32 dim 1 : vector<32x128xf32>, i32 -> vector<32x128xf32>
    %c8 = arith.constant 8 : index
    %c0_38 = arith.constant 0 : index
    %c0_39 = arith.constant 0 : index
    %98 = vector.load %arg6[%c8, %c0_38, %c0_39] : memref<9x1x128xf32, #tpu.memory_space<vmem>>, vector<1x1x128xf32>
    %99 = vector.shape_cast %98 : vector<1x1x128xf32> to vector<1x128xf32>
    %100 = vector.broadcast %99 : vector<1x128xf32> to vector<32x128xf32>
    %101 = arith.mulf %97, %100 : vector<32x128xf32>
    %102 = vector.extract_strided_slice %24 {offsets = [0, 8], sizes = [32, 1], strides = [1, 1]} : vector<32x9xf32> to vector<32x1xf32>
    %103 = vector.broadcast %102 : vector<32x1xf32> to vector<32x128xf32>
    %104 = arith.mulf %101, %103 : vector<32x128xf32>
    %105 = arith.addf %96, %104 : vector<32x128xf32>
    %c0_40 = arith.constant 0 : index
    %c0_41 = arith.constant 0 : index
    %c0_42 = arith.constant 0 : index
    %106 = vector.load %arg8[%c0_40, %c0_41, %c0_42] : memref<4x32x1xf32, #tpu.memory_space<vmem>>, vector<1x32x1xf32>
    %107 = vector.shape_cast %106 : vector<1x32x1xf32> to vector<32x1xf32>
    %108 = vector.broadcast %107 : vector<32x1xf32> to vector<32x128xf32>
    %109 = arith.addf %105, %108 : vector<32x128xf32>
    %cst_43 = arith.constant 5.000000e-01 : f32
    %110 = vector.broadcast %cst_43 : f32 to vector<32x128xf32>
    %111 = arith.mulf %110, %109 : vector<32x128xf32>
    %cst_44 = arith.constant 0.707106769 : f32
    %112 = vector.broadcast %cst_44 : f32 to vector<32x128xf32>
    %113 = arith.mulf %109, %112 : vector<32x128xf32>
    %114 = math.erf %113 : vector<32x128xf32>
    %cst_45 = arith.constant 1.000000e+00 : f32
    %115 = vector.broadcast %cst_45 : f32 to vector<32x128xf32>
    %116 = arith.addf %115, %114 : vector<32x128xf32>
    %117 = arith.mulf %111, %116 : vector<32x128xf32>
    %c0_46 = arith.constant 0 : index
    %c0_47 = arith.constant 0 : index
    %c0_48 = arith.constant 0 : index
    %118 = vector.load %arg9[%c0_46, %c0_47, %c0_48] : memref<4x32x1xf32, #tpu.memory_space<vmem>>, vector<1x32x1xf32>
    %119 = vector.shape_cast %118 : vector<1x32x1xf32> to vector<32x1xf32>
    %120 = vector.broadcast %119 : vector<32x1xf32> to vector<32x128xf32>
    %121 = arith.mulf %117, %120 : vector<32x128xf32>
    %c0_49 = arith.constant 0 : index
    %c0_50 = arith.constant 0 : index
    %c0_51 = arith.constant 0 : index
    %122 = vector.load %arg10[%c0_49, %c0_50, %c0_51] : memref<4x32x1xf32, #tpu.memory_space<vmem>>, vector<1x32x1xf32>
    %123 = vector.shape_cast %122 : vector<1x32x1xf32> to vector<32x1xf32>
    %124 = vector.broadcast %123 : vector<32x1xf32> to vector<32x128xf32>
    %125 = arith.addf %121, %124 : vector<32x128xf32>
    %126 = arith.addf %125, %19 : vector<32x128xf32>
    %c0_52 = arith.constant 0 : index
    %c0_53 = arith.constant 0 : index
    %c0_54 = arith.constant 0 : index
    %127 = vector.load %arg11[%c0_52, %c0_53, %c0_54] : memref<4x32x32xf32, #tpu.memory_space<vmem>>, vector<1x32x32xf32>
    %128 = vector.shape_cast %127 : vector<1x32x32xf32> to vector<32x32xf32>
    %cst_55 = arith.constant dense<0.000000e+00> : vector<32x128xf32>
    %129 = tpu.matmul %128, %126, %cst_55 {dimension_numbers = #tpu.dot_dimension_numbers<[1], [0], [0], [1], [0, 0, 1, 1], [], []>} : vector<32x32xf32>, vector<32x128xf32>, vector<32x128xf32> -> vector<32x128xf32>
    %c0_56 = arith.constant 0 : index
    %c0_57 = arith.constant 0 : index
    %c0_58 = arith.constant 0 : index
    %130 = vector.load %arg12[%c0_56, %c0_57, %c0_58] : memref<4x32x1xf32, #tpu.memory_space<vmem>>, vector<1x32x1xf32>
    %131 = vector.shape_cast %130 : vector<1x32x1xf32> to vector<32x1xf32>
    %132 = vector.broadcast %131 : vector<32x1xf32> to vector<32x128xf32>
    %133 = arith.addf %129, %132 : vector<32x128xf32>
    %cst_59 = arith.constant 5.000000e-01 : f32
    %134 = vector.broadcast %cst_59 : f32 to vector<32x128xf32>
    %135 = arith.mulf %134, %133 : vector<32x128xf32>
    %cst_60 = arith.constant 0.707106769 : f32
    %136 = vector.broadcast %cst_60 : f32 to vector<32x128xf32>
    %137 = arith.mulf %133, %136 : vector<32x128xf32>
    %138 = math.erf %137 : vector<32x128xf32>
    %cst_61 = arith.constant 1.000000e+00 : f32
    %139 = vector.broadcast %cst_61 : f32 to vector<32x128xf32>
    %140 = arith.addf %139, %138 : vector<32x128xf32>
    %141 = arith.mulf %135, %140 : vector<32x128xf32>
    %c0_62 = arith.constant 0 : index
    %c0_63 = arith.constant 0 : index
    %c0_64 = arith.constant 0 : index
    %142 = vector.load %arg13[%c0_62, %c0_63, %c0_64] : memref<4x32x1xf32, #tpu.memory_space<vmem>>, vector<1x32x1xf32>
    %143 = vector.shape_cast %142 : vector<1x32x1xf32> to vector<32x1xf32>
    %144 = vector.broadcast %143 : vector<32x1xf32> to vector<32x128xf32>
    %145 = arith.mulf %141, %144 : vector<32x128xf32>
    %c0_65 = arith.constant 0 : index
    %c0_66 = arith.constant 0 : index
    %c0_67 = arith.constant 0 : index
    %146 = vector.load %arg14[%c0_65, %c0_66, %c0_67] : memref<4x32x1xf32, #tpu.memory_space<vmem>>, vector<1x32x1xf32>
    %147 = vector.shape_cast %146 : vector<1x32x1xf32> to vector<32x1xf32>
    %148 = vector.broadcast %147 : vector<32x1xf32> to vector<32x128xf32>
    %149 = arith.addf %145, %148 : vector<32x128xf32>
    %cst_68 = arith.constant dense<0.000000e+00> : vector<32x2xf32>
    %150 = tpu.matmul %149, %22, %cst_68 {dimension_numbers = #tpu.dot_dimension_numbers<[1], [0], [0], [1], [0, 0, 1, 1], [], []>} : vector<32x128xf32>, vector<128x2xf32>, vector<32x2xf32> -> vector<32x2xf32>
    %c0_69 = arith.constant 0 : index
    %c0_70 = arith.constant 0 : index
    %c0_71 = arith.constant 0 : index
    %151 = vector.load %arg15[%c0_69, %c0_70, %c0_71] : memref<4x10x32xf32, #tpu.memory_space<vmem>>, vector<1x10x32xf32>
    %152 = vector.shape_cast %151 : vector<1x10x32xf32> to vector<10x32xf32>
    %cst_72 = arith.constant dense<0.000000e+00> : vector<10x2xf32>
    %153 = tpu.matmul %152, %150, %cst_72 {dimension_numbers = #tpu.dot_dimension_numbers<[1], [0], [0], [1], [0, 0, 1, 1], [], []>} : vector<10x32xf32>, vector<32x2xf32>, vector<10x2xf32> -> vector<10x2xf32>
    %c0_73 = arith.constant 0 : index
    %c0_74 = arith.constant 0 : index
    %c0_75 = arith.constant 0 : index
    %154 = vector.load %arg16[%c0_73, %c0_74, %c0_75] : memref<4x10x1xf32, #tpu.memory_space<vmem>>, vector<1x10x1xf32>
    %155 = vector.shape_cast %154 : vector<1x10x1xf32> to vector<10x1xf32>
    %156 = vector.broadcast %155 : vector<10x1xf32> to vector<10x2xf32>
    %157 = arith.addf %153, %156 : vector<10x2xf32>
    %158 = arith.addf %20, %157 : vector<10x2xf32>
    %cst_76 = arith.constant dense<0.000000e+00> : vector<2xf32>
    %159 = vector.multi_reduction <add>, %158, %cst_76 [0] : vector<10x2xf32> to vector<2xf32>
    %160 = vector.shape_cast %159 : vector<2xf32> to vector<1x2xf32>
    %cst_77 = arith.constant 1.000000e+01 : f32
    %161 = vector.broadcast %cst_77 : f32 to vector<1x2xf32>
    %162 = arith.divf %160, %161 : vector<1x2xf32>
    %163 = vector.broadcast %162 : vector<1x2xf32> to vector<10x2xf32>
    %164 = arith.subf %158, %163 : vector<10x2xf32>
    %165 = vector.broadcast %21 : vector<10x1xf32> to vector<10x2xf32>
    %166 = arith.addf %164, %165 : vector<10x2xf32>
    %cst_78 = arith.constant dense<0xFF800000> : vector<2xf32>
    %167 = vector.multi_reduction <maximumf>, %166, %cst_78 [0] : vector<10x2xf32> to vector<2xf32>
    %168 = vector.shape_cast %167 : vector<2xf32> to vector<1x2xf32>
    %169 = vector.broadcast %168 : vector<1x2xf32> to vector<10x2xf32>
    %170 = arith.subf %166, %169 : vector<10x2xf32>
    %171 = math.exp %170 : vector<10x2xf32>
    %cst_79 = arith.constant dense<0.000000e+00> : vector<2xf32>
    %172 = vector.multi_reduction <add>, %171, %cst_79 [0] : vector<10x2xf32> to vector<2xf32>
    %173 = vector.shape_cast %172 : vector<2xf32> to vector<1x2xf32>
    %174 = math.log %173 : vector<1x2xf32>
    %175 = vector.broadcast %174 : vector<1x2xf32> to vector<10x2xf32>
    %176 = arith.subf %170, %175 : vector<10x2xf32>
    %c1_80 = arith.constant 1 : index
    %c0_81 = arith.constant 0 : index
    %c0_82 = arith.constant 0 : index
    %177 = vector.load %arg7[%c1_80, %c0_81, %c0_82] : memref<4x32x9xf32, #tpu.memory_space<vmem>>, vector<1x32x9xf32>
    %178 = vector.shape_cast %177 : vector<1x32x9xf32> to vector<32x9xf32>
    %cst_83 = arith.constant 0.000000e+00 : f32
    %179 = vector.broadcast %cst_83 : f32 to vector<32x128xf32>
    %c9_i32_84 = arith.constant 9 : i32
    %180 = tpu.dynamic_rotate %149 by %c9_i32_84 dim 1 : vector<32x128xf32>, i32 -> vector<32x128xf32>
    %c0_85 = arith.constant 0 : index
    %c0_86 = arith.constant 0 : index
    %c0_87 = arith.constant 0 : index
    %181 = vector.load %arg6[%c0_85, %c0_86, %c0_87] : memref<9x1x128xf32, #tpu.memory_space<vmem>>, vector<1x1x128xf32>
    %182 = vector.shape_cast %181 : vector<1x1x128xf32> to vector<1x128xf32>
    %183 = vector.broadcast %182 : vector<1x128xf32> to vector<32x128xf32>
    %184 = arith.mulf %180, %183 : vector<32x128xf32>
    %185 = vector.extract_strided_slice %178 {offsets = [0, 0], sizes = [32, 1], strides = [1, 1]} : vector<32x9xf32> to vector<32x1xf32>
    %186 = vector.broadcast %185 : vector<32x1xf32> to vector<32x128xf32>
    %187 = arith.mulf %184, %186 : vector<32x128xf32>
    %188 = arith.addf %179, %187 : vector<32x128xf32>
    %c8_i32_88 = arith.constant 8 : i32
    %189 = tpu.dynamic_rotate %149 by %c8_i32_88 dim 1 : vector<32x128xf32>, i32 -> vector<32x128xf32>
    %c1_89 = arith.constant 1 : index
    %c0_90 = arith.constant 0 : index
    %c0_91 = arith.constant 0 : index
    %190 = vector.load %arg6[%c1_89, %c0_90, %c0_91] : memref<9x1x128xf32, #tpu.memory_space<vmem>>, vector<1x1x128xf32>
    %191 = vector.shape_cast %190 : vector<1x1x128xf32> to vector<1x128xf32>
    %192 = vector.broadcast %191 : vector<1x128xf32> to vector<32x128xf32>
    %193 = arith.mulf %189, %192 : vector<32x128xf32>
    %194 = vector.extract_strided_slice %178 {offsets = [0, 1], sizes = [32, 1], strides = [1, 1]} : vector<32x9xf32> to vector<32x1xf32>
    %195 = vector.broadcast %194 : vector<32x1xf32> to vector<32x128xf32>
    %196 = arith.mulf %193, %195 : vector<32x128xf32>
    %197 = arith.addf %188, %196 : vector<32x128xf32>
    %c7_i32_92 = arith.constant 7 : i32
    %198 = tpu.dynamic_rotate %149 by %c7_i32_92 dim 1 : vector<32x128xf32>, i32 -> vector<32x128xf32>
    %c2_93 = arith.constant 2 : index
    %c0_94 = arith.constant 0 : index
    %c0_95 = arith.constant 0 : index
    %199 = vector.load %arg6[%c2_93, %c0_94, %c0_95] : memref<9x1x128xf32, #tpu.memory_space<vmem>>, vector<1x1x128xf32>
    %200 = vector.shape_cast %199 : vector<1x1x128xf32> to vector<1x128xf32>
    %201 = vector.broadcast %200 : vector<1x128xf32> to vector<32x128xf32>
    %202 = arith.mulf %198, %201 : vector<32x128xf32>
    %203 = vector.extract_strided_slice %178 {offsets = [0, 2], sizes = [32, 1], strides = [1, 1]} : vector<32x9xf32> to vector<32x1xf32>
    %204 = vector.broadcast %203 : vector<32x1xf32> to vector<32x128xf32>
    %205 = arith.mulf %202, %204 : vector<32x128xf32>
    %206 = arith.addf %197, %205 : vector<32x128xf32>
    %c1_i32_96 = arith.constant 1 : i32
    %207 = tpu.dynamic_rotate %149 by %c1_i32_96 dim 1 : vector<32x128xf32>, i32 -> vector<32x128xf32>
    %c3_97 = arith.constant 3 : index
    %c0_98 = arith.constant 0 : index
    %c0_99 = arith.constant 0 : index
    %208 = vector.load %arg6[%c3_97, %c0_98, %c0_99] : memref<9x1x128xf32, #tpu.memory_space<vmem>>, vector<1x1x128xf32>
    %209 = vector.shape_cast %208 : vector<1x1x128xf32> to vector<1x128xf32>
    %210 = vector.broadcast %209 : vector<1x128xf32> to vector<32x128xf32>
    %211 = arith.mulf %207, %210 : vector<32x128xf32>
    %212 = vector.extract_strided_slice %178 {offsets = [0, 3], sizes = [32, 1], strides = [1, 1]} : vector<32x9xf32> to vector<32x1xf32>
    %213 = vector.broadcast %212 : vector<32x1xf32> to vector<32x128xf32>
    %214 = arith.mulf %211, %213 : vector<32x128xf32>
    %215 = arith.addf %206, %214 : vector<32x128xf32>
    %c4_100 = arith.constant 4 : index
    %c0_101 = arith.constant 0 : index
    %c0_102 = arith.constant 0 : index
    %216 = vector.load %arg6[%c4_100, %c0_101, %c0_102] : memref<9x1x128xf32, #tpu.memory_space<vmem>>, vector<1x1x128xf32>
    %217 = vector.shape_cast %216 : vector<1x1x128xf32> to vector<1x128xf32>
    %218 = vector.broadcast %217 : vector<1x128xf32> to vector<32x128xf32>
    %219 = arith.mulf %149, %218 : vector<32x128xf32>
    %220 = vector.extract_strided_slice %178 {offsets = [0, 4], sizes = [32, 1], strides = [1, 1]} : vector<32x9xf32> to vector<32x1xf32>
    %221 = vector.broadcast %220 : vector<32x1xf32> to vector<32x128xf32>
    %222 = arith.mulf %219, %221 : vector<32x128xf32>
    %223 = arith.addf %215, %222 : vector<32x128xf32>
    %c127_i32_103 = arith.constant 127 : i32
    %224 = tpu.dynamic_rotate %149 by %c127_i32_103 dim 1 : vector<32x128xf32>, i32 -> vector<32x128xf32>
    %c5_104 = arith.constant 5 : index
    %c0_105 = arith.constant 0 : index
    %c0_106 = arith.constant 0 : index
    %225 = vector.load %arg6[%c5_104, %c0_105, %c0_106] : memref<9x1x128xf32, #tpu.memory_space<vmem>>, vector<1x1x128xf32>
    %226 = vector.shape_cast %225 : vector<1x1x128xf32> to vector<1x128xf32>
    %227 = vector.broadcast %226 : vector<1x128xf32> to vector<32x128xf32>
    %228 = arith.mulf %224, %227 : vector<32x128xf32>
    %229 = vector.extract_strided_slice %178 {offsets = [0, 5], sizes = [32, 1], strides = [1, 1]} : vector<32x9xf32> to vector<32x1xf32>
    %230 = vector.broadcast %229 : vector<32x1xf32> to vector<32x128xf32>
    %231 = arith.mulf %228, %230 : vector<32x128xf32>
    %232 = arith.addf %223, %231 : vector<32x128xf32>
    %c121_i32_107 = arith.constant 121 : i32
    %233 = tpu.dynamic_rotate %149 by %c121_i32_107 dim 1 : vector<32x128xf32>, i32 -> vector<32x128xf32>
    %c6_108 = arith.constant 6 : index
    %c0_109 = arith.constant 0 : index
    %c0_110 = arith.constant 0 : index
    %234 = vector.load %arg6[%c6_108, %c0_109, %c0_110] : memref<9x1x128xf32, #tpu.memory_space<vmem>>, vector<1x1x128xf32>
    %235 = vector.shape_cast %234 : vector<1x1x128xf32> to vector<1x128xf32>
    %236 = vector.broadcast %235 : vector<1x128xf32> to vector<32x128xf32>
    %237 = arith.mulf %233, %236 : vector<32x128xf32>
    %238 = vector.extract_strided_slice %178 {offsets = [0, 6], sizes = [32, 1], strides = [1, 1]} : vector<32x9xf32> to vector<32x1xf32>
    %239 = vector.broadcast %238 : vector<32x1xf32> to vector<32x128xf32>
    %240 = arith.mulf %237, %239 : vector<32x128xf32>
    %241 = arith.addf %232, %240 : vector<32x128xf32>
    %c120_i32_111 = arith.constant 120 : i32
    %242 = tpu.dynamic_rotate %149 by %c120_i32_111 dim 1 : vector<32x128xf32>, i32 -> vector<32x128xf32>
    %c7_112 = arith.constant 7 : index
    %c0_113 = arith.constant 0 : index
    %c0_114 = arith.constant 0 : index
    %243 = vector.load %arg6[%c7_112, %c0_113, %c0_114] : memref<9x1x128xf32, #tpu.memory_space<vmem>>, vector<1x1x128xf32>
    %244 = vector.shape_cast %243 : vector<1x1x128xf32> to vector<1x128xf32>
    %245 = vector.broadcast %244 : vector<1x128xf32> to vector<32x128xf32>
    %246 = arith.mulf %242, %245 : vector<32x128xf32>
    %247 = vector.extract_strided_slice %178 {offsets = [0, 7], sizes = [32, 1], strides = [1, 1]} : vector<32x9xf32> to vector<32x1xf32>
    %248 = vector.broadcast %247 : vector<32x1xf32> to vector<32x128xf32>
    %249 = arith.mulf %246, %248 : vector<32x128xf32>
    %250 = arith.addf %241, %249 : vector<32x128xf32>
    %c119_i32_115 = arith.constant 119 : i32
    %251 = tpu.dynamic_rotate %149 by %c119_i32_115 dim 1 : vector<32x128xf32>, i32 -> vector<32x128xf32>
    %c8_116 = arith.constant 8 : index
    %c0_117 = arith.constant 0 : index
    %c0_118 = arith.constant 0 : index
    %252 = vector.load %arg6[%c8_116, %c0_117, %c0_118] : memref<9x1x128xf32, #tpu.memory_space<vmem>>, vector<1x1x128xf32>
    %253 = vector.shape_cast %252 : vector<1x1x128xf32> to vector<1x128xf32>
    %254 = vector.broadcast %253 : vector<1x128xf32> to vector<32x128xf32>
    %255 = arith.mulf %251, %254 : vector<32x128xf32>
    %256 = vector.extract_strided_slice %178 {offsets = [0, 8], sizes = [32, 1], strides = [1, 1]} : vector<32x9xf32> to vector<32x1xf32>
    %257 = vector.broadcast %256 : vector<32x1xf32> to vector<32x128xf32>
    %258 = arith.mulf %255, %257 : vector<32x128xf32>
    %259 = arith.addf %250, %258 : vector<32x128xf32>
    %c1_119 = arith.constant 1 : index
    %c0_120 = arith.constant 0 : index
    %c0_121 = arith.constant 0 : index
    %260 = vector.load %arg8[%c1_119, %c0_120, %c0_121] : memref<4x32x1xf32, #tpu.memory_space<vmem>>, vector<1x32x1xf32>
    %261 = vector.shape_cast %260 : vector<1x32x1xf32> to vector<32x1xf32>
    %262 = vector.broadcast %261 : vector<32x1xf32> to vector<32x128xf32>
    %263 = arith.addf %259, %262 : vector<32x128xf32>
    %cst_122 = arith.constant 5.000000e-01 : f32
    %264 = vector.broadcast %cst_122 : f32 to vector<32x128xf32>
    %265 = arith.mulf %264, %263 : vector<32x128xf32>
    %cst_123 = arith.constant 0.707106769 : f32
    %266 = vector.broadcast %cst_123 : f32 to vector<32x128xf32>
    %267 = arith.mulf %263, %266 : vector<32x128xf32>
    %268 = math.erf %267 : vector<32x128xf32>
    %cst_124 = arith.constant 1.000000e+00 : f32
    %269 = vector.broadcast %cst_124 : f32 to vector<32x128xf32>
    %270 = arith.addf %269, %268 : vector<32x128xf32>
    %271 = arith.mulf %265, %270 : vector<32x128xf32>
    %c1_125 = arith.constant 1 : index
    %c0_126 = arith.constant 0 : index
    %c0_127 = arith.constant 0 : index
    %272 = vector.load %arg9[%c1_125, %c0_126, %c0_127] : memref<4x32x1xf32, #tpu.memory_space<vmem>>, vector<1x32x1xf32>
    %273 = vector.shape_cast %272 : vector<1x32x1xf32> to vector<32x1xf32>
    %274 = vector.broadcast %273 : vector<32x1xf32> to vector<32x128xf32>
    %275 = arith.mulf %271, %274 : vector<32x128xf32>
    %c1_128 = arith.constant 1 : index
    %c0_129 = arith.constant 0 : index
    %c0_130 = arith.constant 0 : index
    %276 = vector.load %arg10[%c1_128, %c0_129, %c0_130] : memref<4x32x1xf32, #tpu.memory_space<vmem>>, vector<1x32x1xf32>
    %277 = vector.shape_cast %276 : vector<1x32x1xf32> to vector<32x1xf32>
    %278 = vector.broadcast %277 : vector<32x1xf32> to vector<32x128xf32>
    %279 = arith.addf %275, %278 : vector<32x128xf32>
    %280 = arith.addf %279, %149 : vector<32x128xf32>
    %c1_131 = arith.constant 1 : index
    %c0_132 = arith.constant 0 : index
    %c0_133 = arith.constant 0 : index
    %281 = vector.load %arg11[%c1_131, %c0_132, %c0_133] : memref<4x32x32xf32, #tpu.memory_space<vmem>>, vector<1x32x32xf32>
    %282 = vector.shape_cast %281 : vector<1x32x32xf32> to vector<32x32xf32>
    %cst_134 = arith.constant dense<0.000000e+00> : vector<32x128xf32>
    %283 = tpu.matmul %282, %280, %cst_134 {dimension_numbers = #tpu.dot_dimension_numbers<[1], [0], [0], [1], [0, 0, 1, 1], [], []>} : vector<32x32xf32>, vector<32x128xf32>, vector<32x128xf32> -> vector<32x128xf32>
    %c1_135 = arith.constant 1 : index
    %c0_136 = arith.constant 0 : index
    %c0_137 = arith.constant 0 : index
    %284 = vector.load %arg12[%c1_135, %c0_136, %c0_137] : memref<4x32x1xf32, #tpu.memory_space<vmem>>, vector<1x32x1xf32>
    %285 = vector.shape_cast %284 : vector<1x32x1xf32> to vector<32x1xf32>
    %286 = vector.broadcast %285 : vector<32x1xf32> to vector<32x128xf32>
    %287 = arith.addf %283, %286 : vector<32x128xf32>
    %cst_138 = arith.constant 5.000000e-01 : f32
    %288 = vector.broadcast %cst_138 : f32 to vector<32x128xf32>
    %289 = arith.mulf %288, %287 : vector<32x128xf32>
    %cst_139 = arith.constant 0.707106769 : f32
    %290 = vector.broadcast %cst_139 : f32 to vector<32x128xf32>
    %291 = arith.mulf %287, %290 : vector<32x128xf32>
    %292 = math.erf %291 : vector<32x128xf32>
    %cst_140 = arith.constant 1.000000e+00 : f32
    %293 = vector.broadcast %cst_140 : f32 to vector<32x128xf32>
    %294 = arith.addf %293, %292 : vector<32x128xf32>
    %295 = arith.mulf %289, %294 : vector<32x128xf32>
    %c1_141 = arith.constant 1 : index
    %c0_142 = arith.constant 0 : index
    %c0_143 = arith.constant 0 : index
    %296 = vector.load %arg13[%c1_141, %c0_142, %c0_143] : memref<4x32x1xf32, #tpu.memory_space<vmem>>, vector<1x32x1xf32>
    %297 = vector.shape_cast %296 : vector<1x32x1xf32> to vector<32x1xf32>
    %298 = vector.broadcast %297 : vector<32x1xf32> to vector<32x128xf32>
    %299 = arith.mulf %295, %298 : vector<32x128xf32>
    %c1_144 = arith.constant 1 : index
    %c0_145 = arith.constant 0 : index
    %c0_146 = arith.constant 0 : index
    %300 = vector.load %arg14[%c1_144, %c0_145, %c0_146] : memref<4x32x1xf32, #tpu.memory_space<vmem>>, vector<1x32x1xf32>
    %301 = vector.shape_cast %300 : vector<1x32x1xf32> to vector<32x1xf32>
    %302 = vector.broadcast %301 : vector<32x1xf32> to vector<32x128xf32>
    %303 = arith.addf %299, %302 : vector<32x128xf32>
    %cst_147 = arith.constant dense<0.000000e+00> : vector<32x2xf32>
    %304 = tpu.matmul %303, %22, %cst_147 {dimension_numbers = #tpu.dot_dimension_numbers<[1], [0], [0], [1], [0, 0, 1, 1], [], []>} : vector<32x128xf32>, vector<128x2xf32>, vector<32x2xf32> -> vector<32x2xf32>
    %c1_148 = arith.constant 1 : index
    %c0_149 = arith.constant 0 : index
    %c0_150 = arith.constant 0 : index
    %305 = vector.load %arg15[%c1_148, %c0_149, %c0_150] : memref<4x10x32xf32, #tpu.memory_space<vmem>>, vector<1x10x32xf32>
    %306 = vector.shape_cast %305 : vector<1x10x32xf32> to vector<10x32xf32>
    %cst_151 = arith.constant dense<0.000000e+00> : vector<10x2xf32>
    %307 = tpu.matmul %306, %304, %cst_151 {dimension_numbers = #tpu.dot_dimension_numbers<[1], [0], [0], [1], [0, 0, 1, 1], [], []>} : vector<10x32xf32>, vector<32x2xf32>, vector<10x2xf32> -> vector<10x2xf32>
    %c1_152 = arith.constant 1 : index
    %c0_153 = arith.constant 0 : index
    %c0_154 = arith.constant 0 : index
    %308 = vector.load %arg16[%c1_152, %c0_153, %c0_154] : memref<4x10x1xf32, #tpu.memory_space<vmem>>, vector<1x10x1xf32>
    %309 = vector.shape_cast %308 : vector<1x10x1xf32> to vector<10x1xf32>
    %310 = vector.broadcast %309 : vector<10x1xf32> to vector<10x2xf32>
    %311 = arith.addf %307, %310 : vector<10x2xf32>
    %312 = arith.addf %176, %311 : vector<10x2xf32>
    %cst_155 = arith.constant dense<0.000000e+00> : vector<2xf32>
    %313 = vector.multi_reduction <add>, %312, %cst_155 [0] : vector<10x2xf32> to vector<2xf32>
    %314 = vector.shape_cast %313 : vector<2xf32> to vector<1x2xf32>
    %cst_156 = arith.constant 1.000000e+01 : f32
    %315 = vector.broadcast %cst_156 : f32 to vector<1x2xf32>
    %316 = arith.divf %314, %315 : vector<1x2xf32>
    %317 = vector.broadcast %316 : vector<1x2xf32> to vector<10x2xf32>
    %318 = arith.subf %312, %317 : vector<10x2xf32>
    %319 = vector.broadcast %21 : vector<10x1xf32> to vector<10x2xf32>
    %320 = arith.addf %318, %319 : vector<10x2xf32>
    %cst_157 = arith.constant dense<0xFF800000> : vector<2xf32>
    %321 = vector.multi_reduction <maximumf>, %320, %cst_157 [0] : vector<10x2xf32> to vector<2xf32>
    %322 = vector.shape_cast %321 : vector<2xf32> to vector<1x2xf32>
    %323 = vector.broadcast %322 : vector<1x2xf32> to vector<10x2xf32>
    %324 = arith.subf %320, %323 : vector<10x2xf32>
    %325 = math.exp %324 : vector<10x2xf32>
    %cst_158 = arith.constant dense<0.000000e+00> : vector<2xf32>
    %326 = vector.multi_reduction <add>, %325, %cst_158 [0] : vector<10x2xf32> to vector<2xf32>
    %327 = vector.shape_cast %326 : vector<2xf32> to vector<1x2xf32>
    %328 = math.log %327 : vector<1x2xf32>
    %329 = vector.broadcast %328 : vector<1x2xf32> to vector<10x2xf32>
    %330 = arith.subf %324, %329 : vector<10x2xf32>
    %c2_159 = arith.constant 2 : index
    %c0_160 = arith.constant 0 : index
    %c0_161 = arith.constant 0 : index
    %331 = vector.load %arg7[%c2_159, %c0_160, %c0_161] : memref<4x32x9xf32, #tpu.memory_space<vmem>>, vector<1x32x9xf32>
    %332 = vector.shape_cast %331 : vector<1x32x9xf32> to vector<32x9xf32>
    %cst_162 = arith.constant 0.000000e+00 : f32
    %333 = vector.broadcast %cst_162 : f32 to vector<32x128xf32>
    %c9_i32_163 = arith.constant 9 : i32
    %334 = tpu.dynamic_rotate %303 by %c9_i32_163 dim 1 : vector<32x128xf32>, i32 -> vector<32x128xf32>
    %c0_164 = arith.constant 0 : index
    %c0_165 = arith.constant 0 : index
    %c0_166 = arith.constant 0 : index
    %335 = vector.load %arg6[%c0_164, %c0_165, %c0_166] : memref<9x1x128xf32, #tpu.memory_space<vmem>>, vector<1x1x128xf32>
    %336 = vector.shape_cast %335 : vector<1x1x128xf32> to vector<1x128xf32>
    %337 = vector.broadcast %336 : vector<1x128xf32> to vector<32x128xf32>
    %338 = arith.mulf %334, %337 : vector<32x128xf32>
    %339 = vector.extract_strided_slice %332 {offsets = [0, 0], sizes = [32, 1], strides = [1, 1]} : vector<32x9xf32> to vector<32x1xf32>
    %340 = vector.broadcast %339 : vector<32x1xf32> to vector<32x128xf32>
    %341 = arith.mulf %338, %340 : vector<32x128xf32>
    %342 = arith.addf %333, %341 : vector<32x128xf32>
    %c8_i32_167 = arith.constant 8 : i32
    %343 = tpu.dynamic_rotate %303 by %c8_i32_167 dim 1 : vector<32x128xf32>, i32 -> vector<32x128xf32>
    %c1_168 = arith.constant 1 : index
    %c0_169 = arith.constant 0 : index
    %c0_170 = arith.constant 0 : index
    %344 = vector.load %arg6[%c1_168, %c0_169, %c0_170] : memref<9x1x128xf32, #tpu.memory_space<vmem>>, vector<1x1x128xf32>
    %345 = vector.shape_cast %344 : vector<1x1x128xf32> to vector<1x128xf32>
    %346 = vector.broadcast %345 : vector<1x128xf32> to vector<32x128xf32>
    %347 = arith.mulf %343, %346 : vector<32x128xf32>
    %348 = vector.extract_strided_slice %332 {offsets = [0, 1], sizes = [32, 1], strides = [1, 1]} : vector<32x9xf32> to vector<32x1xf32>
    %349 = vector.broadcast %348 : vector<32x1xf32> to vector<32x128xf32>
    %350 = arith.mulf %347, %349 : vector<32x128xf32>
    %351 = arith.addf %342, %350 : vector<32x128xf32>
    %c7_i32_171 = arith.constant 7 : i32
    %352 = tpu.dynamic_rotate %303 by %c7_i32_171 dim 1 : vector<32x128xf32>, i32 -> vector<32x128xf32>
    %c2_172 = arith.constant 2 : index
    %c0_173 = arith.constant 0 : index
    %c0_174 = arith.constant 0 : index
    %353 = vector.load %arg6[%c2_172, %c0_173, %c0_174] : memref<9x1x128xf32, #tpu.memory_space<vmem>>, vector<1x1x128xf32>
    %354 = vector.shape_cast %353 : vector<1x1x128xf32> to vector<1x128xf32>
    %355 = vector.broadcast %354 : vector<1x128xf32> to vector<32x128xf32>
    %356 = arith.mulf %352, %355 : vector<32x128xf32>
    %357 = vector.extract_strided_slice %332 {offsets = [0, 2], sizes = [32, 1], strides = [1, 1]} : vector<32x9xf32> to vector<32x1xf32>
    %358 = vector.broadcast %357 : vector<32x1xf32> to vector<32x128xf32>
    %359 = arith.mulf %356, %358 : vector<32x128xf32>
    %360 = arith.addf %351, %359 : vector<32x128xf32>
    %c1_i32_175 = arith.constant 1 : i32
    %361 = tpu.dynamic_rotate %303 by %c1_i32_175 dim 1 : vector<32x128xf32>, i32 -> vector<32x128xf32>
    %c3_176 = arith.constant 3 : index
    %c0_177 = arith.constant 0 : index
    %c0_178 = arith.constant 0 : index
    %362 = vector.load %arg6[%c3_176, %c0_177, %c0_178] : memref<9x1x128xf32, #tpu.memory_space<vmem>>, vector<1x1x128xf32>
    %363 = vector.shape_cast %362 : vector<1x1x128xf32> to vector<1x128xf32>
    %364 = vector.broadcast %363 : vector<1x128xf32> to vector<32x128xf32>
    %365 = arith.mulf %361, %364 : vector<32x128xf32>
    %366 = vector.extract_strided_slice %332 {offsets = [0, 3], sizes = [32, 1], strides = [1, 1]} : vector<32x9xf32> to vector<32x1xf32>
    %367 = vector.broadcast %366 : vector<32x1xf32> to vector<32x128xf32>
    %368 = arith.mulf %365, %367 : vector<32x128xf32>
    %369 = arith.addf %360, %368 : vector<32x128xf32>
    %c4_179 = arith.constant 4 : index
    %c0_180 = arith.constant 0 : index
    %c0_181 = arith.constant 0 : index
    %370 = vector.load %arg6[%c4_179, %c0_180, %c0_181] : memref<9x1x128xf32, #tpu.memory_space<vmem>>, vector<1x1x128xf32>
    %371 = vector.shape_cast %370 : vector<1x1x128xf32> to vector<1x128xf32>
    %372 = vector.broadcast %371 : vector<1x128xf32> to vector<32x128xf32>
    %373 = arith.mulf %303, %372 : vector<32x128xf32>
    %374 = vector.extract_strided_slice %332 {offsets = [0, 4], sizes = [32, 1], strides = [1, 1]} : vector<32x9xf32> to vector<32x1xf32>
    %375 = vector.broadcast %374 : vector<32x1xf32> to vector<32x128xf32>
    %376 = arith.mulf %373, %375 : vector<32x128xf32>
    %377 = arith.addf %369, %376 : vector<32x128xf32>
    %c127_i32_182 = arith.constant 127 : i32
    %378 = tpu.dynamic_rotate %303 by %c127_i32_182 dim 1 : vector<32x128xf32>, i32 -> vector<32x128xf32>
    %c5_183 = arith.constant 5 : index
    %c0_184 = arith.constant 0 : index
    %c0_185 = arith.constant 0 : index
    %379 = vector.load %arg6[%c5_183, %c0_184, %c0_185] : memref<9x1x128xf32, #tpu.memory_space<vmem>>, vector<1x1x128xf32>
    %380 = vector.shape_cast %379 : vector<1x1x128xf32> to vector<1x128xf32>
    %381 = vector.broadcast %380 : vector<1x128xf32> to vector<32x128xf32>
    %382 = arith.mulf %378, %381 : vector<32x128xf32>
    %383 = vector.extract_strided_slice %332 {offsets = [0, 5], sizes = [32, 1], strides = [1, 1]} : vector<32x9xf32> to vector<32x1xf32>
    %384 = vector.broadcast %383 : vector<32x1xf32> to vector<32x128xf32>
    %385 = arith.mulf %382, %384 : vector<32x128xf32>
    %386 = arith.addf %377, %385 : vector<32x128xf32>
    %c121_i32_186 = arith.constant 121 : i32
    %387 = tpu.dynamic_rotate %303 by %c121_i32_186 dim 1 : vector<32x128xf32>, i32 -> vector<32x128xf32>
    %c6_187 = arith.constant 6 : index
    %c0_188 = arith.constant 0 : index
    %c0_189 = arith.constant 0 : index
    %388 = vector.load %arg6[%c6_187, %c0_188, %c0_189] : memref<9x1x128xf32, #tpu.memory_space<vmem>>, vector<1x1x128xf32>
    %389 = vector.shape_cast %388 : vector<1x1x128xf32> to vector<1x128xf32>
    %390 = vector.broadcast %389 : vector<1x128xf32> to vector<32x128xf32>
    %391 = arith.mulf %387, %390 : vector<32x128xf32>
    %392 = vector.extract_strided_slice %332 {offsets = [0, 6], sizes = [32, 1], strides = [1, 1]} : vector<32x9xf32> to vector<32x1xf32>
    %393 = vector.broadcast %392 : vector<32x1xf32> to vector<32x128xf32>
    %394 = arith.mulf %391, %393 : vector<32x128xf32>
    %395 = arith.addf %386, %394 : vector<32x128xf32>
    %c120_i32_190 = arith.constant 120 : i32
    %396 = tpu.dynamic_rotate %303 by %c120_i32_190 dim 1 : vector<32x128xf32>, i32 -> vector<32x128xf32>
    %c7_191 = arith.constant 7 : index
    %c0_192 = arith.constant 0 : index
    %c0_193 = arith.constant 0 : index
    %397 = vector.load %arg6[%c7_191, %c0_192, %c0_193] : memref<9x1x128xf32, #tpu.memory_space<vmem>>, vector<1x1x128xf32>
    %398 = vector.shape_cast %397 : vector<1x1x128xf32> to vector<1x128xf32>
    %399 = vector.broadcast %398 : vector<1x128xf32> to vector<32x128xf32>
    %400 = arith.mulf %396, %399 : vector<32x128xf32>
    %401 = vector.extract_strided_slice %332 {offsets = [0, 7], sizes = [32, 1], strides = [1, 1]} : vector<32x9xf32> to vector<32x1xf32>
    %402 = vector.broadcast %401 : vector<32x1xf32> to vector<32x128xf32>
    %403 = arith.mulf %400, %402 : vector<32x128xf32>
    %404 = arith.addf %395, %403 : vector<32x128xf32>
    %c119_i32_194 = arith.constant 119 : i32
    %405 = tpu.dynamic_rotate %303 by %c119_i32_194 dim 1 : vector<32x128xf32>, i32 -> vector<32x128xf32>
    %c8_195 = arith.constant 8 : index
    %c0_196 = arith.constant 0 : index
    %c0_197 = arith.constant 0 : index
    %406 = vector.load %arg6[%c8_195, %c0_196, %c0_197] : memref<9x1x128xf32, #tpu.memory_space<vmem>>, vector<1x1x128xf32>
    %407 = vector.shape_cast %406 : vector<1x1x128xf32> to vector<1x128xf32>
    %408 = vector.broadcast %407 : vector<1x128xf32> to vector<32x128xf32>
    %409 = arith.mulf %405, %408 : vector<32x128xf32>
    %410 = vector.extract_strided_slice %332 {offsets = [0, 8], sizes = [32, 1], strides = [1, 1]} : vector<32x9xf32> to vector<32x1xf32>
    %411 = vector.broadcast %410 : vector<32x1xf32> to vector<32x128xf32>
    %412 = arith.mulf %409, %411 : vector<32x128xf32>
    %413 = arith.addf %404, %412 : vector<32x128xf32>
    %c2_198 = arith.constant 2 : index
    %c0_199 = arith.constant 0 : index
    %c0_200 = arith.constant 0 : index
    %414 = vector.load %arg8[%c2_198, %c0_199, %c0_200] : memref<4x32x1xf32, #tpu.memory_space<vmem>>, vector<1x32x1xf32>
    %415 = vector.shape_cast %414 : vector<1x32x1xf32> to vector<32x1xf32>
    %416 = vector.broadcast %415 : vector<32x1xf32> to vector<32x128xf32>
    %417 = arith.addf %413, %416 : vector<32x128xf32>
    %cst_201 = arith.constant 5.000000e-01 : f32
    %418 = vector.broadcast %cst_201 : f32 to vector<32x128xf32>
    %419 = arith.mulf %418, %417 : vector<32x128xf32>
    %cst_202 = arith.constant 0.707106769 : f32
    %420 = vector.broadcast %cst_202 : f32 to vector<32x128xf32>
    %421 = arith.mulf %417, %420 : vector<32x128xf32>
    %422 = math.erf %421 : vector<32x128xf32>
    %cst_203 = arith.constant 1.000000e+00 : f32
    %423 = vector.broadcast %cst_203 : f32 to vector<32x128xf32>
    %424 = arith.addf %423, %422 : vector<32x128xf32>
    %425 = arith.mulf %419, %424 : vector<32x128xf32>
    %c2_204 = arith.constant 2 : index
    %c0_205 = arith.constant 0 : index
    %c0_206 = arith.constant 0 : index
    %426 = vector.load %arg9[%c2_204, %c0_205, %c0_206] : memref<4x32x1xf32, #tpu.memory_space<vmem>>, vector<1x32x1xf32>
    %427 = vector.shape_cast %426 : vector<1x32x1xf32> to vector<32x1xf32>
    %428 = vector.broadcast %427 : vector<32x1xf32> to vector<32x128xf32>
    %429 = arith.mulf %425, %428 : vector<32x128xf32>
    %c2_207 = arith.constant 2 : index
    %c0_208 = arith.constant 0 : index
    %c0_209 = arith.constant 0 : index
    %430 = vector.load %arg10[%c2_207, %c0_208, %c0_209] : memref<4x32x1xf32, #tpu.memory_space<vmem>>, vector<1x32x1xf32>
    %431 = vector.shape_cast %430 : vector<1x32x1xf32> to vector<32x1xf32>
    %432 = vector.broadcast %431 : vector<32x1xf32> to vector<32x128xf32>
    %433 = arith.addf %429, %432 : vector<32x128xf32>
    %434 = arith.addf %433, %303 : vector<32x128xf32>
    %c2_210 = arith.constant 2 : index
    %c0_211 = arith.constant 0 : index
    %c0_212 = arith.constant 0 : index
    %435 = vector.load %arg11[%c2_210, %c0_211, %c0_212] : memref<4x32x32xf32, #tpu.memory_space<vmem>>, vector<1x32x32xf32>
    %436 = vector.shape_cast %435 : vector<1x32x32xf32> to vector<32x32xf32>
    %cst_213 = arith.constant dense<0.000000e+00> : vector<32x128xf32>
    %437 = tpu.matmul %436, %434, %cst_213 {dimension_numbers = #tpu.dot_dimension_numbers<[1], [0], [0], [1], [0, 0, 1, 1], [], []>} : vector<32x32xf32>, vector<32x128xf32>, vector<32x128xf32> -> vector<32x128xf32>
    %c2_214 = arith.constant 2 : index
    %c0_215 = arith.constant 0 : index
    %c0_216 = arith.constant 0 : index
    %438 = vector.load %arg12[%c2_214, %c0_215, %c0_216] : memref<4x32x1xf32, #tpu.memory_space<vmem>>, vector<1x32x1xf32>
    %439 = vector.shape_cast %438 : vector<1x32x1xf32> to vector<32x1xf32>
    %440 = vector.broadcast %439 : vector<32x1xf32> to vector<32x128xf32>
    %441 = arith.addf %437, %440 : vector<32x128xf32>
    %cst_217 = arith.constant 5.000000e-01 : f32
    %442 = vector.broadcast %cst_217 : f32 to vector<32x128xf32>
    %443 = arith.mulf %442, %441 : vector<32x128xf32>
    %cst_218 = arith.constant 0.707106769 : f32
    %444 = vector.broadcast %cst_218 : f32 to vector<32x128xf32>
    %445 = arith.mulf %441, %444 : vector<32x128xf32>
    %446 = math.erf %445 : vector<32x128xf32>
    %cst_219 = arith.constant 1.000000e+00 : f32
    %447 = vector.broadcast %cst_219 : f32 to vector<32x128xf32>
    %448 = arith.addf %447, %446 : vector<32x128xf32>
    %449 = arith.mulf %443, %448 : vector<32x128xf32>
    %c2_220 = arith.constant 2 : index
    %c0_221 = arith.constant 0 : index
    %c0_222 = arith.constant 0 : index
    %450 = vector.load %arg13[%c2_220, %c0_221, %c0_222] : memref<4x32x1xf32, #tpu.memory_space<vmem>>, vector<1x32x1xf32>
    %451 = vector.shape_cast %450 : vector<1x32x1xf32> to vector<32x1xf32>
    %452 = vector.broadcast %451 : vector<32x1xf32> to vector<32x128xf32>
    %453 = arith.mulf %449, %452 : vector<32x128xf32>
    %c2_223 = arith.constant 2 : index
    %c0_224 = arith.constant 0 : index
    %c0_225 = arith.constant 0 : index
    %454 = vector.load %arg14[%c2_223, %c0_224, %c0_225] : memref<4x32x1xf32, #tpu.memory_space<vmem>>, vector<1x32x1xf32>
    %455 = vector.shape_cast %454 : vector<1x32x1xf32> to vector<32x1xf32>
    %456 = vector.broadcast %455 : vector<32x1xf32> to vector<32x128xf32>
    %457 = arith.addf %453, %456 : vector<32x128xf32>
    %cst_226 = arith.constant dense<0.000000e+00> : vector<32x2xf32>
    %458 = tpu.matmul %457, %22, %cst_226 {dimension_numbers = #tpu.dot_dimension_numbers<[1], [0], [0], [1], [0, 0, 1, 1], [], []>} : vector<32x128xf32>, vector<128x2xf32>, vector<32x2xf32> -> vector<32x2xf32>
    %c2_227 = arith.constant 2 : index
    %c0_228 = arith.constant 0 : index
    %c0_229 = arith.constant 0 : index
    %459 = vector.load %arg15[%c2_227, %c0_228, %c0_229] : memref<4x10x32xf32, #tpu.memory_space<vmem>>, vector<1x10x32xf32>
    %460 = vector.shape_cast %459 : vector<1x10x32xf32> to vector<10x32xf32>
    %cst_230 = arith.constant dense<0.000000e+00> : vector<10x2xf32>
    %461 = tpu.matmul %460, %458, %cst_230 {dimension_numbers = #tpu.dot_dimension_numbers<[1], [0], [0], [1], [0, 0, 1, 1], [], []>} : vector<10x32xf32>, vector<32x2xf32>, vector<10x2xf32> -> vector<10x2xf32>
    %c2_231 = arith.constant 2 : index
    %c0_232 = arith.constant 0 : index
    %c0_233 = arith.constant 0 : index
    %462 = vector.load %arg16[%c2_231, %c0_232, %c0_233] : memref<4x10x1xf32, #tpu.memory_space<vmem>>, vector<1x10x1xf32>
    %463 = vector.shape_cast %462 : vector<1x10x1xf32> to vector<10x1xf32>
    %464 = vector.broadcast %463 : vector<10x1xf32> to vector<10x2xf32>
    %465 = arith.addf %461, %464 : vector<10x2xf32>
    %466 = arith.addf %330, %465 : vector<10x2xf32>
    %cst_234 = arith.constant dense<0.000000e+00> : vector<2xf32>
    %467 = vector.multi_reduction <add>, %466, %cst_234 [0] : vector<10x2xf32> to vector<2xf32>
    %468 = vector.shape_cast %467 : vector<2xf32> to vector<1x2xf32>
    %cst_235 = arith.constant 1.000000e+01 : f32
    %469 = vector.broadcast %cst_235 : f32 to vector<1x2xf32>
    %470 = arith.divf %468, %469 : vector<1x2xf32>
    %471 = vector.broadcast %470 : vector<1x2xf32> to vector<10x2xf32>
    %472 = arith.subf %466, %471 : vector<10x2xf32>
    %473 = vector.broadcast %21 : vector<10x1xf32> to vector<10x2xf32>
    %474 = arith.addf %472, %473 : vector<10x2xf32>
    %cst_236 = arith.constant dense<0xFF800000> : vector<2xf32>
    %475 = vector.multi_reduction <maximumf>, %474, %cst_236 [0] : vector<10x2xf32> to vector<2xf32>
    %476 = vector.shape_cast %475 : vector<2xf32> to vector<1x2xf32>
    %477 = vector.broadcast %476 : vector<1x2xf32> to vector<10x2xf32>
    %478 = arith.subf %474, %477 : vector<10x2xf32>
    %479 = math.exp %478 : vector<10x2xf32>
    %cst_237 = arith.constant dense<0.000000e+00> : vector<2xf32>
    %480 = vector.multi_reduction <add>, %479, %cst_237 [0] : vector<10x2xf32> to vector<2xf32>
    %481 = vector.shape_cast %480 : vector<2xf32> to vector<1x2xf32>
    %482 = math.log %481 : vector<1x2xf32>
    %483 = vector.broadcast %482 : vector<1x2xf32> to vector<10x2xf32>
    %484 = arith.subf %478, %483 : vector<10x2xf32>
    %c3_238 = arith.constant 3 : index
    %c0_239 = arith.constant 0 : index
    %c0_240 = arith.constant 0 : index
    %485 = vector.load %arg7[%c3_238, %c0_239, %c0_240] : memref<4x32x9xf32, #tpu.memory_space<vmem>>, vector<1x32x9xf32>
    %486 = vector.shape_cast %485 : vector<1x32x9xf32> to vector<32x9xf32>
    %cst_241 = arith.constant 0.000000e+00 : f32
    %487 = vector.broadcast %cst_241 : f32 to vector<32x128xf32>
    %c9_i32_242 = arith.constant 9 : i32
    %488 = tpu.dynamic_rotate %457 by %c9_i32_242 dim 1 : vector<32x128xf32>, i32 -> vector<32x128xf32>
    %c0_243 = arith.constant 0 : index
    %c0_244 = arith.constant 0 : index
    %c0_245 = arith.constant 0 : index
    %489 = vector.load %arg6[%c0_243, %c0_244, %c0_245] : memref<9x1x128xf32, #tpu.memory_space<vmem>>, vector<1x1x128xf32>
    %490 = vector.shape_cast %489 : vector<1x1x128xf32> to vector<1x128xf32>
    %491 = vector.broadcast %490 : vector<1x128xf32> to vector<32x128xf32>
    %492 = arith.mulf %488, %491 : vector<32x128xf32>
    %493 = vector.extract_strided_slice %486 {offsets = [0, 0], sizes = [32, 1], strides = [1, 1]} : vector<32x9xf32> to vector<32x1xf32>
    %494 = vector.broadcast %493 : vector<32x1xf32> to vector<32x128xf32>
    %495 = arith.mulf %492, %494 : vector<32x128xf32>
    %496 = arith.addf %487, %495 : vector<32x128xf32>
    %c8_i32_246 = arith.constant 8 : i32
    %497 = tpu.dynamic_rotate %457 by %c8_i32_246 dim 1 : vector<32x128xf32>, i32 -> vector<32x128xf32>
    %c1_247 = arith.constant 1 : index
    %c0_248 = arith.constant 0 : index
    %c0_249 = arith.constant 0 : index
    %498 = vector.load %arg6[%c1_247, %c0_248, %c0_249] : memref<9x1x128xf32, #tpu.memory_space<vmem>>, vector<1x1x128xf32>
    %499 = vector.shape_cast %498 : vector<1x1x128xf32> to vector<1x128xf32>
    %500 = vector.broadcast %499 : vector<1x128xf32> to vector<32x128xf32>
    %501 = arith.mulf %497, %500 : vector<32x128xf32>
    %502 = vector.extract_strided_slice %486 {offsets = [0, 1], sizes = [32, 1], strides = [1, 1]} : vector<32x9xf32> to vector<32x1xf32>
    %503 = vector.broadcast %502 : vector<32x1xf32> to vector<32x128xf32>
    %504 = arith.mulf %501, %503 : vector<32x128xf32>
    %505 = arith.addf %496, %504 : vector<32x128xf32>
    %c7_i32_250 = arith.constant 7 : i32
    %506 = tpu.dynamic_rotate %457 by %c7_i32_250 dim 1 : vector<32x128xf32>, i32 -> vector<32x128xf32>
    %c2_251 = arith.constant 2 : index
    %c0_252 = arith.constant 0 : index
    %c0_253 = arith.constant 0 : index
    %507 = vector.load %arg6[%c2_251, %c0_252, %c0_253] : memref<9x1x128xf32, #tpu.memory_space<vmem>>, vector<1x1x128xf32>
    %508 = vector.shape_cast %507 : vector<1x1x128xf32> to vector<1x128xf32>
    %509 = vector.broadcast %508 : vector<1x128xf32> to vector<32x128xf32>
    %510 = arith.mulf %506, %509 : vector<32x128xf32>
    %511 = vector.extract_strided_slice %486 {offsets = [0, 2], sizes = [32, 1], strides = [1, 1]} : vector<32x9xf32> to vector<32x1xf32>
    %512 = vector.broadcast %511 : vector<32x1xf32> to vector<32x128xf32>
    %513 = arith.mulf %510, %512 : vector<32x128xf32>
    %514 = arith.addf %505, %513 : vector<32x128xf32>
    %c1_i32_254 = arith.constant 1 : i32
    %515 = tpu.dynamic_rotate %457 by %c1_i32_254 dim 1 : vector<32x128xf32>, i32 -> vector<32x128xf32>
    %c3_255 = arith.constant 3 : index
    %c0_256 = arith.constant 0 : index
    %c0_257 = arith.constant 0 : index
    %516 = vector.load %arg6[%c3_255, %c0_256, %c0_257] : memref<9x1x128xf32, #tpu.memory_space<vmem>>, vector<1x1x128xf32>
    %517 = vector.shape_cast %516 : vector<1x1x128xf32> to vector<1x128xf32>
    %518 = vector.broadcast %517 : vector<1x128xf32> to vector<32x128xf32>
    %519 = arith.mulf %515, %518 : vector<32x128xf32>
    %520 = vector.extract_strided_slice %486 {offsets = [0, 3], sizes = [32, 1], strides = [1, 1]} : vector<32x9xf32> to vector<32x1xf32>
    %521 = vector.broadcast %520 : vector<32x1xf32> to vector<32x128xf32>
    %522 = arith.mulf %519, %521 : vector<32x128xf32>
    %523 = arith.addf %514, %522 : vector<32x128xf32>
    %c4_258 = arith.constant 4 : index
    %c0_259 = arith.constant 0 : index
    %c0_260 = arith.constant 0 : index
    %524 = vector.load %arg6[%c4_258, %c0_259, %c0_260] : memref<9x1x128xf32, #tpu.memory_space<vmem>>, vector<1x1x128xf32>
    %525 = vector.shape_cast %524 : vector<1x1x128xf32> to vector<1x128xf32>
    %526 = vector.broadcast %525 : vector<1x128xf32> to vector<32x128xf32>
    %527 = arith.mulf %457, %526 : vector<32x128xf32>
    %528 = vector.extract_strided_slice %486 {offsets = [0, 4], sizes = [32, 1], strides = [1, 1]} : vector<32x9xf32> to vector<32x1xf32>
    %529 = vector.broadcast %528 : vector<32x1xf32> to vector<32x128xf32>
    %530 = arith.mulf %527, %529 : vector<32x128xf32>
    %531 = arith.addf %523, %530 : vector<32x128xf32>
    %c127_i32_261 = arith.constant 127 : i32
    %532 = tpu.dynamic_rotate %457 by %c127_i32_261 dim 1 : vector<32x128xf32>, i32 -> vector<32x128xf32>
    %c5_262 = arith.constant 5 : index
    %c0_263 = arith.constant 0 : index
    %c0_264 = arith.constant 0 : index
    %533 = vector.load %arg6[%c5_262, %c0_263, %c0_264] : memref<9x1x128xf32, #tpu.memory_space<vmem>>, vector<1x1x128xf32>
    %534 = vector.shape_cast %533 : vector<1x1x128xf32> to vector<1x128xf32>
    %535 = vector.broadcast %534 : vector<1x128xf32> to vector<32x128xf32>
    %536 = arith.mulf %532, %535 : vector<32x128xf32>
    %537 = vector.extract_strided_slice %486 {offsets = [0, 5], sizes = [32, 1], strides = [1, 1]} : vector<32x9xf32> to vector<32x1xf32>
    %538 = vector.broadcast %537 : vector<32x1xf32> to vector<32x128xf32>
    %539 = arith.mulf %536, %538 : vector<32x128xf32>
    %540 = arith.addf %531, %539 : vector<32x128xf32>
    %c121_i32_265 = arith.constant 121 : i32
    %541 = tpu.dynamic_rotate %457 by %c121_i32_265 dim 1 : vector<32x128xf32>, i32 -> vector<32x128xf32>
    %c6_266 = arith.constant 6 : index
    %c0_267 = arith.constant 0 : index
    %c0_268 = arith.constant 0 : index
    %542 = vector.load %arg6[%c6_266, %c0_267, %c0_268] : memref<9x1x128xf32, #tpu.memory_space<vmem>>, vector<1x1x128xf32>
    %543 = vector.shape_cast %542 : vector<1x1x128xf32> to vector<1x128xf32>
    %544 = vector.broadcast %543 : vector<1x128xf32> to vector<32x128xf32>
    %545 = arith.mulf %541, %544 : vector<32x128xf32>
    %546 = vector.extract_strided_slice %486 {offsets = [0, 6], sizes = [32, 1], strides = [1, 1]} : vector<32x9xf32> to vector<32x1xf32>
    %547 = vector.broadcast %546 : vector<32x1xf32> to vector<32x128xf32>
    %548 = arith.mulf %545, %547 : vector<32x128xf32>
    %549 = arith.addf %540, %548 : vector<32x128xf32>
    %c120_i32_269 = arith.constant 120 : i32
    %550 = tpu.dynamic_rotate %457 by %c120_i32_269 dim 1 : vector<32x128xf32>, i32 -> vector<32x128xf32>
    %c7_270 = arith.constant 7 : index
    %c0_271 = arith.constant 0 : index
    %c0_272 = arith.constant 0 : index
    %551 = vector.load %arg6[%c7_270, %c0_271, %c0_272] : memref<9x1x128xf32, #tpu.memory_space<vmem>>, vector<1x1x128xf32>
    %552 = vector.shape_cast %551 : vector<1x1x128xf32> to vector<1x128xf32>
    %553 = vector.broadcast %552 : vector<1x128xf32> to vector<32x128xf32>
    %554 = arith.mulf %550, %553 : vector<32x128xf32>
    %555 = vector.extract_strided_slice %486 {offsets = [0, 7], sizes = [32, 1], strides = [1, 1]} : vector<32x9xf32> to vector<32x1xf32>
    %556 = vector.broadcast %555 : vector<32x1xf32> to vector<32x128xf32>
    %557 = arith.mulf %554, %556 : vector<32x128xf32>
    %558 = arith.addf %549, %557 : vector<32x128xf32>
    %c119_i32_273 = arith.constant 119 : i32
    %559 = tpu.dynamic_rotate %457 by %c119_i32_273 dim 1 : vector<32x128xf32>, i32 -> vector<32x128xf32>
    %c8_274 = arith.constant 8 : index
    %c0_275 = arith.constant 0 : index
    %c0_276 = arith.constant 0 : index
    %560 = vector.load %arg6[%c8_274, %c0_275, %c0_276] : memref<9x1x128xf32, #tpu.memory_space<vmem>>, vector<1x1x128xf32>
    %561 = vector.shape_cast %560 : vector<1x1x128xf32> to vector<1x128xf32>
    %562 = vector.broadcast %561 : vector<1x128xf32> to vector<32x128xf32>
    %563 = arith.mulf %559, %562 : vector<32x128xf32>
    %564 = vector.extract_strided_slice %486 {offsets = [0, 8], sizes = [32, 1], strides = [1, 1]} : vector<32x9xf32> to vector<32x1xf32>
    %565 = vector.broadcast %564 : vector<32x1xf32> to vector<32x128xf32>
    %566 = arith.mulf %563, %565 : vector<32x128xf32>
    %567 = arith.addf %558, %566 : vector<32x128xf32>
    %c3_277 = arith.constant 3 : index
    %c0_278 = arith.constant 0 : index
    %c0_279 = arith.constant 0 : index
    %568 = vector.load %arg8[%c3_277, %c0_278, %c0_279] : memref<4x32x1xf32, #tpu.memory_space<vmem>>, vector<1x32x1xf32>
    %569 = vector.shape_cast %568 : vector<1x32x1xf32> to vector<32x1xf32>
    %570 = vector.broadcast %569 : vector<32x1xf32> to vector<32x128xf32>
    %571 = arith.addf %567, %570 : vector<32x128xf32>
    %cst_280 = arith.constant 5.000000e-01 : f32
    %572 = vector.broadcast %cst_280 : f32 to vector<32x128xf32>
    %573 = arith.mulf %572, %571 : vector<32x128xf32>
    %cst_281 = arith.constant 0.707106769 : f32
    %574 = vector.broadcast %cst_281 : f32 to vector<32x128xf32>
    %575 = arith.mulf %571, %574 : vector<32x128xf32>
    %576 = math.erf %575 : vector<32x128xf32>
    %cst_282 = arith.constant 1.000000e+00 : f32
    %577 = vector.broadcast %cst_282 : f32 to vector<32x128xf32>
    %578 = arith.addf %577, %576 : vector<32x128xf32>
    %579 = arith.mulf %573, %578 : vector<32x128xf32>
    %c3_283 = arith.constant 3 : index
    %c0_284 = arith.constant 0 : index
    %c0_285 = arith.constant 0 : index
    %580 = vector.load %arg9[%c3_283, %c0_284, %c0_285] : memref<4x32x1xf32, #tpu.memory_space<vmem>>, vector<1x32x1xf32>
    %581 = vector.shape_cast %580 : vector<1x32x1xf32> to vector<32x1xf32>
    %582 = vector.broadcast %581 : vector<32x1xf32> to vector<32x128xf32>
    %583 = arith.mulf %579, %582 : vector<32x128xf32>
    %c3_286 = arith.constant 3 : index
    %c0_287 = arith.constant 0 : index
    %c0_288 = arith.constant 0 : index
    %584 = vector.load %arg10[%c3_286, %c0_287, %c0_288] : memref<4x32x1xf32, #tpu.memory_space<vmem>>, vector<1x32x1xf32>
    %585 = vector.shape_cast %584 : vector<1x32x1xf32> to vector<32x1xf32>
    %586 = vector.broadcast %585 : vector<32x1xf32> to vector<32x128xf32>
    %587 = arith.addf %583, %586 : vector<32x128xf32>
    %588 = arith.addf %587, %457 : vector<32x128xf32>
    %c3_289 = arith.constant 3 : index
    %c0_290 = arith.constant 0 : index
    %c0_291 = arith.constant 0 : index
    %589 = vector.load %arg11[%c3_289, %c0_290, %c0_291] : memref<4x32x32xf32, #tpu.memory_space<vmem>>, vector<1x32x32xf32>
    %590 = vector.shape_cast %589 : vector<1x32x32xf32> to vector<32x32xf32>
    %cst_292 = arith.constant dense<0.000000e+00> : vector<32x128xf32>
    %591 = tpu.matmul %590, %588, %cst_292 {dimension_numbers = #tpu.dot_dimension_numbers<[1], [0], [0], [1], [0, 0, 1, 1], [], []>} : vector<32x32xf32>, vector<32x128xf32>, vector<32x128xf32> -> vector<32x128xf32>
    %c3_293 = arith.constant 3 : index
    %c0_294 = arith.constant 0 : index
    %c0_295 = arith.constant 0 : index
    %592 = vector.load %arg12[%c3_293, %c0_294, %c0_295] : memref<4x32x1xf32, #tpu.memory_space<vmem>>, vector<1x32x1xf32>
    %593 = vector.shape_cast %592 : vector<1x32x1xf32> to vector<32x1xf32>
    %594 = vector.broadcast %593 : vector<32x1xf32> to vector<32x128xf32>
    %595 = arith.addf %591, %594 : vector<32x128xf32>
    %cst_296 = arith.constant 5.000000e-01 : f32
    %596 = vector.broadcast %cst_296 : f32 to vector<32x128xf32>
    %597 = arith.mulf %596, %595 : vector<32x128xf32>
    %cst_297 = arith.constant 0.707106769 : f32
    %598 = vector.broadcast %cst_297 : f32 to vector<32x128xf32>
    %599 = arith.mulf %595, %598 : vector<32x128xf32>
    %600 = math.erf %599 : vector<32x128xf32>
    %cst_298 = arith.constant 1.000000e+00 : f32
    %601 = vector.broadcast %cst_298 : f32 to vector<32x128xf32>
    %602 = arith.addf %601, %600 : vector<32x128xf32>
    %603 = arith.mulf %597, %602 : vector<32x128xf32>
    %c3_299 = arith.constant 3 : index
    %c0_300 = arith.constant 0 : index
    %c0_301 = arith.constant 0 : index
    %604 = vector.load %arg13[%c3_299, %c0_300, %c0_301] : memref<4x32x1xf32, #tpu.memory_space<vmem>>, vector<1x32x1xf32>
    %605 = vector.shape_cast %604 : vector<1x32x1xf32> to vector<32x1xf32>
    %606 = vector.broadcast %605 : vector<32x1xf32> to vector<32x128xf32>
    %607 = arith.mulf %603, %606 : vector<32x128xf32>
    %c3_302 = arith.constant 3 : index
    %c0_303 = arith.constant 0 : index
    %c0_304 = arith.constant 0 : index
    %608 = vector.load %arg14[%c3_302, %c0_303, %c0_304] : memref<4x32x1xf32, #tpu.memory_space<vmem>>, vector<1x32x1xf32>
    %609 = vector.shape_cast %608 : vector<1x32x1xf32> to vector<32x1xf32>
    %610 = vector.broadcast %609 : vector<32x1xf32> to vector<32x128xf32>
    %611 = arith.addf %607, %610 : vector<32x128xf32>
    %cst_305 = arith.constant dense<0.000000e+00> : vector<32x2xf32>
    %612 = tpu.matmul %611, %22, %cst_305 {dimension_numbers = #tpu.dot_dimension_numbers<[1], [0], [0], [1], [0, 0, 1, 1], [], []>} : vector<32x128xf32>, vector<128x2xf32>, vector<32x2xf32> -> vector<32x2xf32>
    %c3_306 = arith.constant 3 : index
    %c0_307 = arith.constant 0 : index
    %c0_308 = arith.constant 0 : index
    %613 = vector.load %arg15[%c3_306, %c0_307, %c0_308] : memref<4x10x32xf32, #tpu.memory_space<vmem>>, vector<1x10x32xf32>
    %614 = vector.shape_cast %613 : vector<1x10x32xf32> to vector<10x32xf32>
    %cst_309 = arith.constant dense<0.000000e+00> : vector<10x2xf32>
    %615 = tpu.matmul %614, %612, %cst_309 {dimension_numbers = #tpu.dot_dimension_numbers<[1], [0], [0], [1], [0, 0, 1, 1], [], []>} : vector<10x32xf32>, vector<32x2xf32>, vector<10x2xf32> -> vector<10x2xf32>
    %c3_310 = arith.constant 3 : index
    %c0_311 = arith.constant 0 : index
    %c0_312 = arith.constant 0 : index
    %616 = vector.load %arg16[%c3_310, %c0_311, %c0_312] : memref<4x10x1xf32, #tpu.memory_space<vmem>>, vector<1x10x1xf32>
    %617 = vector.shape_cast %616 : vector<1x10x1xf32> to vector<10x1xf32>
    %618 = vector.broadcast %617 : vector<10x1xf32> to vector<10x2xf32>
    %619 = arith.addf %615, %618 : vector<10x2xf32>
    %620 = arith.addf %484, %619 : vector<10x2xf32>
    %cst_313 = arith.constant dense<0.000000e+00> : vector<2xf32>
    %621 = vector.multi_reduction <add>, %620, %cst_313 [0] : vector<10x2xf32> to vector<2xf32>
    %622 = vector.shape_cast %621 : vector<2xf32> to vector<1x2xf32>
    %cst_314 = arith.constant 1.000000e+01 : f32
    %623 = vector.broadcast %cst_314 : f32 to vector<1x2xf32>
    %624 = arith.divf %622, %623 : vector<1x2xf32>
    %625 = vector.broadcast %624 : vector<1x2xf32> to vector<10x2xf32>
    %626 = arith.subf %620, %625 : vector<10x2xf32>
    %627 = vector.broadcast %21 : vector<10x1xf32> to vector<10x2xf32>
    %628 = arith.addf %626, %627 : vector<10x2xf32>
    %cst_315 = arith.constant dense<0xFF800000> : vector<2xf32>
    %629 = vector.multi_reduction <maximumf>, %628, %cst_315 [0] : vector<10x2xf32> to vector<2xf32>
    %630 = vector.shape_cast %629 : vector<2xf32> to vector<1x2xf32>
    %631 = vector.broadcast %630 : vector<1x2xf32> to vector<10x2xf32>
    %632 = arith.subf %628, %631 : vector<10x2xf32>
    %633 = math.exp %632 : vector<10x2xf32>
    %cst_316 = arith.constant dense<0.000000e+00> : vector<2xf32>
    %634 = vector.multi_reduction <add>, %633, %cst_316 [0] : vector<10x2xf32> to vector<2xf32>
    %635 = vector.shape_cast %634 : vector<2xf32> to vector<1x2xf32>
    %636 = math.log %635 : vector<1x2xf32>
    %637 = vector.broadcast %636 : vector<1x2xf32> to vector<10x2xf32>
    %638 = arith.subf %632, %637 : vector<10x2xf32>
    %639 = vector.shape_cast %638 : vector<10x2xf32> to vector<1x10x2xf32>
    %c0_317 = arith.constant 0 : index
    %c0_318 = arith.constant 0 : index
    %c0_319 = arith.constant 0 : index
    %640 = vector.load %arg19[%c0_317, %c0_318, %c0_319] : memref<1x10x2xf32, #tpu.memory_space<vmem>>, vector<1x10x2xf32>
    tpu.vector_store %arg19[%c0_317, %c0_318, %c0_319], %639 {strides = array<i32>} : memref<1x10x2xf32, #tpu.memory_space<vmem>>, vector<1x10x2xf32>,
    return
  }
  func.func @transform_0(%arg0: i32) -> (i32, i32) {
    %c0_i32 = arith.constant 0 : i32
    %c0_i32_0 = arith.constant 0 : i32
    return %c0_i32, %arg0 : i32, i32
  }
  func.func @transform_1(%arg0: i32) -> (i32, i32) {
    %c0_i32 = arith.constant 0 : i32
    %c0_i32_0 = arith.constant 0 : i32
    %c0_i32_1 = arith.constant 0 : i32
    return %c0_i32, %c0_i32_0 : i32, i32
  }
  func.func @transform_2(%arg0: i32) -> (i32, i32) {
    %c0_i32 = arith.constant 0 : i32
    %c0_i32_0 = arith.constant 0 : i32
    %c0_i32_1 = arith.constant 0 : i32
    return %c0_i32, %c0_i32_0 : i32, i32
  }
  func.func @transform_3(%arg0: i32) -> (i32, i32) {
    %c0_i32 = arith.constant 0 : i32
    %c0_i32_0 = arith.constant 0 : i32
    %c0_i32_1 = arith.constant 0 : i32
    return %c0_i32, %c0_i32_0 : i32, i32
  }
  func.func @transform_4(%arg0: i32) -> (i32, i32) {
    %c0_i32 = arith.constant 0 : i32
    %c0_i32_0 = arith.constant 0 : i32
    %c0_i32_1 = arith.constant 0 : i32
    return %c0_i32, %c0_i32_0 : i32, i32
  }
  func.func @transform_5(%arg0: i32) -> (i32, i32, i32) {
    %c0_i32 = arith.constant 0 : i32
    %c0_i32_0 = arith.constant 0 : i32
    %c0_i32_1 = arith.constant 0 : i32
    %c0_i32_2 = arith.constant 0 : i32
    return %c0_i32, %c0_i32_0, %c0_i32_1 : i32, i32, i32
  }
  func.func @transform_6(%arg0: i32) -> (i32, i32, i32) {
    %c0_i32 = arith.constant 0 : i32
    %c0_i32_0 = arith.constant 0 : i32
    %c0_i32_1 = arith.constant 0 : i32
    %c0_i32_2 = arith.constant 0 : i32
    return %c0_i32, %c0_i32_0, %c0_i32_1 : i32, i32, i32
  }
  func.func @transform_7(%arg0: i32) -> (i32, i32, i32) {
    %c0_i32 = arith.constant 0 : i32
    %c0_i32_0 = arith.constant 0 : i32
    %c0_i32_1 = arith.constant 0 : i32
    %c0_i32_2 = arith.constant 0 : i32
    return %c0_i32, %c0_i32_0, %c0_i32_1 : i32, i32, i32
  }
  func.func @transform_8(%arg0: i32) -> (i32, i32, i32) {
    %c0_i32 = arith.constant 0 : i32
    %c0_i32_0 = arith.constant 0 : i32
    %c0_i32_1 = arith.constant 0 : i32
    %c0_i32_2 = arith.constant 0 : i32
    return %c0_i32, %c0_i32_0, %c0_i32_1 : i32, i32, i32
  }
  func.func @transform_9(%arg0: i32) -> (i32, i32, i32) {
    %c0_i32 = arith.constant 0 : i32
    %c0_i32_0 = arith.constant 0 : i32
    %c0_i32_1 = arith.constant 0 : i32
    %c0_i32_2 = arith.constant 0 : i32
    return %c0_i32, %c0_i32_0, %c0_i32_1 : i32, i32, i32
  }
  func.func @transform_10(%arg0: i32) -> (i32, i32, i32) {
    %c0_i32 = arith.constant 0 : i32
    %c0_i32_0 = arith.constant 0 : i32
    %c0_i32_1 = arith.constant 0 : i32
    %c0_i32_2 = arith.constant 0 : i32
    return %c0_i32, %c0_i32_0, %c0_i32_1 : i32, i32, i32
  }
  func.func @transform_11(%arg0: i32) -> (i32, i32, i32) {
    %c0_i32 = arith.constant 0 : i32
    %c0_i32_0 = arith.constant 0 : i32
    %c0_i32_1 = arith.constant 0 : i32
    %c0_i32_2 = arith.constant 0 : i32
    return %c0_i32, %c0_i32_0, %c0_i32_1 : i32, i32, i32
  }
  func.func @transform_12(%arg0: i32) -> (i32, i32, i32) {
    %c0_i32 = arith.constant 0 : i32
    %c0_i32_0 = arith.constant 0 : i32
    %c0_i32_1 = arith.constant 0 : i32
    %c0_i32_2 = arith.constant 0 : i32
    return %c0_i32, %c0_i32_0, %c0_i32_1 : i32, i32, i32
  }
  func.func @transform_13(%arg0: i32) -> (i32, i32, i32) {
    %c0_i32 = arith.constant 0 : i32
    %c0_i32_0 = arith.constant 0 : i32
    %c0_i32_1 = arith.constant 0 : i32
    %c0_i32_2 = arith.constant 0 : i32
    return %c0_i32, %c0_i32_0, %c0_i32_1 : i32, i32, i32
  }
  func.func @transform_14(%arg0: i32) -> (i32, i32, i32) {
    %c0_i32 = arith.constant 0 : i32
    %c0_i32_0 = arith.constant 0 : i32
    %c0_i32_1 = arith.constant 0 : i32
    %c0_i32_2 = arith.constant 0 : i32
    return %c0_i32, %c0_i32_0, %c0_i32_1 : i32, i32, i32
  }
  func.func @transform_15(%arg0: i32) -> (i32, i32, i32) {
    %c0_i32 = arith.constant 0 : i32
    %c0_i32_0 = arith.constant 0 : i32
    %c0_i32_1 = arith.constant 0 : i32
    %c0_i32_2 = arith.constant 0 : i32
    return %c0_i32, %c0_i32_0, %c0_i32_1 : i32, i32, i32
  }
  func.func @transform_16(%arg0: i32) -> (i32, i32) {
    %c0_i32 = arith.constant 0 : i32
    %c0_i32_0 = arith.constant 0 : i32
    %c0_i32_1 = arith.constant 0 : i32
    return %c0_i32, %c0_i32_0 : i32, i32
  }
  func.func @transform_17(%arg0: i32) -> (i32, i32) {
    %c0_i32 = arith.constant 0 : i32
    %c0_i32_0 = arith.constant 0 : i32
    %c0_i32_1 = arith.constant 0 : i32
    return %c0_i32, %c0_i32_0 : i32, i32
  }
  func.func @transform_18(%arg0: i32) -> (i32, i32, i32) {
    %c0_i32 = arith.constant 0 : i32
    %c0_i32_0 = arith.constant 0 : i32
    %c0_i32_1 = arith.constant 0 : i32
    return %arg0, %c0_i32, %c0_i32_0 : i32, i32, i32
  }
}

</mosaic_0001>

<llo_original>
// kernel: bayes_convmixer2_forward.1
$region0: #{bayes_convmixer2_forward.1}
  #allocation0 [shape = 'u32[]', space=smem, size = 0x4, offset = 0x4, fixed_abs, tag = 'smem constant byte address 0x4 - core index']
  #allocation1 [shape = 'u32[72,128]{1,0:T(1,128)}', space=vmem, size = 0x9000, scoped, tag = 'internal scratch']
  %s0 = inlined_call_operand.vmem [shape: f32[12,128], index: 0, kind: input, shape index: {}]
  %s1 = inlined_call_operand.vmem [shape: f32[32,12], index: 1, kind: input, shape index: {}]
  %s2 = inlined_call_operand.vmem [shape: f32[32,1], index: 2, kind: input, shape index: {}]
  %s3 = inlined_call_operand.vmem [shape: f32[32,1], index: 3, kind: input, shape index: {}]
  %s4 = inlined_call_operand.vmem [shape: f32[32,1], index: 4, kind: input, shape index: {}]
  %s5 = inlined_call_operand.vmem [shape: f32[9,1,128], index: 5, kind: input, shape index: {}]
  %s6 = inlined_call_operand.vmem [shape: f32[4,32,9], index: 6, kind: input, shape index: {}]
  %s7 = inlined_call_operand.vmem [shape: f32[4,32,1], index: 7, kind: input, shape index: {}]
  %s8 = inlined_call_operand.vmem [shape: f32[4,32,1], index: 8, kind: input, shape index: {}]
  %s9 = inlined_call_operand.vmem [shape: f32[4,32,1], index: 9, kind: input, shape index: {}]
  %s10 = inlined_call_operand.vmem [shape: f32[4,32,32], index: 10, kind: input, shape index: {}]
  %s11 = inlined_call_operand.vmem [shape: f32[4,32,1], index: 11, kind: input, shape index: {}]
  %s12 = inlined_call_operand.vmem [shape: f32[4,32,1], index: 12, kind: input, shape index: {}]
  %s13 = inlined_call_operand.vmem [shape: f32[4,32,1], index: 13, kind: input, shape index: {}]
  %s14 = inlined_call_operand.vmem [shape: f32[4,10,32], index: 14, kind: input, shape index: {}]
  %s15 = inlined_call_operand.vmem [shape: f32[4,10,1], index: 15, kind: input, shape index: {}]
  %s16 = inlined_call_operand.vmem [shape: f32[10,1], index: 16, kind: input, shape index: {}]
  %s17 = inlined_call_operand.vmem [shape: f32[128,2], index: 17, kind: input, shape index: {}]
  %s18 = inlined_call_operand.vmem [shape: f32[1,10,2], index: 18, kind: output, shape index: {}]
  %s19 = sld [smem:[#allocation0]]
  $region82: #{bayes_convmixer2_forward.1} parent=0
    _
  %s21 = ssub.s32 1, %s19
  %s22 = scalar_select 0, %s21, %s19
  // Predicated region
  $region2: #{bayes_convmixer2_forward.1} parent=0 // pred_check
    _
  $region3: #{bayes_convmixer2_forward.1} parent=0 // pred_check_branch
    %24 = sbr.rel (0) target = $region5
  $region4: #{bayes_convmixer2_forward.1} parent=0 // pred_region
    _
  $region5: #{bayes_convmixer2_forward.1} parent=0 // pred_fallthru
    _
  // Predicated region
  $region6: #{bayes_convmixer2_forward.1} parent=0 // pred_check
    _
  $region7: #{bayes_convmixer2_forward.1} parent=0 // pred_check_branch
    %26 = sbr.rel (0) target = $region9
  $region8: #{bayes_convmixer2_forward.1} parent=0 // pred_region
    _
  $region9: #{bayes_convmixer2_forward.1} parent=0 // pred_fallthru
    _
  // Predicated region
  $region10: #{bayes_convmixer2_forward.1} parent=0 // pred_check
    _
  $region11: #{bayes_convmixer2_forward.1} parent=0 // pred_check_branch
    %28 = sbr.rel (0) target = $region13
  $region12: #{bayes_convmixer2_forward.1} parent=0 // pred_region
    _
  $region13: #{bayes_convmixer2_forward.1} parent=0 // pred_fallthru
    _
  // Predicated region
  $region14: #{bayes_convmixer2_forward.1} parent=0 // pred_check
    _
  $region15: #{bayes_convmixer2_forward.1} parent=0 // pred_check_branch
    %30 = sbr.rel (0) target = $region17
  $region16: #{bayes_convmixer2_forward.1} parent=0 // pred_region
    _
  $region17: #{bayes_convmixer2_forward.1} parent=0 // pred_fallthru
    _
  // Predicated region
  $region18: #{bayes_convmixer2_forward.1} parent=0 // pred_check
    _
  $region19: #{bayes_convmixer2_forward.1} parent=0 // pred_check_branch
    %32 = sbr.rel (0) target = $region21
  $region20: #{bayes_convmixer2_forward.1} parent=0 // pred_region
    _
  $region21: #{bayes_convmixer2_forward.1} parent=0 // pred_fallthru
    _
  // Predicated region
  $region22: #{bayes_convmixer2_forward.1} parent=0 // pred_check
    _
  $region23: #{bayes_convmixer2_forward.1} parent=0 // pred_check_branch
    %34 = sbr.rel (0) target = $region25
  $region24: #{bayes_convmixer2_forward.1} parent=0 // pred_region
    _
  $region25: #{bayes_convmixer2_forward.1} parent=0 // pred_fallthru
    _
  // Predicated region
  $region26: #{bayes_convmixer2_forward.1} parent=0 // pred_check
    _
  $region27: #{bayes_convmixer2_forward.1} parent=0 // pred_check_branch
    %36 = sbr.rel (0) target = $region29
  $region28: #{bayes_convmixer2_forward.1} parent=0 // pred_region
    _
  $region29: #{bayes_convmixer2_forward.1} parent=0 // pred_fallthru
    _
  // Predicated region
  $region30: #{bayes_convmixer2_forward.1} parent=0 // pred_check
    _
  $region31: #{bayes_convmixer2_forward.1} parent=0 // pred_check_branch
    %38 = sbr.rel (0) target = $region33
  $region32: #{bayes_convmixer2_forward.1} parent=0 // pred_region
    _
  $region33: #{bayes_convmixer2_forward.1} parent=0 // pred_fallthru
    _
  // Predicated region
  $region34: #{bayes_convmixer2_forward.1} parent=0 // pred_check
    _
  $region35: #{bayes_convmixer2_forward.1} parent=0 // pred_check_branch
    %40 = sbr.rel (0) target = $region37
  $region36: #{bayes_convmixer2_forward.1} parent=0 // pred_region
    _
  $region37: #{bayes_convmixer2_forward.1} parent=0 // pred_fallthru
    _
  // Predicated region
  $region38: #{bayes_convmixer2_forward.1} parent=0 // pred_check
    _
  $region39: #{bayes_convmixer2_forward.1} parent=0 // pred_check_branch
    %42 = sbr.rel (0) target = $region41
  $region40: #{bayes_convmixer2_forward.1} parent=0 // pred_region
    _
  $region41: #{bayes_convmixer2_forward.1} parent=0 // pred_fallthru
    _
  // Predicated region
  $region42: #{bayes_convmixer2_forward.1} parent=0 // pred_check
    _
  $region43: #{bayes_convmixer2_forward.1} parent=0 // pred_check_branch
    %44 = sbr.rel (0) target = $region45
  $region44: #{bayes_convmixer2_forward.1} parent=0 // pred_region
    _
  $region45: #{bayes_convmixer2_forward.1} parent=0 // pred_fallthru
    _
  // Predicated region
  $region46: #{bayes_convmixer2_forward.1} parent=0 // pred_check
    _
  $region47: #{bayes_convmixer2_forward.1} parent=0 // pred_check_branch
    %46 = sbr.rel (0) target = $region49
  $region48: #{bayes_convmixer2_forward.1} parent=0 // pred_region
    _
  $region49: #{bayes_convmixer2_forward.1} parent=0 // pred_fallthru
    _
  // Predicated region
  $region50: #{bayes_convmixer2_forward.1} parent=0 // pred_check
    _
  $region51: #{bayes_convmixer2_forward.1} parent=0 // pred_check_branch
    %48 = sbr.rel (0) target = $region53
  $region52: #{bayes_convmixer2_forward.1} parent=0 // pred_region
    _
  $region53: #{bayes_convmixer2_forward.1} parent=0 // pred_fallthru
    _
  // Predicated region
  $region54: #{bayes_convmixer2_forward.1} parent=0 // pred_check
    _
  $region55: #{bayes_convmixer2_forward.1} parent=0 // pred_check_branch
    %50 = sbr.rel (0) target = $region57
  $region56: #{bayes_convmixer2_forward.1} parent=0 // pred_region
    _
  $region57: #{bayes_convmixer2_forward.1} parent=0 // pred_fallthru
    _
  // Predicated region
  $region58: #{bayes_convmixer2_forward.1} parent=0 // pred_check
    _
  $region59: #{bayes_convmixer2_forward.1} parent=0 // pred_check_branch
    %52 = sbr.rel (0) target = $region61
  $region60: #{bayes_convmixer2_forward.1} parent=0 // pred_region
    _
  $region61: #{bayes_convmixer2_forward.1} parent=0 // pred_fallthru
    _
  // Predicated region
  $region62: #{bayes_convmixer2_forward.1} parent=0 // pred_check
    _
  $region63: #{bayes_convmixer2_forward.1} parent=0 // pred_check_branch
    %54 = sbr.rel (0) target = $region65
  $region64: #{bayes_convmixer2_forward.1} parent=0 // pred_region
    _
  $region65: #{bayes_convmixer2_forward.1} parent=0 // pred_fallthru
    _
  // Predicated region
  $region66: #{bayes_convmixer2_forward.1} parent=0 // pred_check
    _
  $region67: #{bayes_convmixer2_forward.1} parent=0 // pred_check_branch
    %56 = sbr.rel (0) target = $region69
  $region68: #{bayes_convmixer2_forward.1} parent=0 // pred_region
    _
  $region69: #{bayes_convmixer2_forward.1} parent=0 // pred_fallthru
    _
  // Predicated region
  $region70: #{bayes_convmixer2_forward.1} parent=0 // pred_check
    _
  $region71: #{bayes_convmixer2_forward.1} parent=0 // pred_check_branch
    %58 = sbr.rel (0) target = $region73
  $region72: #{bayes_convmixer2_forward.1} parent=0 // pred_region
    _
  $region73: #{bayes_convmixer2_forward.1} parent=0 // pred_fallthru
    _
  %v59 = vld [vmem:[%s1] sm:$0xff]
  %v60 = vld [vmem:[%s1 + $0x8] sm:$0xff]
  %v61 = vld [vmem:[%s1 + $0x10] sm:$0xff]
  %v62 = vld [vmem:[%s1 + $0x18] sm:$0xff]
  %v63 = vld [vmem:[%s0] sm:$0xff]
  %v64 = vld [vmem:[%s0 + $0x8] sm:$0xf]
  %v65 = vld [vmem:[%s2] sm:$0xff]
  %v66 = vld [vmem:[%s2 + $0x8] sm:$0xff]
  %v67 = vld [vmem:[%s2 + $0x10] sm:$0xff]
  %v68 = vld [vmem:[%s2 + $0x18] sm:$0xff]
  %70 = vset.pattern.permute.xlu0 0
  %71 = vperm.xlu0 %70, %v65
  %v72 = vpop.permute.xlu0 %71
  %75 = vset.pattern.permute.xlu0 0
  %76 = vperm.xlu0 %75, %v66
  %v77 = vpop.permute.xlu0 %76
  %80 = vset.pattern.permute.xlu0 0
  %81 = vperm.xlu0 %80, %v67
  %v82 = vpop.permute.xlu0 %81
  %85 = vset.pattern.permute.xlu0 0
  %86 = vperm.xlu0 %85, %v68
  %v87 = vpop.permute.xlu0 %86
  %vm89 = vcmask 97280
  %v91 = vsel %vm89, %v59, 0
  %v94 = vsel %vm89, %v60, 0
  %v97 = vsel %vm89, %v61, 0
  %v100 = vsel %vm89, %v62, 0
  %vm102 = vcmask 1043456
  %v104 = vsel %vm102, %v64, 0
  %106 = vmatpush.msra.mxu0 0.0
  %107 = vmatpush.msra.mxu0 0.0
  %108 = vmatpush.msra.mxu0 0.0
  %109 = vmatpush.msra.mxu0 0.0
  %110 = vmatpush.msra.mxu0 0.0
  %111 = vmatpush.msra.mxu0 0.0
  %112 = vmatpush.msra.mxu0 0.0
  %113 = vmatpush.msra.mxu0 0.0
  %114 = vmatpush.msra.mxu0 0.0
  %115 = vmatpush.msra.mxu0 0.0
  %116 = vmatpush.msra.mxu0 0.0
  %117 = vmatpush.msra.mxu0 0.0
  %118 = vmatpush.msra.mxu0 0.0
  %119 = vmatpush.msra.mxu0 0.0
  %120 = vmatpush.msra.mxu0 %v104
  %121 = vmatpush.msra.mxu0 %v63
  %122 = vmatmul.f32.gmra.mxu0 %v91
  %v123 = vpop.f32.mrf.mxu0
  %v124 = vadd.f32 %v72, %v123
  %125 = vmatmul.f32.gmra.mxu0 %v94
  %v126 = vpop.f32.mrf.mxu0
  %v127 = vadd.f32 %v77, %v126
  %128 = vmatmul.f32.gmra.mxu0 %v97
  %v129 = vpop.f32.mrf.mxu0
  %v130 = vadd.f32 %v82, %v129
  %131 = vmatmul.f32.gmra.mxu0 %v100
  %v132 = vpop.f32.mrf.mxu0
  %v133 = vadd.f32 %v87, %v132
  %134 = vdwg.mxu0
  %v135 = vmul.f32 %v124, 0.5
  %v136 = vmul.f32 %v127, 0.5
  %v137 = vmul.f32 %v130, 0.5
  %v138 = vmul.f32 %v133, 0.5
  %v139 = vmul.f32 %v124, 0.70710677
  %v140 = vmul.f32 %v127, 0.70710677
  %v141 = vmul.f32 %v130, 0.70710677
  %v142 = vmul.f32 %v133, 0.70710677
  %v143 = vmul.f32 %v139, %v139
  %v144 = vmin.f32 16.0, %v143
  %v145 = vmul.f32 %v144, 2.1237322e-06
  %v146 = vadd.f32 %v145, 0.00028619796
  %v147 = vmul.f32 %v144, %v146
  %v148 = vadd.f32 %v147, 0.0036580483
  %v149 = vmul.f32 %v144, %v148
  %v150 = vadd.f32 %v149, 0.05243302
  %v151 = vmul.f32 %v144, %v150
  %v152 = vadd.f32 %v151, 0.18741608
  %v153 = vmul.f32 %v144, %v152
  %v154 = vadd.f32 %v153, 1.1283791
  %v155 = vmul.f32 %v139, %v154
  %v156 = vmul.f32 %v144, 3.8918573e-05
  %v157 = vadd.f32 %v156, 0.001143296
  %v158 = vmul.f32 %v144, %v157
  %v159 = vadd.f32 %v158, 0.014752088
  %v160 = vmul.f32 %v144, %v159
  %v161 = vadd.f32 %v160, 0.112945676
  %v162 = vmul.f32 %v144, %v161
  %v163 = vadd.f32 %v162, 0.4994258
  %v164 = vmul.f32 %v144, %v163
  %v165 = vadd.f32 %v164, 1.0
  %v166 = vrcp.pop %v165
  %v167 = vmul.f32 %v165, %v166
  %v168 = vsub.f32 1.0, %v167
  %v169 = vmul.f32 %v166, %v168
  %v170 = vadd.f32 %v166, %v169
  %vm171 = vweird.f32 %v165
  %vm172 = vweird.f32 %v166
  %vm173 = vmor %vm171, %vm172
  %v174 = vsel %vm173, %v166, %v170
  %v175 = vand.u32 2147483647, %v165
  %vm176 = vcmp.eq.f32.partialorder %v175, 8.507059e+37
  %v177 = vand.u32 %v165, 2147483648
  %v178 = vor.u32 1.1754944e-38, %v177
  %v179 = vsel %vm176, %v178, %v174
  %v180 = vmul.f32 %v155, %v179
  %v181 = vmin.f32 %v180, 1.0
  %v182 = vmax.f32 %v181, -1.0
  %v183 = vmul.f32 %v140, %v140
  %v184 = vmin.f32 16.0, %v183
  %v185 = vmul.f32 %v184, 2.1237322e-06
  %v186 = vadd.f32 %v185, 0.00028619796
  %v187 = vmul.f32 %v184, %v186
  %v188 = vadd.f32 %v187, 0.0036580483
  %v189 = vmul.f32 %v184, %v188
  %v190 = vadd.f32 %v189, 0.05243302
  %v191 = vmul.f32 %v184, %v190
  %v192 = vadd.f32 %v191, 0.18741608
  %v193 = vmul.f32 %v184, %v192
  %v194 = vadd.f32 %v193, 1.1283791
  %v195 = vmul.f32 %v140, %v194
  %v196 = vmul.f32 %v184, 3.8918573e-05
  %v197 = vadd.f32 %v196, 0.001143296
  %v198 = vmul.f32 %v184, %v197
  %v199 = vadd.f32 %v198, 0.014752088
  %v200 = vmul.f32 %v184, %v199
  %v201 = vadd.f32 %v200, 0.112945676
  %v202 = vmul.f32 %v184, %v201
  %v203 = vadd.f32 %v202, 0.4994258
  %v204 = vmul.f32 %v184, %v203
  %v205 = vadd.f32 %v204, 1.0
  %v206 = vrcp.pop %v205
  %v207 = vmul.f32 %v205, %v206
  %v208 = vsub.f32 1.0, %v207
  %v209 = vmul.f32 %v206, %v208
  %v210 = vadd.f32 %v206, %v209
  %vm211 = vweird.f32 %v205
  %vm212 = vweird.f32 %v206
  %vm213 = vmor %vm211, %vm212
  %v214 = vsel %vm213, %v206, %v210
  %v215 = vand.u32 2147483647, %v205
  %vm216 = vcmp.eq.f32.partialorder %v215, 8.507059e+37
  %v217 = vand.u32 %v205, 2147483648
  %v218 = vor.u32 1.1754944e-38, %v217
  %v219 = vsel %vm216, %v218, %v214
  %v220 = vmul.f32 %v195, %v219
  %v221 = vmin.f32 %v220, 1.0
  %v222 = vmax.f32 %v221, -1.0
  %v223 = vmul.f32 %v141, %v141
  %v224 = vmin.f32 16.0, %v223
  %v225 = vmul.f32 %v224, 2.1237322e-06
  %v226 = vadd.f32 %v225, 0.00028619796
  %v227 = vmul.f32 %v224, %v226
  %v228 = vadd.f32 %v227, 0.0036580483
  %v229 = vmul.f32 %v224, %v228
  %v230 = vadd.f32 %v229, 0.05243302
  %v231 = vmul.f32 %v224, %v230
  %v232 = vadd.f32 %v231, 0.18741608
  %v233 = vmul.f32 %v224, %v232
  %v234 = vadd.f32 %v233, 1.1283791
  %v235 = vmul.f32 %v141, %v234
  %v236 = vmul.f32 %v224, 3.8918573e-05
  %v237 = vadd.f32 %v236, 0.001143296
  %v238 = vmul.f32 %v224, %v237
  %v239 = vadd.f32 %v238, 0.014752088
  %v240 = vmul.f32 %v224, %v239
  %v241 = vadd.f32 %v240, 0.112945676
  %v242 = vmul.f32 %v224, %v241
  %v243 = vadd.f32 %v242, 0.4994258
  %v244 = vmul.f32 %v224, %v243
  %v245 = vadd.f32 %v244, 1.0
  %v246 = vrcp.pop %v245
  %v247 = vmul.f32 %v245, %v246
  %v248 = vsub.f32 1.0, %v247
  %v249 = vmul.f32 %v246, %v248
  %v250 = vadd.f32 %v246, %v249
  %vm251 = vweird.f32 %v245
  %vm252 = vweird.f32 %v246
  %vm253 = vmor %vm251, %vm252
  %v254 = vsel %vm253, %v246, %v250
  %v255 = vand.u32 2147483647, %v245
  %vm256 = vcmp.eq.f32.partialorder %v255, 8.507059e+37
  %v257 = vand.u32 %v245, 2147483648
  %v258 = vor.u32 1.1754944e-38, %v257
  %v259 = vsel %vm256, %v258, %v254
  %v260 = vmul.f32 %v235, %v259
  %v261 = vmin.f32 %v260, 1.0
  %v262 = vmax.f32 %v261, -1.0
  %v263 = vmul.f32 %v142, %v142
  %v264 = vmin.f32 16.0, %v263
  %v265 = vmul.f32 %v264, 2.1237322e-06
  %v266 = vadd.f32 %v265, 0.00028619796
  %v267 = vmul.f32 %v264, %v266
  %v268 = vadd.f32 %v267, 0.0036580483
  %v269 = vmul.f32 %v264, %v268
  %v270 = vadd.f32 %v269, 0.05243302
  %v271 = vmul.f32 %v264, %v270
  %v272 = vadd.f32 %v271, 0.18741608
  %v273 = vmul.f32 %v264, %v272
  %v274 = vadd.f32 %v273, 1.1283791
  %v275 = vmul.f32 %v142, %v274
  %v276 = vmul.f32 %v264, 3.8918573e-05
  %v277 = vadd.f32 %v276, 0.001143296
  %v278 = vmul.f32 %v264, %v277
  %v279 = vadd.f32 %v278, 0.014752088
  %v280 = vmul.f32 %v264, %v279
  %v281 = vadd.f32 %v280, 0.112945676
  %v282 = vmul.f32 %v264, %v281
  %v283 = vadd.f32 %v282, 0.4994258
  %v284 = vmul.f32 %v264, %v283
  %v285 = vadd.f32 %v284, 1.0
  %v286 = vrcp.pop %v285
  %v287 = vmul.f32 %v285, %v286
  %v288 = vsub.f32 1.0, %v287
  %v289 = vmul.f32 %v286, %v288
  %v290 = vadd.f32 %v286, %v289
  %vm291 = vweird.f32 %v285
  %vm292 = vweird.f32 %v286
  %vm293 = vmor %vm291, %vm292
  %v294 = vsel %vm293, %v286, %v290
  %v295 = vand.u32 2147483647, %v285
  %vm296 = vcmp.eq.f32.partialorder %v295, 8.507059e+37
  %v297 = vand.u32 %v285, 2147483648
  %v298 = vor.u32 1.1754944e-38, %v297
  %v299 = vsel %vm296, %v298, %v294
  %v300 = vmul.f32 %v275, %v299
  %v301 = vmin.f32 %v300, 1.0
  %v302 = vmax.f32 %v301, -1.0
  %v303 = vadd.f32 %v182, 1.0
  %v304 = vadd.f32 %v222, 1.0
  %v305 = vadd.f32 %v262, 1.0
  %v306 = vadd.f32 %v302, 1.0
  %v307 = vmul.f32 %v135, %v303
  %v308 = vmul.f32 %v136, %v304
  %v309 = vmul.f32 %v137, %v305
  %v310 = vmul.f32 %v138, %v306
  %v311 = vld [vmem:[%s3] sm:$0xff]
  %v312 = vld [vmem:[%s3 + $0x8] sm:$0xff]
  %v313 = vld [vmem:[%s3 + $0x10] sm:$0xff]
  %v314 = vld [vmem:[%s3 + $0x18] sm:$0xff]
  %316 = vset.pattern.permute.xlu0 0
  %317 = vperm.xlu0 %316, %v311
  %v318 = vpop.permute.xlu0 %317
  %321 = vset.pattern.permute.xlu0 0
  %322 = vperm.xlu0 %321, %v312
  %v323 = vpop.permute.xlu0 %322
  %326 = vset.pattern.permute.xlu0 0
  %327 = vperm.xlu0 %326, %v313
  %v328 = vpop.permute.xlu0 %327
  %331 = vset.pattern.permute.xlu0 0
  %332 = vperm.xlu0 %331, %v314
  %v333 = vpop.permute.xlu0 %332
  %v335 = vmul.f32 %v307, %v318
  %v336 = vmul.f32 %v308, %v323
  %v337 = vmul.f32 %v309, %v328
  %v338 = vmul.f32 %v310, %v333
  %v339 = vld [vmem:[%s4] sm:$0xff]
  %v340 = vld [vmem:[%s4 + $0x8] sm:$0xff]
  %v341 = vld [vmem:[%s4 + $0x10] sm:$0xff]
  %v342 = vld [vmem:[%s4 + $0x18] sm:$0xff]
  %344 = vset.pattern.permute.xlu0 0
  %345 = vperm.xlu0 %344, %v339
  %v346 = vpop.permute.xlu0 %345
  %349 = vset.pattern.permute.xlu0 0
  %350 = vperm.xlu0 %349, %v340
  %v351 = vpop.permute.xlu0 %350
  %354 = vset.pattern.permute.xlu0 0
  %355 = vperm.xlu0 %354, %v341
  %v356 = vpop.permute.xlu0 %355
  %359 = vset.pattern.permute.xlu0 0
  %360 = vperm.xlu0 %359, %v342
  %v361 = vpop.permute.xlu0 %360
  %v363 = vadd.f32 %v335, %v346
  %v364 = vadd.f32 %v336, %v351
  %v365 = vadd.f32 %v337, %v356
  %v366 = vadd.f32 %v338, %v361
  %v367 = vld [vmem:[%s16] sm:$0xff]
  %v368 = vld [vmem:[%s16 + $0x8] sm:$0x3]
  %v369 = vld [vmem:[%s17] sm:$0xff]
  %v370 = vld [vmem:[%s17 + $0x8] sm:$0xff]
  %v371 = vld [vmem:[%s17 + $0x10] sm:$0xff]
  %v372 = vld [vmem:[%s17 + $0x18] sm:$0xff]
  %v373 = vld [vmem:[%s17 + $0x20] sm:$0xff]
  %v374 = vld [vmem:[%s17 + $0x28] sm:$0xff]
  %v375 = vld [vmem:[%s17 + $0x30] sm:$0xff]
  %v376 = vld [vmem:[%s17 + $0x38] sm:$0xff]
  %v377 = vld [vmem:[%s17 + $0x40] sm:$0xff]
  %v378 = vld [vmem:[%s17 + $0x48] sm:$0xff]
  %v379 = vld [vmem:[%s17 + $0x50] sm:$0xff]
  %v380 = vld [vmem:[%s17 + $0x58] sm:$0xff]
  %v381 = vld [vmem:[%s17 + $0x60] sm:$0xff]
  %v382 = vld [vmem:[%s17 + $0x68] sm:$0xff]
  %v383 = vld [vmem:[%s17 + $0x70] sm:$0xff]
  %v384 = vld [vmem:[%s17 + $0x78] sm:$0xff]
  %v385 = vld [vmem:[%s6] sm:$0xff]
  %v386 = vld [vmem:[%s6 + $0x8] sm:$0xff]
  %v387 = vld [vmem:[%s6 + $0x10] sm:$0xff]
  %v388 = vld [vmem:[%s6 + $0x18] sm:$0xff]
  %389 = vrot.lane.b32.xlu0 %v363, 9
  %v390 = vpop.permute.xlu0 %389
  %391 = vrot.lane.b32.xlu0 %v364, 9
  %v392 = vpop.permute.xlu0 %391
  %393 = vrot.lane.b32.xlu0 %v365, 9
  %v394 = vpop.permute.xlu0 %393
  %395 = vrot.lane.b32.xlu0 %v366, 9
  %v396 = vpop.permute.xlu0 %395
  %v397 = vld [vmem:[%s5] sm:$0x1]
  %v399 = vperm.slane %v397, 0
  %v401 = vmul.f32 %v390, %v399
  %v402 = vmul.f32 %v392, %v399
  %v403 = vmul.f32 %v394, %v399
  %v404 = vmul.f32 %v396, %v399
  %406 = vset.pattern.permute.xlu0 0
  %407 = vperm.xlu0 %406, %v385
  %v408 = vpop.permute.xlu0 %407
  %411 = vset.pattern.permute.xlu0 0
  %412 = vperm.xlu0 %411, %v386
  %v413 = vpop.permute.xlu0 %412
  %416 = vset.pattern.permute.xlu0 0
  %417 = vperm.xlu0 %416, %v387
  %v418 = vpop.permute.xlu0 %417
  %421 = vset.pattern.permute.xlu0 0
  %422 = vperm.xlu0 %421, %v388
  %v423 = vpop.permute.xlu0 %422
  %v425 = vmul.f32 %v401, %v408
  %v426 = vmul.f32 %v402, %v413
  %v427 = vmul.f32 %v403, %v418
  %v428 = vmul.f32 %v404, %v423
  %v429 = vadd.f32 %v425, 0.0
  %v430 = vadd.f32 %v426, 0.0
  %v431 = vadd.f32 %v427, 0.0
  %v432 = vadd.f32 %v428, 0.0
  %433 = vrot.lane.b32.xlu0 %v363, 8
  %v434 = vpop.permute.xlu0 %433
  %435 = vrot.lane.b32.xlu0 %v364, 8
  %v436 = vpop.permute.xlu0 %435
  %437 = vrot.lane.b32.xlu0 %v365, 8
  %v438 = vpop.permute.xlu0 %437
  %439 = vrot.lane.b32.xlu0 %v366, 8
  %v440 = vpop.permute.xlu0 %439
  %s441 = scalar_lea.vmem %s5, 1
  %v442 = vld [vmem:[%s441] sm:$0x1]
  %v444 = vperm.slane %v442, 0
  %v446 = vmul.f32 %v434, %v444
  %v447 = vmul.f32 %v436, %v444
  %v448 = vmul.f32 %v438, %v444
  %v449 = vmul.f32 %v440, %v444
  %450 = vset.pattern.permute.xlu0 1
  %451 = vperm.xlu0 %450, %v385
  %v452 = vpop.permute.xlu0 %451
  %454 = vset.pattern.permute.xlu0 1
  %455 = vperm.xlu0 %454, %v386
  %v456 = vpop.permute.xlu0 %455
  %458 = vset.pattern.permute.xlu0 1
  %459 = vperm.xlu0 %458, %v387
  %v460 = vpop.permute.xlu0 %459
  %462 = vset.pattern.permute.xlu0 1
  %463 = vperm.xlu0 %462, %v388
  %v464 = vpop.permute.xlu0 %463
  %v466 = vmul.f32 %v446, %v452
  %v467 = vmul.f32 %v447, %v456
  %v468 = vmul.f32 %v448, %v460
  %v469 = vmul.f32 %v449, %v464
  %v470 = vadd.f32 %v429, %v466
  %v471 = vadd.f32 %v430, %v467
  %v472 = vadd.f32 %v431, %v468
  %v473 = vadd.f32 %v432, %v469
  %474 = vrot.lane.b32.xlu0 %v363, 7
  %v475 = vpop.permute.xlu0 %474
  %476 = vrot.lane.b32.xlu0 %v364, 7
  %v477 = vpop.permute.xlu0 %476
  %478 = vrot.lane.b32.xlu0 %v365, 7
  %v479 = vpop.permute.xlu0 %478
  %480 = vrot.lane.b32.xlu0 %v366, 7
  %v481 = vpop.permute.xlu0 %480
  %s482 = scalar_lea.vmem %s5, 2
  %v483 = vld [vmem:[%s482] sm:$0x1]
  %v485 = vperm.slane %v483, 0
  %v487 = vmul.f32 %v475, %v485
  %v488 = vmul.f32 %v477, %v485
  %v489 = vmul.f32 %v479, %v485
  %v490 = vmul.f32 %v481, %v485
  %491 = vset.pattern.permute.xlu0 2
  %492 = vperm.xlu0 %491, %v385
  %v493 = vpop.permute.xlu0 %492
  %495 = vset.pattern.permute.xlu0 2
  %496 = vperm.xlu0 %495, %v386
  %v497 = vpop.permute.xlu0 %496
  %499 = vset.pattern.permute.xlu0 2
  %500 = vperm.xlu0 %499, %v387
  %v501 = vpop.permute.xlu0 %500
  %503 = vset.pattern.permute.xlu0 2
  %504 = vperm.xlu0 %503, %v388
  %v505 = vpop.permute.xlu0 %504
  %v507 = vmul.f32 %v487, %v493
  %v508 = vmul.f32 %v488, %v497
  %v509 = vmul.f32 %v489, %v501
  %v510 = vmul.f32 %v490, %v505
  %v511 = vadd.f32 %v470, %v507
  %v512 = vadd.f32 %v471, %v508
  %v513 = vadd.f32 %v472, %v509
  %v514 = vadd.f32 %v473, %v510
  %515 = vrot.lane.b32.xlu0 %v363, 1
  %v516 = vpop.permute.xlu0 %515
  %517 = vrot.lane.b32.xlu0 %v364, 1
  %v518 = vpop.permute.xlu0 %517
  %519 = vrot.lane.b32.xlu0 %v365, 1
  %v520 = vpop.permute.xlu0 %519
  %521 = vrot.lane.b32.xlu0 %v366, 1
  %v522 = vpop.permute.xlu0 %521
  %s523 = scalar_lea.vmem %s5, 3
  %v524 = vld [vmem:[%s523] sm:$0x1]
  %v526 = vperm.slane %v524, 0
  %v528 = vmul.f32 %v516, %v526
  %v529 = vmul.f32 %v518, %v526
  %v530 = vmul.f32 %v520, %v526
  %v531 = vmul.f32 %v522, %v526
  %532 = vset.pattern.permute.xlu0 3
  %533 = vperm.xlu0 %532, %v385
  %v534 = vpop.permute.xlu0 %533
  %536 = vset.pattern.permute.xlu0 3
  %537 = vperm.xlu0 %536, %v386
  %v538 = vpop.permute.xlu0 %537
  %540 = vset.pattern.permute.xlu0 3
  %541 = vperm.xlu0 %540, %v387
  %v542 = vpop.permute.xlu0 %541
  %544 = vset.pattern.permute.xlu0 3
  %545 = vperm.xlu0 %544, %v388
  %v546 = vpop.permute.xlu0 %545
  %v548 = vmul.f32 %v528, %v534
  %v549 = vmul.f32 %v529, %v538
  %v550 = vmul.f32 %v530, %v542
  %v551 = vmul.f32 %v531, %v546
  %v552 = vadd.f32 %v511, %v548
  %v553 = vadd.f32 %v512, %v549
  %v554 = vadd.f32 %v513, %v550
  %v555 = vadd.f32 %v514, %v551
  %s556 = scalar_lea.vmem %s5, 4
  %v557 = vld [vmem:[%s556] sm:$0x1]
  %v559 = vperm.slane %v557, 0
  %v561 = vmul.f32 %v363, %v559
  %v562 = vmul.f32 %v364, %v559
  %v563 = vmul.f32 %v365, %v559
  %v564 = vmul.f32 %v366, %v559
  %565 = vset.pattern.permute.xlu0 4
  %566 = vperm.xlu0 %565, %v385
  %v567 = vpop.permute.xlu0 %566
  %569 = vset.pattern.permute.xlu0 4
  %570 = vperm.xlu0 %569, %v386
  %v571 = vpop.permute.xlu0 %570
  %573 = vset.pattern.permute.xlu0 4
  %574 = vperm.xlu0 %573, %v387
  %v575 = vpop.permute.xlu0 %574
  %577 = vset.pattern.permute.xlu0 4
  %578 = vperm.xlu0 %577, %v388
  %v579 = vpop.permute.xlu0 %578
  %v581 = vmul.f32 %v561, %v567
  %v582 = vmul.f32 %v562, %v571
  %v583 = vmul.f32 %v563, %v575
  %v584 = vmul.f32 %v564, %v579
  %v585 = vadd.f32 %v552, %v581
  %v586 = vadd.f32 %v553, %v582
  %v587 = vadd.f32 %v554, %v583
  %v588 = vadd.f32 %v555, %v584
  %589 = vrot.lane.b32.xlu0 %v363, 127
  %v590 = vpop.permute.xlu0 %589
  %591 = vrot.lane.b32.xlu0 %v364, 127
  %v592 = vpop.permute.xlu0 %591
  %593 = vrot.lane.b32.xlu0 %v365, 127
  %v594 = vpop.permute.xlu0 %593
  %595 = vrot.lane.b32.xlu0 %v366, 127
  %v596 = vpop.permute.xlu0 %595
  %s597 = scalar_lea.vmem %s5, 5
  %v598 = vld [vmem:[%s597] sm:$0x1]
  %v600 = vperm.slane %v598, 0
  %v602 = vmul.f32 %v590, %v600
  %v603 = vmul.f32 %v592, %v600
  %v604 = vmul.f32 %v594, %v600
  %v605 = vmul.f32 %v596, %v600
  %606 = vset.pattern.permute.xlu0 5
  %607 = vperm.xlu0 %606, %v385
  %v608 = vpop.permute.xlu0 %607
  %610 = vset.pattern.permute.xlu0 5
  %611 = vperm.xlu0 %610, %v386
  %v612 = vpop.permute.xlu0 %611
  %614 = vset.pattern.permute.xlu0 5
  %615 = vperm.xlu0 %614, %v387
  %v616 = vpop.permute.xlu0 %615
  %618 = vset.pattern.permute.xlu0 5
  %619 = vperm.xlu0 %618, %v388
  %v620 = vpop.permute.xlu0 %619
  %v622 = vmul.f32 %v602, %v608
  %v623 = vmul.f32 %v603, %v612
  %v624 = vmul.f32 %v604, %v616
  %v625 = vmul.f32 %v605, %v620
  %v626 = vadd.f32 %v585, %v622
  %v627 = vadd.f32 %v586, %v623
  %v628 = vadd.f32 %v587, %v624
  %v629 = vadd.f32 %v588, %v625
  %630 = vrot.lane.b32.xlu0 %v363, 121
  %v631 = vpop.permute.xlu0 %630
  %632 = vrot.lane.b32.xlu0 %v364, 121
  %v633 = vpop.permute.xlu0 %632
  %634 = vrot.lane.b32.xlu0 %v365, 121
  %v635 = vpop.permute.xlu0 %634
  %636 = vrot.lane.b32.xlu0 %v366, 121
  %v637 = vpop.permute.xlu0 %636
  %s638 = scalar_lea.vmem %s5, 6
  %v639 = vld [vmem:[%s638] sm:$0x1]
  %v641 = vperm.slane %v639, 0
  %v643 = vmul.f32 %v631, %v641
  %v644 = vmul.f32 %v633, %v641
  %v645 = vmul.f32 %v635, %v641
  %v646 = vmul.f32 %v637, %v641
  %647 = vset.pattern.permute.xlu0 6
  %648 = vperm.xlu0 %647, %v385
  %v649 = vpop.permute.xlu0 %648
  %651 = vset.pattern.permute.xlu0 6
  %652 = vperm.xlu0 %651, %v386
  %v653 = vpop.permute.xlu0 %652
  %655 = vset.pattern.permute.xlu0 6
  %656 = vperm.xlu0 %655, %v387
  %v657 = vpop.permute.xlu0 %656
  %659 = vset.pattern.permute.xlu0 6
  %660 = vperm.xlu0 %659, %v388
  %v661 = vpop.permute.xlu0 %660
  %v663 = vmul.f32 %v643, %v649
  %v664 = vmul.f32 %v644, %v653
  %v665 = vmul.f32 %v645, %v657
  %v666 = vmul.f32 %v646, %v661
  %v667 = vadd.f32 %v626, %v663
  %v668 = vadd.f32 %v627, %v664
  %v669 = vadd.f32 %v628, %v665
  %v670 = vadd.f32 %v629, %v666
  %671 = vrot.lane.b32.xlu0 %v363, 120
  %v672 = vpop.permute.xlu0 %671
  %673 = vrot.lane.b32.xlu0 %v364, 120
  %v674 = vpop.permute.xlu0 %673
  %675 = vrot.lane.b32.xlu0 %v365, 120
  %v676 = vpop.permute.xlu0 %675
  %677 = vrot.lane.b32.xlu0 %v366, 120
  %v678 = vpop.permute.xlu0 %677
  %s679 = scalar_lea.vmem %s5, 7
  %v680 = vld [vmem:[%s679] sm:$0x1]
  %v682 = vperm.slane %v680, 0
  %v684 = vmul.f32 %v672, %v682
  %v685 = vmul.f32 %v674, %v682
  %v686 = vmul.f32 %v676, %v682
  %v687 = vmul.f32 %v678, %v682
  %688 = vset.pattern.permute.xlu0 7
  %689 = vperm.xlu0 %688, %v385
  %v690 = vpop.permute.xlu0 %689
  %692 = vset.pattern.permute.xlu0 7
  %693 = vperm.xlu0 %692, %v386
  %v694 = vpop.permute.xlu0 %693
  %696 = vset.pattern.permute.xlu0 7
  %697 = vperm.xlu0 %696, %v387
  %v698 = vpop.permute.xlu0 %697
  %700 = vset.pattern.permute.xlu0 7
  %701 = vperm.xlu0 %700, %v388
  %v702 = vpop.permute.xlu0 %701
  %v704 = vmul.f32 %v684, %v690
  %v705 = vmul.f32 %v685, %v694
  %v706 = vmul.f32 %v686, %v698
  %v707 = vmul.f32 %v687, %v702
  %v708 = vadd.f32 %v667, %v704
  %v709 = vadd.f32 %v668, %v705
  %v710 = vadd.f32 %v669, %v706
  %v711 = vadd.f32 %v670, %v707
  %712 = vrot.lane.b32.xlu0 %v363, 119
  %v713 = vpop.permute.xlu0 %712
  %714 = vrot.lane.b32.xlu0 %v364, 119
  %v715 = vpop.permute.xlu0 %714
  %716 = vrot.lane.b32.xlu0 %v365, 119
  %v717 = vpop.permute.xlu0 %716
  %718 = vrot.lane.b32.xlu0 %v366, 119
  %v719 = vpop.permute.xlu0 %718
  %s720 = scalar_lea.vmem %s5, 8
  %v721 = vld [vmem:[%s720] sm:$0x1]
  %v723 = vperm.slane %v721, 0
  %v725 = vmul.f32 %v713, %v723
  %v726 = vmul.f32 %v715, %v723
  %v727 = vmul.f32 %v717, %v723
  %v728 = vmul.f32 %v719, %v723
  %729 = vset.pattern.permute.xlu0 8
  %730 = vperm.xlu0 %729, %v385
  %v731 = vpop.permute.xlu0 %730
  %733 = vset.pattern.permute.xlu0 8
  %734 = vperm.xlu0 %733, %v386
  %v735 = vpop.permute.xlu0 %734
  %737 = vset.pattern.permute.xlu0 8
  %738 = vperm.xlu0 %737, %v387
  %v739 = vpop.permute.xlu0 %738
  %741 = vset.pattern.permute.xlu0 8
  %742 = vperm.xlu0 %741, %v388
  %v743 = vpop.permute.xlu0 %742
  %v745 = vmul.f32 %v725, %v731
  %v746 = vmul.f32 %v726, %v735
  %v747 = vmul.f32 %v727, %v739
  %v748 = vmul.f32 %v728, %v743
  %v749 = vadd.f32 %v708, %v745
  %v750 = vadd.f32 %v709, %v746
  %v751 = vadd.f32 %v710, %v747
  %v752 = vadd.f32 %v711, %v748
  %v753 = vld [vmem:[%s7] sm:$0xff]
  %v754 = vld [vmem:[%s7 + $0x8] sm:$0xff]
  %v755 = vld [vmem:[%s7 + $0x10] sm:$0xff]
  %v756 = vld [vmem:[%s7 + $0x18] sm:$0xff]
  %758 = vset.pattern.permute.xlu0 0
  %759 = vperm.xlu0 %758, %v753
  %v760 = vpop.permute.xlu0 %759
  %763 = vset.pattern.permute.xlu0 0
  %764 = vperm.xlu0 %763, %v754
  %v765 = vpop.permute.xlu0 %764
  %768 = vset.pattern.permute.xlu0 0
  %769 = vperm.xlu0 %768, %v755
  %v770 = vpop.permute.xlu0 %769
  %773 = vset.pattern.permute.xlu0 0
  %774 = vperm.xlu0 %773, %v756
  %v775 = vpop.permute.xlu0 %774
  %v777 = vadd.f32 %v749, %v760
  %v778 = vadd.f32 %v750, %v765
  %v779 = vadd.f32 %v751, %v770
  %v780 = vadd.f32 %v752, %v775
  %v781 = vmul.f32 %v777, 0.5
  %v782 = vmul.f32 %v778, 0.5
  %v783 = vmul.f32 %v779, 0.5
  %v784 = vmul.f32 %v780, 0.5
  %v785 = vmul.f32 %v777, 0.70710677
  %v786 = vmul.f32 %v778, 0.70710677
  %v787 = vmul.f32 %v779, 0.70710677
  %v788 = vmul.f32 %v780, 0.70710677
  %v789 = vmul.f32 %v785, %v785
  %v790 = vmin.f32 16.0, %v789
  %v791 = vmul.f32 %v790, 2.1237322e-06
  %v792 = vadd.f32 %v791, 0.00028619796
  %v793 = vmul.f32 %v790, %v792
  %v794 = vadd.f32 %v793, 0.0036580483
  %v795 = vmul.f32 %v790, %v794
  %v796 = vadd.f32 %v795, 0.05243302
  %v797 = vmul.f32 %v790, %v796
  %v798 = vadd.f32 %v797, 0.18741608
  %v799 = vmul.f32 %v790, %v798
  %v800 = vadd.f32 %v799, 1.1283791
  %v801 = vmul.f32 %v785, %v800
  %v802 = vmul.f32 %v790, 3.8918573e-05
  %v803 = vadd.f32 %v802, 0.001143296
  %v804 = vmul.f32 %v790, %v803
  %v805 = vadd.f32 %v804, 0.014752088
  %v806 = vmul.f32 %v790, %v805
  %v807 = vadd.f32 %v806, 0.112945676
  %v808 = vmul.f32 %v790, %v807
  %v809 = vadd.f32 %v808, 0.4994258
  %v810 = vmul.f32 %v790, %v809
  %v811 = vadd.f32 %v810, 1.0
  %v812 = vrcp.pop %v811
  %v813 = vmul.f32 %v811, %v812
  %v814 = vsub.f32 1.0, %v813
  %v815 = vmul.f32 %v812, %v814
  %v816 = vadd.f32 %v812, %v815
  %vm817 = vweird.f32 %v811
  %vm818 = vweird.f32 %v812
  %vm819 = vmor %vm817, %vm818
  %v820 = vsel %vm819, %v812, %v816
  %v821 = vand.u32 2147483647, %v811
  %vm822 = vcmp.eq.f32.partialorder %v821, 8.507059e+37
  %v823 = vand.u32 %v811, 2147483648
  %v824 = vor.u32 1.1754944e-38, %v823
  %v825 = vsel %vm822, %v824, %v820
  %v826 = vmul.f32 %v801, %v825
  %v827 = vmin.f32 %v826, 1.0
  %v828 = vmax.f32 %v827, -1.0
  %v829 = vmul.f32 %v786, %v786
  %v830 = vmin.f32 16.0, %v829
  %v831 = vmul.f32 %v830, 2.1237322e-06
  %v832 = vadd.f32 %v831, 0.00028619796
  %v833 = vmul.f32 %v830, %v832
  %v834 = vadd.f32 %v833, 0.0036580483
  %v835 = vmul.f32 %v830, %v834
  %v836 = vadd.f32 %v835, 0.05243302
  %v837 = vmul.f32 %v830, %v836
  %v838 = vadd.f32 %v837, 0.18741608
  %v839 = vmul.f32 %v830, %v838
  %v840 = vadd.f32 %v839, 1.1283791
  %v841 = vmul.f32 %v786, %v840
  %v842 = vmul.f32 %v830, 3.8918573e-05
  %v843 = vadd.f32 %v842, 0.001143296
  %v844 = vmul.f32 %v830, %v843
  %v845 = vadd.f32 %v844, 0.014752088
  %v846 = vmul.f32 %v830, %v845
  %v847 = vadd.f32 %v846, 0.112945676
  %v848 = vmul.f32 %v830, %v847
  %v849 = vadd.f32 %v848, 0.4994258
  %v850 = vmul.f32 %v830, %v849
  %v851 = vadd.f32 %v850, 1.0
  %v852 = vrcp.pop %v851
  %v853 = vmul.f32 %v851, %v852
  %v854 = vsub.f32 1.0, %v853
  %v855 = vmul.f32 %v852, %v854
  %v856 = vadd.f32 %v852, %v855
  %vm857 = vweird.f32 %v851
  %vm858 = vweird.f32 %v852
  %vm859 = vmor %vm857, %vm858
  %v860 = vsel %vm859, %v852, %v856
  %v861 = vand.u32 2147483647, %v851
  %vm862 = vcmp.eq.f32.partialorder %v861, 8.507059e+37
  %v863 = vand.u32 %v851, 2147483648
  %v864 = vor.u32 1.1754944e-38, %v863
  %v865 = vsel %vm862, %v864, %v860
  %v866 = vmul.f32 %v841, %v865
  %v867 = vmin.f32 %v866, 1.0
  %v868 = vmax.f32 %v867, -1.0
  %v869 = vmul.f32 %v787, %v787
  %v870 = vmin.f32 16.0, %v869
  %v871 = vmul.f32 %v870, 2.1237322e-06
  %v872 = vadd.f32 %v871, 0.00028619796
  %v873 = vmul.f32 %v870, %v872
  %v874 = vadd.f32 %v873, 0.0036580483
  %v875 = vmul.f32 %v870, %v874
  %v876 = vadd.f32 %v875, 0.05243302
  %v877 = vmul.f32 %v870, %v876
  %v878 = vadd.f32 %v877, 0.18741608
  %v879 = vmul.f32 %v870, %v878
  %v880 = vadd.f32 %v879, 1.1283791
  %v881 = vmul.f32 %v787, %v880
  %v882 = vmul.f32 %v870, 3.8918573e-05
  %v883 = vadd.f32 %v882, 0.001143296
  %v884 = vmul.f32 %v870, %v883
  %v885 = vadd.f32 %v884, 0.014752088
  %v886 = vmul.f32 %v870, %v885
  %v887 = vadd.f32 %v886, 0.112945676
  %v888 = vmul.f32 %v870, %v887
  %v889 = vadd.f32 %v888, 0.4994258
  %v890 = vmul.f32 %v870, %v889
  %v891 = vadd.f32 %v890, 1.0
  %v892 = vrcp.pop %v891
  %v893 = vmul.f32 %v891, %v892
  %v894 = vsub.f32 1.0, %v893
  %v895 = vmul.f32 %v892, %v894
  %v896 = vadd.f32 %v892, %v895
  %vm897 = vweird.f32 %v891
  %vm898 = vweird.f32 %v892
  %vm899 = vmor %vm897, %vm898
  %v900 = vsel %vm899, %v892, %v896
  %v901 = vand.u32 2147483647, %v891
  %vm902 = vcmp.eq.f32.partialorder %v901, 8.507059e+37
  %v903 = vand.u32 %v891, 2147483648
  %v904 = vor.u32 1.1754944e-38, %v903
  %v905 = vsel %vm902, %v904, %v900
  %v906 = vmul.f32 %v881, %v905
  %v907 = vmin.f32 %v906, 1.0
  %v908 = vmax.f32 %v907, -1.0
  %v909 = vmul.f32 %v788, %v788
  %v910 = vmin.f32 16.0, %v909
  %v911 = vmul.f32 %v910, 2.1237322e-06
  %v912 = vadd.f32 %v911, 0.00028619796
  %v913 = vmul.f32 %v910, %v912
  %v914 = vadd.f32 %v913, 0.0036580483
  %v915 = vmul.f32 %v910, %v914
  %v916 = vadd.f32 %v915, 0.05243302
  %v917 = vmul.f32 %v910, %v916
  %v918 = vadd.f32 %v917, 0.18741608
  %v919 = vmul.f32 %v910, %v918
  %v920 = vadd.f32 %v919, 1.1283791
  %v921 = vmul.f32 %v788, %v920
  %v922 = vmul.f32 %v910, 3.8918573e-05
  %v923 = vadd.f32 %v922, 0.001143296
  %v924 = vmul.f32 %v910, %v923
  %v925 = vadd.f32 %v924, 0.014752088
  %v926 = vmul.f32 %v910, %v925
  %v927 = vadd.f32 %v926, 0.112945676
  %v928 = vmul.f32 %v910, %v927
  %v929 = vadd.f32 %v928, 0.4994258
  %v930 = vmul.f32 %v910, %v929
  %v931 = vadd.f32 %v930, 1.0
  %v932 = vrcp.pop %v931
  %v933 = vmul.f32 %v931, %v932
  %v934 = vsub.f32 1.0, %v933
  %v935 = vmul.f32 %v932, %v934
  %v936 = vadd.f32 %v932, %v935
  %vm937 = vweird.f32 %v931
  %vm938 = vweird.f32 %v932
  %vm939 = vmor %vm937, %vm938
  %v940 = vsel %vm939, %v932, %v936
  %v941 = vand.u32 2147483647, %v931
  %vm942 = vcmp.eq.f32.partialorder %v941, 8.507059e+37
  %v943 = vand.u32 %v931, 2147483648
  %v944 = vor.u32 1.1754944e-38, %v943
  %v945 = vsel %vm942, %v944, %v940
  %v946 = vmul.f32 %v921, %v945
  %v947 = vmin.f32 %v946, 1.0
  %v948 = vmax.f32 %v947, -1.0
  %v949 = vadd.f32 %v828, 1.0
  %v950 = vadd.f32 %v868, 1.0
  %v951 = vadd.f32 %v908, 1.0
  %v952 = vadd.f32 %v948, 1.0
  %v953 = vmul.f32 %v781, %v949
  %v954 = vmul.f32 %v782, %v950
  %v955 = vmul.f32 %v783, %v951
  %v956 = vmul.f32 %v784, %v952
  %v957 = vld [vmem:[%s8] sm:$0xff]
  %v958 = vld [vmem:[%s8 + $0x8] sm:$0xff]
  %v959 = vld [vmem:[%s8 + $0x10] sm:$0xff]
  %v960 = vld [vmem:[%s8 + $0x18] sm:$0xff]
  %962 = vset.pattern.permute.xlu0 0
  %963 = vperm.xlu0 %962, %v957
  %v964 = vpop.permute.xlu0 %963
  %967 = vset.pattern.permute.xlu0 0
  %968 = vperm.xlu0 %967, %v958
  %v969 = vpop.permute.xlu0 %968
  %972 = vset.pattern.permute.xlu0 0
  %973 = vperm.xlu0 %972, %v959
  %v974 = vpop.permute.xlu0 %973
  %977 = vset.pattern.permute.xlu0 0
  %978 = vperm.xlu0 %977, %v960
  %v979 = vpop.permute.xlu0 %978
  %v981 = vmul.f32 %v953, %v964
  %v982 = vmul.f32 %v954, %v969
  %v983 = vmul.f32 %v955, %v974
  %v984 = vmul.f32 %v956, %v979
  %v985 = vld [vmem:[%s9] sm:$0xff]
  %v986 = vld [vmem:[%s9 + $0x8] sm:$0xff]
  %v987 = vld [vmem:[%s9 + $0x10] sm:$0xff]
  %v988 = vld [vmem:[%s9 + $0x18] sm:$0xff]
  %990 = vset.pattern.permute.xlu0 0
  %991 = vperm.xlu0 %990, %v985
  %v992 = vpop.permute.xlu0 %991
  %995 = vset.pattern.permute.xlu0 0
  %996 = vperm.xlu0 %995, %v986
  %v997 = vpop.permute.xlu0 %996
  %1000 = vset.pattern.permute.xlu0 0
  %1001 = vperm.xlu0 %1000, %v987
  %v1002 = vpop.permute.xlu0 %1001
  %1005 = vset.pattern.permute.xlu0 0
  %1006 = vperm.xlu0 %1005, %v988
  %v1007 = vpop.permute.xlu0 %1006
  %v1009 = vadd.f32 %v981, %v992
  %v1010 = vadd.f32 %v982, %v997
  %v1011 = vadd.f32 %v983, %v1002
  %v1012 = vadd.f32 %v984, %v1007
  %v1013 = vadd.f32 %v1009, %v363
  %v1014 = vadd.f32 %v1010, %v364
  %v1015 = vadd.f32 %v1011, %v365
  %v1016 = vadd.f32 %v1012, %v366
  %v1017 = vld [vmem:[%s10] sm:$0xff]
  %v1018 = vld [vmem:[%s10 + $0x8] sm:$0xff]
  %v1019 = vld [vmem:[%s10 + $0x10] sm:$0xff]
  %v1020 = vld [vmem:[%s10 + $0x18] sm:$0xff]
  %v1021 = vld [vmem:[%s11] sm:$0xff]
  %v1022 = vld [vmem:[%s11 + $0x8] sm:$0xff]
  %v1023 = vld [vmem:[%s11 + $0x10] sm:$0xff]
  %v1024 = vld [vmem:[%s11 + $0x18] sm:$0xff]
  %1026 = vset.pattern.permute.xlu0 0
  %1027 = vperm.xlu0 %1026, %v1021
  %v1028 = vpop.permute.xlu0 %1027
  %1031 = vset.pattern.permute.xlu0 0
  %1032 = vperm.xlu0 %1031, %v1022
  %v1033 = vpop.permute.xlu0 %1032
  %1036 = vset.pattern.permute.xlu0 0
  %1037 = vperm.xlu0 %1036, %v1023
  %v1038 = vpop.permute.xlu0 %1037
  %1041 = vset.pattern.permute.xlu0 0
  %1042 = vperm.xlu0 %1041, %v1024
  %v1043 = vpop.permute.xlu0 %1042
  %vm1045 = vcmask 261120
  %v1047 = vsel %vm1045, %v1017, 0
  %v1050 = vsel %vm1045, %v1018, 0
  %v1053 = vsel %vm1045, %v1019, 0
  %v1056 = vsel %vm1045, %v1020, 0
  %1058 = vmatpush.msra.mxu0 0.0
  %1059 = vmatpush.msra.mxu0 0.0
  %1060 = vmatpush.msra.mxu0 0.0
  %1061 = vmatpush.msra.mxu0 0.0
  %1062 = vmatpush.msra.mxu0 0.0
  %1063 = vmatpush.msra.mxu0 0.0
  %1064 = vmatpush.msra.mxu0 0.0
  %1065 = vmatpush.msra.mxu0 0.0
  %1066 = vmatpush.msra.mxu0 0.0
  %1067 = vmatpush.msra.mxu0 0.0
  %1068 = vmatpush.msra.mxu0 0.0
  %1069 = vmatpush.msra.mxu0 0.0
  %1070 = vmatpush.msra.mxu0 %v1016
  %1071 = vmatpush.msra.mxu0 %v1015
  %1072 = vmatpush.msra.mxu0 %v1014
  %1073 = vmatpush.msra.mxu0 %v1013
  %1074 = vmatmul.f32.gmra.mxu0 %v1047
  %v1075 = vpop.f32.mrf.mxu0
  %v1076 = vadd.f32 %v1028, %v1075
  %1077 = vmatmul.f32.gmra.mxu0 %v1050
  %v1078 = vpop.f32.mrf.mxu0
  %v1079 = vadd.f32 %v1033, %v1078
  %1080 = vmatmul.f32.gmra.mxu0 %v1053
  %v1081 = vpop.f32.mrf.mxu0
  %v1082 = vadd.f32 %v1038, %v1081
  %1083 = vmatmul.f32.gmra.mxu0 %v1056
  %v1084 = vpop.f32.mrf.mxu0
  %v1085 = vadd.f32 %v1043, %v1084
  %1086 = vdwg.mxu0
  %v1087 = vmul.f32 %v1076, 0.5
  %v1088 = vmul.f32 %v1079, 0.5
  %v1089 = vmul.f32 %v1082, 0.5
  %v1090 = vmul.f32 %v1085, 0.5
  %v1091 = vmul.f32 %v1076, 0.70710677
  %v1092 = vmul.f32 %v1079, 0.70710677
  %v1093 = vmul.f32 %v1082, 0.70710677
  %v1094 = vmul.f32 %v1085, 0.70710677
  %v1095 = vmul.f32 %v1091, %v1091
  %v1096 = vmin.f32 16.0, %v1095
  %v1097 = vmul.f32 %v1096, 2.1237322e-06
  %v1098 = vadd.f32 %v1097, 0.00028619796
  %v1099 = vmul.f32 %v1096, %v1098
  %v1100 = vadd.f32 %v1099, 0.0036580483
  %v1101 = vmul.f32 %v1096, %v1100
  %v1102 = vadd.f32 %v1101, 0.05243302
  %v1103 = vmul.f32 %v1096, %v1102
  %v1104 = vadd.f32 %v1103, 0.18741608
  %v1105 = vmul.f32 %v1096, %v1104
  %v1106 = vadd.f32 %v1105, 1.1283791
  %v1107 = vmul.f32 %v1091, %v1106
  %v1108 = vmul.f32 %v1096, 3.8918573e-05
  %v1109 = vadd.f32 %v1108, 0.001143296
  %v1110 = vmul.f32 %v1096, %v1109
  %v1111 = vadd.f32 %v1110, 0.014752088
  %v1112 = vmul.f32 %v1096, %v1111
  %v1113 = vadd.f32 %v1112, 0.112945676
  %v1114 = vmul.f32 %v1096, %v1113
  %v1115 = vadd.f32 %v1114, 0.4994258
  %v1116 = vmul.f32 %v1096, %v1115
  %v1117 = vadd.f32 %v1116, 1.0
  %v1118 = vrcp.pop %v1117
  %v1119 = vmul.f32 %v1117, %v1118
  %v1120 = vsub.f32 1.0, %v1119
  %v1121 = vmul.f32 %v1118, %v1120
  %v1122 = vadd.f32 %v1118, %v1121
  %vm1123 = vweird.f32 %v1117
  %vm1124 = vweird.f32 %v1118
  %vm1125 = vmor %vm1123, %vm1124
  %v1126 = vsel %vm1125, %v1118, %v1122
  %v1127 = vand.u32 2147483647, %v1117
  %vm1128 = vcmp.eq.f32.partialorder %v1127, 8.507059e+37
  %v1129 = vand.u32 %v1117, 2147483648
  %v1130 = vor.u32 1.1754944e-38, %v1129
  %v1131 = vsel %vm1128, %v1130, %v1126
  %v1132 = vmul.f32 %v1107, %v1131
  %v1133 = vmin.f32 %v1132, 1.0
  %v1134 = vmax.f32 %v1133, -1.0
  %v1135 = vmul.f32 %v1092, %v1092
  %v1136 = vmin.f32 16.0, %v1135
  %v1137 = vmul.f32 %v1136, 2.1237322e-06
  %v1138 = vadd.f32 %v1137, 0.00028619796
  %v1139 = vmul.f32 %v1136, %v1138
  %v1140 = vadd.f32 %v1139, 0.0036580483
  %v1141 = vmul.f32 %v1136, %v1140
  %v1142 = vadd.f32 %v1141, 0.05243302
  %v1143 = vmul.f32 %v1136, %v1142
  %v1144 = vadd.f32 %v1143, 0.18741608
  %v1145 = vmul.f32 %v1136, %v1144
  %v1146 = vadd.f32 %v1145, 1.1283791
  %v1147 = vmul.f32 %v1092, %v1146
  %v1148 = vmul.f32 %v1136, 3.8918573e-05
  %v1149 = vadd.f32 %v1148, 0.001143296
  %v1150 = vmul.f32 %v1136, %v1149
  %v1151 = vadd.f32 %v1150, 0.014752088
  %v1152 = vmul.f32 %v1136, %v1151
  %v1153 = vadd.f32 %v1152, 0.112945676
  %v1154 = vmul.f32 %v1136, %v1153
  %v1155 = vadd.f32 %v1154, 0.4994258
  %v1156 = vmul.f32 %v1136, %v1155
  %v1157 = vadd.f32 %v1156, 1.0
  %v1158 = vrcp.pop %v1157
  %v1159 = vmul.f32 %v1157, %v1158
  %v1160 = vsub.f32 1.0, %v1159
  %v1161 = vmul.f32 %v1158, %v1160
  %v1162 = vadd.f32 %v1158, %v1161
  %vm1163 = vweird.f32 %v1157
  %vm1164 = vweird.f32 %v1158
  %vm1165 = vmor %vm1163, %vm1164
  %v1166 = vsel %vm1165, %v1158, %v1162
  %v1167 = vand.u32 2147483647, %v1157
  %vm1168 = vcmp.eq.f32.partialorder %v1167, 8.507059e+37
  %v1169 = vand.u32 %v1157, 2147483648
  %v1170 = vor.u32 1.1754944e-38, %v1169
  %v1171 = vsel %vm1168, %v1170, %v1166
  %v1172 = vmul.f32 %v1147, %v1171
  %v1173 = vmin.f32 %v1172, 1.0
  %v1174 = vmax.f32 %v1173, -1.0
  %v1175 = vmul.f32 %v1093, %v1093
  %v1176 = vmin.f32 16.0, %v1175
  %v1177 = vmul.f32 %v1176, 2.1237322e-06
  %v1178 = vadd.f32 %v1177, 0.00028619796
  %v1179 = vmul.f32 %v1176, %v1178
  %v1180 = vadd.f32 %v1179, 0.0036580483
  %v1181 = vmul.f32 %v1176, %v1180
  %v1182 = vadd.f32 %v1181, 0.05243302
  %v1183 = vmul.f32 %v1176, %v1182
  %v1184 = vadd.f32 %v1183, 0.18741608
  %v1185 = vmul.f32 %v1176, %v1184
  %v1186 = vadd.f32 %v1185, 1.1283791
  %v1187 = vmul.f32 %v1093, %v1186
  %v1188 = vmul.f32 %v1176, 3.8918573e-05
  %v1189 = vadd.f32 %v1188, 0.001143296
  %v1190 = vmul.f32 %v1176, %v1189
  %v1191 = vadd.f32 %v1190, 0.014752088
  %v1192 = vmul.f32 %v1176, %v1191
  %v1193 = vadd.f32 %v1192, 0.112945676
  %v1194 = vmul.f32 %v1176, %v1193
  %v1195 = vadd.f32 %v1194, 0.4994258
  %v1196 = vmul.f32 %v1176, %v1195
  %v1197 = vadd.f32 %v1196, 1.0
  %v1198 = vrcp.pop %v1197
  %v1199 = vmul.f32 %v1197, %v1198
  %v1200 = vsub.f32 1.0, %v1199
  %v1201 = vmul.f32 %v1198, %v1200
  %v1202 = vadd.f32 %v1198, %v1201
  %vm1203 = vweird.f32 %v1197
  %vm1204 = vweird.f32 %v1198
  %vm1205 = vmor %vm1203, %vm1204
  %v1206 = vsel %vm1205, %v1198, %v1202
  %v1207 = vand.u32 2147483647, %v1197
  %vm1208 = vcmp.eq.f32.partialorder %v1207, 8.507059e+37
  %v1209 = vand.u32 %v1197, 2147483648
  %v1210 = vor.u32 1.1754944e-38, %v1209
  %v1211 = vsel %vm1208, %v1210, %v1206
  %v1212 = vmul.f32 %v1187, %v1211
  %v1213 = vmin.f32 %v1212, 1.0
  %v1214 = vmax.f32 %v1213, -1.0
  %v1215 = vmul.f32 %v1094, %v1094
  %v1216 = vmin.f32 16.0, %v1215
  %v1217 = vmul.f32 %v1216, 2.1237322e-06
  %v1218 = vadd.f32 %v1217, 0.00028619796
  %v1219 = vmul.f32 %v1216, %v1218
  %v1220 = vadd.f32 %v1219, 0.0036580483
  %v1221 = vmul.f32 %v1216, %v1220
  %v1222 = vadd.f32 %v1221, 0.05243302
  %v1223 = vmul.f32 %v1216, %v1222
  %v1224 = vadd.f32 %v1223, 0.18741608
  %v1225 = vmul.f32 %v1216, %v1224
  %v1226 = vadd.f32 %v1225, 1.1283791
  %v1227 = vmul.f32 %v1094, %v1226
  %v1228 = vmul.f32 %v1216, 3.8918573e-05
  %v1229 = vadd.f32 %v1228, 0.001143296
  %v1230 = vmul.f32 %v1216, %v1229
  %v1231 = vadd.f32 %v1230, 0.014752088
  %v1232 = vmul.f32 %v1216, %v1231
  %v1233 = vadd.f32 %v1232, 0.112945676
  %v1234 = vmul.f32 %v1216, %v1233
  %v1235 = vadd.f32 %v1234, 0.4994258
  %v1236 = vmul.f32 %v1216, %v1235
  %v1237 = vadd.f32 %v1236, 1.0
  %v1238 = vrcp.pop %v1237
  %v1239 = vmul.f32 %v1237, %v1238
  %v1240 = vsub.f32 1.0, %v1239
  %v1241 = vmul.f32 %v1238, %v1240
  %v1242 = vadd.f32 %v1238, %v1241
  %vm1243 = vweird.f32 %v1237
  %vm1244 = vweird.f32 %v1238
  %vm1245 = vmor %vm1243, %vm1244
  %v1246 = vsel %vm1245, %v1238, %v1242
  %v1247 = vand.u32 2147483647, %v1237
  %vm1248 = vcmp.eq.f32.partialorder %v1247, 8.507059e+37
  %v1249 = vand.u32 %v1237, 2147483648
  %v1250 = vor.u32 1.1754944e-38, %v1249
  %v1251 = vsel %vm1248, %v1250, %v1246
  %v1252 = vmul.f32 %v1227, %v1251
  %v1253 = vmin.f32 %v1252, 1.0
  %v1254 = vmax.f32 %v1253, -1.0
  %v1255 = vadd.f32 %v1134, 1.0
  %v1256 = vadd.f32 %v1174, 1.0
  %v1257 = vadd.f32 %v1214, 1.0
  %v1258 = vadd.f32 %v1254, 1.0
  %v1259 = vmul.f32 %v1087, %v1255
  %v1260 = vmul.f32 %v1088, %v1256
  %v1261 = vmul.f32 %v1089, %v1257
  %v1262 = vmul.f32 %v1090, %v1258
  %v1263 = vld [vmem:[%s12] sm:$0xff]
  %v1264 = vld [vmem:[%s12 + $0x8] sm:$0xff]
  %v1265 = vld [vmem:[%s12 + $0x10] sm:$0xff]
  %v1266 = vld [vmem:[%s12 + $0x18] sm:$0xff]
  %1268 = vset.pattern.permute.xlu0 0
  %1269 = vperm.xlu0 %1268, %v1263
  %v1270 = vpop.permute.xlu0 %1269
  %1273 = vset.pattern.permute.xlu0 0
  %1274 = vperm.xlu0 %1273, %v1264
  %v1275 = vpop.permute.xlu0 %1274
  %1278 = vset.pattern.permute.xlu0 0
  %1279 = vperm.xlu0 %1278, %v1265
  %v1280 = vpop.permute.xlu0 %1279
  %1283 = vset.pattern.permute.xlu0 0
  %1284 = vperm.xlu0 %1283, %v1266
  %v1285 = vpop.permute.xlu0 %1284
  %v1287 = vmul.f32 %v1259, %v1270
  %v1288 = vmul.f32 %v1260, %v1275
  %v1289 = vmul.f32 %v1261, %v1280
  %v1290 = vmul.f32 %v1262, %v1285
  %v1291 = vld [vmem:[%s13] sm:$0xff]
  %v1292 = vld [vmem:[%s13 + $0x8] sm:$0xff]
  %v1293 = vld [vmem:[%s13 + $0x10] sm:$0xff]
  %v1294 = vld [vmem:[%s13 + $0x18] sm:$0xff]
  %1296 = vset.pattern.permute.xlu0 0
  %1297 = vperm.xlu0 %1296, %v1291
  %v1298 = vpop.permute.xlu0 %1297
  %1301 = vset.pattern.permute.xlu0 0
  %1302 = vperm.xlu0 %1301, %v1292
  %v1303 = vpop.permute.xlu0 %1302
  %1306 = vset.pattern.permute.xlu0 0
  %1307 = vperm.xlu0 %1306, %v1293
  %v1308 = vpop.permute.xlu0 %1307
  %1311 = vset.pattern.permute.xlu0 0
  %1312 = vperm.xlu0 %1311, %v1294
  %v1313 = vpop.permute.xlu0 %1312
  %v1315 = vadd.f32 %v1287, %v1298
  %v1316 = vadd.f32 %v1288, %v1303
  %v1317 = vadd.f32 %v1289, %v1308
  %v1318 = vadd.f32 %v1290, %v1313
  %1319 = vmatpush.msra.mxu0 %v384
  %1320 = vmatpush.msra.mxu0 %v383
  %1321 = vmatpush.msra.mxu0 %v382
  %1322 = vmatpush.msra.mxu0 %v381
  %1323 = vmatpush.msra.mxu0 %v380
  %1324 = vmatpush.msra.mxu0 %v379
  %1325 = vmatpush.msra.mxu0 %v378
  %1326 = vmatpush.msra.mxu0 %v377
  %1327 = vmatpush.msra.mxu0 %v376
  %1328 = vmatpush.msra.mxu0 %v375
  %1329 = vmatpush.msra.mxu0 %v374
  %1330 = vmatpush.msra.mxu0 %v373
  %1331 = vmatpush.msra.mxu0 %v372
  %1332 = vmatpush.msra.mxu0 %v371
  %1333 = vmatpush.msra.mxu0 %v370
  %1334 = vmatpush.msra.mxu0 %v369
  %1335 = vmatmul.f32.gmra.mxu0 %v1315
  %v1336 = vpop.f32.mrf.mxu0
  %v1337 = vadd.f32 0.0, %v1336
  %1338 = vmatmul.f32.gmra.mxu0 %v1316
  %v1339 = vpop.f32.mrf.mxu0
  %v1340 = vadd.f32 0.0, %v1339
  %1341 = vmatmul.f32.gmra.mxu0 %v1317
  %v1342 = vpop.f32.mrf.mxu0
  %v1343 = vadd.f32 0.0, %v1342
  %1344 = vmatmul.f32.gmra.mxu0 %v1318
  %v1345 = vpop.f32.mrf.mxu0
  %v1346 = vadd.f32 0.0, %v1345
  %1347 = vdwg.mxu0
  %v1348 = vld [vmem:[%s14] sm:$0xff]
  %v1349 = vld [vmem:[%s14 + $0x8] sm:$0x3]
  %v1350 = vld [vmem:[%s15] sm:$0xff]
  %v1351 = vld [vmem:[%s15 + $0x8] sm:$0x3]
  %1353 = vset.pattern.permute.xlu0 0
  %1354 = vperm.xlu0 %1353, %v1350
  %v1355 = vpop.permute.xlu0 %1354
  %1358 = vset.pattern.permute.xlu0 0
  %1359 = vperm.xlu0 %1358, %v1351
  %v1360 = vpop.permute.xlu0 %1359
  %v1363 = vsel %vm1045, %v1348, 0
  %v1366 = vsel %vm1045, %v1349, 0
  %1368 = vmatpush.msra.mxu0 0.0
  %1369 = vmatpush.msra.mxu0 0.0
  %1370 = vmatpush.msra.mxu0 0.0
  %1371 = vmatpush.msra.mxu0 0.0
  %1372 = vmatpush.msra.mxu0 0.0
  %1373 = vmatpush.msra.mxu0 0.0
  %1374 = vmatpush.msra.mxu0 0.0
  %1375 = vmatpush.msra.mxu0 0.0
  %1376 = vmatpush.msra.mxu0 0.0
  %1377 = vmatpush.msra.mxu0 0.0
  %1378 = vmatpush.msra.mxu0 0.0
  %1379 = vmatpush.msra.mxu0 0.0
  %1380 = vmatpush.msra.mxu0 %v1346
  %1381 = vmatpush.msra.mxu0 %v1343
  %1382 = vmatpush.msra.mxu0 %v1340
  %1383 = vmatpush.msra.mxu0 %v1337
  %1384 = vmatmul.f32.gmra.mxu0 %v1363
  %v1385 = vpop.f32.mrf.mxu0
  %v1386 = vadd.f32 %v1355, %v1385
  %1387 = vmatmul.f32.gmra.mxu0 %v1366
  %v1388 = vpop.f32.mrf.mxu0
  %v1389 = vadd.f32 %v1360, %v1388
  %1390 = vdwg.mxu0
  %v1391 = vadd.f32 %v1386, 0.0
  %v1392 = vadd.f32 %v1389, 0.0
  %vm1393 = vcmask 15360
  %v1394 = vsel %vm1393, %v1391, 0.0
  %vm1395 = vcmask 9216
  %v1396 = vsel %vm1395, %v1392, 0.0
  %v1397 = vadd.f32 %v1394, %v1396
  %v1398 = vrot.slane %v1397, 4
  %v1399 = vadd.f32 %v1397, %v1398
  %v1400 = vrot.slane %v1399, 2
  %v1401 = vadd.f32 %v1399, %v1400
  %v1402 = vrot.slane %v1401, 1
  %v1403 = vadd.f32 %v1401, %v1402
  %v1404 = vrcp.pop 10.0
  %v1405 = vmul.f32 10.0, %v1404
  %v1406 = vsub.f32 1.0, %v1405
  %v1407 = vmul.f32 %v1404, %v1406
  %v1408 = vadd.f32 %v1404, %v1407
  %vm1409 = vweird.f32 %v1404
  %v1410 = vsel %vm1409, %v1404, %v1408
  %v1411 = vmul.f32 %v1403, %v1410
  %v1412 = vsub.f32 %v1391, %v1411
  %v1413 = vsub.f32 %v1392, %v1411
  %1415 = vset.pattern.permute.xlu0 0
  %1416 = vperm.xlu0 %1415, %v367
  %v1417 = vpop.permute.xlu0 %1416
  %1420 = vset.pattern.permute.xlu0 0
  %1421 = vperm.xlu0 %1420, %v368
  %v1422 = vpop.permute.xlu0 %1421
  %v1424 = vadd.f32 %v1412, %v1417
  %v1425 = vadd.f32 %v1413, %v1422
  %v1426 = vsel %vm1393, %v1424, -inf
  %v1427 = vsel %vm1395, %v1425, -inf
  %v1428 = vmax.f32 %v1426, %v1427
  %v1429 = vrot.slane %v1428, 4
  %v1430 = vmax.f32 %v1428, %v1429
  %v1431 = vrot.slane %v1430, 2
  %v1432 = vmax.f32 %v1430, %v1431
  %v1433 = vrot.slane %v1432, 1
  %v1434 = vmax.f32 %v1432, %v1433
  %v1435 = vsub.f32 %v1424, %v1434
  %v1436 = vsub.f32 %v1425, %v1434
  %v1437 = vmul.f32 %v1435, 1.442695
  %v1438 = vpow.pop %v1437
  %v1439 = vmul.f32 %v1436, 1.442695
  %v1440 = vpow.pop %v1439
  %v1441 = vsel %vm1393, %v1438, 0.0
  %v1442 = vsel %vm1395, %v1440, 0.0
  %v1443 = vadd.f32 %v1441, %v1442
  %v1444 = vrot.slane %v1443, 4
  %v1445 = vadd.f32 %v1443, %v1444
  %v1446 = vrot.slane %v1445, 2
  %v1447 = vadd.f32 %v1445, %v1446
  %v1448 = vrot.slane %v1447, 1
  %v1449 = vadd.f32 %v1447, %v1448
  %v1450 = vlog2.pop %v1449
  %v1451 = vmul.f32 %v1450, 0.6931472
  %v1452 = vsub.f32 %v1435, %v1451
  %v1453 = vsub.f32 %v1436, %v1451
  %s1454 = scalar_lea.vmem %s6, 32
  %v1455 = vld [vmem:[%s1454] sm:$0xff]
  %v1456 = vld [vmem:[%s1454 + $0x8] sm:$0xff]
  %v1457 = vld [vmem:[%s1454 + $0x10] sm:$0xff]
  %v1458 = vld [vmem:[%s1454 + $0x18] sm:$0xff]
  %1459 = vrot.lane.b32.xlu0 %v1315, 9
  %v1460 = vpop.permute.xlu0 %1459
  %1461 = vrot.lane.b32.xlu0 %v1316, 9
  %v1462 = vpop.permute.xlu0 %1461
  %1463 = vrot.lane.b32.xlu0 %v1317, 9
  %v1464 = vpop.permute.xlu0 %1463
  %1465 = vrot.lane.b32.xlu0 %v1318, 9
  %v1466 = vpop.permute.xlu0 %1465
  %v1467 = vmul.f32 %v1460, %v399
  %v1468 = vmul.f32 %v1462, %v399
  %v1469 = vmul.f32 %v1464, %v399
  %v1470 = vmul.f32 %v1466, %v399
  %1472 = vset.pattern.permute.xlu0 0
  %1473 = vperm.xlu0 %1472, %v1455
  %v1474 = vpop.permute.xlu0 %1473
  %1477 = vset.pattern.permute.xlu0 0
  %1478 = vperm.xlu0 %1477, %v1456
  %v1479 = vpop.permute.xlu0 %1478
  %1482 = vset.pattern.permute.xlu0 0
  %1483 = vperm.xlu0 %1482, %v1457
  %v1484 = vpop.permute.xlu0 %1483
  %1487 = vset.pattern.permute.xlu0 0
  %1488 = vperm.xlu0 %1487, %v1458
  %v1489 = vpop.permute.xlu0 %1488
  %v1491 = vmul.f32 %v1467, %v1474
  %v1492 = vmul.f32 %v1468, %v1479
  %v1493 = vmul.f32 %v1469, %v1484
  %v1494 = vmul.f32 %v1470, %v1489
  %v1495 = vadd.f32 %v1491, 0.0
  %v1496 = vadd.f32 %v1492, 0.0
  %v1497 = vadd.f32 %v1493, 0.0
  %v1498 = vadd.f32 %v1494, 0.0
  %1499 = vrot.lane.b32.xlu0 %v1315, 8
  %v1500 = vpop.permute.xlu0 %1499
  %1501 = vrot.lane.b32.xlu0 %v1316, 8
  %v1502 = vpop.permute.xlu0 %1501
  %1503 = vrot.lane.b32.xlu0 %v1317, 8
  %v1504 = vpop.permute.xlu0 %1503
  %1505 = vrot.lane.b32.xlu0 %v1318, 8
  %v1506 = vpop.permute.xlu0 %1505
  %v1507 = vmul.f32 %v1500, %v444
  %v1508 = vmul.f32 %v1502, %v444
  %v1509 = vmul.f32 %v1504, %v444
  %v1510 = vmul.f32 %v1506, %v444
  %1511 = vset.pattern.permute.xlu0 1
  %1512 = vperm.xlu0 %1511, %v1455
  %v1513 = vpop.permute.xlu0 %1512
  %1515 = vset.pattern.permute.xlu0 1
  %1516 = vperm.xlu0 %1515, %v1456
  %v1517 = vpop.permute.xlu0 %1516
  %1519 = vset.pattern.permute.xlu0 1
  %1520 = vperm.xlu0 %1519, %v1457
  %v1521 = vpop.permute.xlu0 %1520
  %1523 = vset.pattern.permute.xlu0 1
  %1524 = vperm.xlu0 %1523, %v1458
  %v1525 = vpop.permute.xlu0 %1524
  %v1527 = vmul.f32 %v1507, %v1513
  %v1528 = vmul.f32 %v1508, %v1517
  %v1529 = vmul.f32 %v1509, %v1521
  %v1530 = vmul.f32 %v1510, %v1525
  %v1531 = vadd.f32 %v1495, %v1527
  %v1532 = vadd.f32 %v1496, %v1528
  %v1533 = vadd.f32 %v1497, %v1529
  %v1534 = vadd.f32 %v1498, %v1530
  %1535 = vrot.lane.b32.xlu0 %v1315, 7
  %v1536 = vpop.permute.xlu0 %1535
  %1537 = vrot.lane.b32.xlu0 %v1316, 7
  %v1538 = vpop.permute.xlu0 %1537
  %1539 = vrot.lane.b32.xlu0 %v1317, 7
  %v1540 = vpop.permute.xlu0 %1539
  %1541 = vrot.lane.b32.xlu0 %v1318, 7
  %v1542 = vpop.permute.xlu0 %1541
  %v1543 = vmul.f32 %v1536, %v485
  %v1544 = vmul.f32 %v1538, %v485
  %v1545 = vmul.f32 %v1540, %v485
  %v1546 = vmul.f32 %v1542, %v485
  %1547 = vset.pattern.permute.xlu0 2
  %1548 = vperm.xlu0 %1547, %v1455
  %v1549 = vpop.permute.xlu0 %1548
  %1551 = vset.pattern.permute.xlu0 2
  %1552 = vperm.xlu0 %1551, %v1456
  %v1553 = vpop.permute.xlu0 %1552
  %1555 = vset.pattern.permute.xlu0 2
  %1556 = vperm.xlu0 %1555, %v1457
  %v1557 = vpop.permute.xlu0 %1556
  %1559 = vset.pattern.permute.xlu0 2
  %1560 = vperm.xlu0 %1559, %v1458
  %v1561 = vpop.permute.xlu0 %1560
  %v1563 = vmul.f32 %v1543, %v1549
  %v1564 = vmul.f32 %v1544, %v1553
  %v1565 = vmul.f32 %v1545, %v1557
  %v1566 = vmul.f32 %v1546, %v1561
  %v1567 = vadd.f32 %v1531, %v1563
  %v1568 = vadd.f32 %v1532, %v1564
  %v1569 = vadd.f32 %v1533, %v1565
  %v1570 = vadd.f32 %v1534, %v1566
  %1571 = vrot.lane.b32.xlu0 %v1315, 1
  %v1572 = vpop.permute.xlu0 %1571
  %1573 = vrot.lane.b32.xlu0 %v1316, 1
  %v1574 = vpop.permute.xlu0 %1573
  %1575 = vrot.lane.b32.xlu0 %v1317, 1
  %v1576 = vpop.permute.xlu0 %1575
  %1577 = vrot.lane.b32.xlu0 %v1318, 1
  %v1578 = vpop.permute.xlu0 %1577
  %v1579 = vmul.f32 %v1572, %v526
  %v1580 = vmul.f32 %v1574, %v526
  %v1581 = vmul.f32 %v1576, %v526
  %v1582 = vmul.f32 %v1578, %v526
  %1583 = vset.pattern.permute.xlu0 3
  %1584 = vperm.xlu0 %1583, %v1455
  %v1585 = vpop.permute.xlu0 %1584
  %1587 = vset.pattern.permute.xlu0 3
  %1588 = vperm.xlu0 %1587, %v1456
  %v1589 = vpop.permute.xlu0 %1588
  %1591 = vset.pattern.permute.xlu0 3
  %1592 = vperm.xlu0 %1591, %v1457
  %v1593 = vpop.permute.xlu0 %1592
  %1595 = vset.pattern.permute.xlu0 3
  %1596 = vperm.xlu0 %1595, %v1458
  %v1597 = vpop.permute.xlu0 %1596
  %v1599 = vmul.f32 %v1579, %v1585
  %v1600 = vmul.f32 %v1580, %v1589
  %v1601 = vmul.f32 %v1581, %v1593
  %v1602 = vmul.f32 %v1582, %v1597
  %v1603 = vadd.f32 %v1567, %v1599
  %v1604 = vadd.f32 %v1568, %v1600
  %v1605 = vadd.f32 %v1569, %v1601
  %v1606 = vadd.f32 %v1570, %v1602
  %v1607 = vmul.f32 %v1315, %v559
  %v1608 = vmul.f32 %v1316, %v559
  %v1609 = vmul.f32 %v1317, %v559
  %v1610 = vmul.f32 %v1318, %v559
  %1611 = vset.pattern.permute.xlu0 4
  %1612 = vperm.xlu0 %1611, %v1455
  %v1613 = vpop.permute.xlu0 %1612
  %1615 = vset.pattern.permute.xlu0 4
  %1616 = vperm.xlu0 %1615, %v1456
  %v1617 = vpop.permute.xlu0 %1616
  %1619 = vset.pattern.permute.xlu0 4
  %1620 = vperm.xlu0 %1619, %v1457
  %v1621 = vpop.permute.xlu0 %1620
  %1623 = vset.pattern.permute.xlu0 4
  %1624 = vperm.xlu0 %1623, %v1458
  %v1625 = vpop.permute.xlu0 %1624
  %v1627 = vmul.f32 %v1607, %v1613
  %v1628 = vmul.f32 %v1608, %v1617
  %v1629 = vmul.f32 %v1609, %v1621
  %v1630 = vmul.f32 %v1610, %v1625
  %v1631 = vadd.f32 %v1603, %v1627
  %v1632 = vadd.f32 %v1604, %v1628
  %v1633 = vadd.f32 %v1605, %v1629
  %v1634 = vadd.f32 %v1606, %v1630
  %1635 = vrot.lane.b32.xlu0 %v1315, 127
  %v1636 = vpop.permute.xlu0 %1635
  %1637 = vrot.lane.b32.xlu0 %v1316, 127
  %v1638 = vpop.permute.xlu0 %1637
  %1639 = vrot.lane.b32.xlu0 %v1317, 127
  %v1640 = vpop.permute.xlu0 %1639
  %1641 = vrot.lane.b32.xlu0 %v1318, 127
  %v1642 = vpop.permute.xlu0 %1641
  %v1643 = vmul.f32 %v1636, %v600
  %v1644 = vmul.f32 %v1638, %v600
  %v1645 = vmul.f32 %v1640, %v600
  %v1646 = vmul.f32 %v1642, %v600
  %1647 = vset.pattern.permute.xlu0 5
  %1648 = vperm.xlu0 %1647, %v1455
  %v1649 = vpop.permute.xlu0 %1648
  %1651 = vset.pattern.permute.xlu0 5
  %1652 = vperm.xlu0 %1651, %v1456
  %v1653 = vpop.permute.xlu0 %1652
  %1655 = vset.pattern.permute.xlu0 5
  %1656 = vperm.xlu0 %1655, %v1457
  %v1657 = vpop.permute.xlu0 %1656
  %1659 = vset.pattern.permute.xlu0 5
  %1660 = vperm.xlu0 %1659, %v1458
  %v1661 = vpop.permute.xlu0 %1660
  %v1663 = vmul.f32 %v1643, %v1649
  %v1664 = vmul.f32 %v1644, %v1653
  %v1665 = vmul.f32 %v1645, %v1657
  %v1666 = vmul.f32 %v1646, %v1661
  %v1667 = vadd.f32 %v1631, %v1663
  %v1668 = vadd.f32 %v1632, %v1664
  %v1669 = vadd.f32 %v1633, %v1665
  %v1670 = vadd.f32 %v1634, %v1666
  %1671 = vrot.lane.b32.xlu0 %v1315, 121
  %v1672 = vpop.permute.xlu0 %1671
  %1673 = vrot.lane.b32.xlu0 %v1316, 121
  %v1674 = vpop.permute.xlu0 %1673
  %1675 = vrot.lane.b32.xlu0 %v1317, 121
  %v1676 = vpop.permute.xlu0 %1675
  %1677 = vrot.lane.b32.xlu0 %v1318, 121
  %v1678 = vpop.permute.xlu0 %1677
  %v1679 = vmul.f32 %v1672, %v641
  %v1680 = vmul.f32 %v1674, %v641
  %v1681 = vmul.f32 %v1676, %v641
  %v1682 = vmul.f32 %v1678, %v641
  %1683 = vset.pattern.permute.xlu0 6
  %1684 = vperm.xlu0 %1683, %v1455
  %v1685 = vpop.permute.xlu0 %1684
  %1687 = vset.pattern.permute.xlu0 6
  %1688 = vperm.xlu0 %1687, %v1456
  %v1689 = vpop.permute.xlu0 %1688
  %1691 = vset.pattern.permute.xlu0 6
  %1692 = vperm.xlu0 %1691, %v1457
  %v1693 = vpop.permute.xlu0 %1692
  %1695 = vset.pattern.permute.xlu0 6
  %1696 = vperm.xlu0 %1695, %v1458
  %v1697 = vpop.permute.xlu0 %1696
  %v1699 = vmul.f32 %v1679, %v1685
  %v1700 = vmul.f32 %v1680, %v1689
  %v1701 = vmul.f32 %v1681, %v1693
  %v1702 = vmul.f32 %v1682, %v1697
  %v1703 = vadd.f32 %v1667, %v1699
  %v1704 = vadd.f32 %v1668, %v1700
  %v1705 = vadd.f32 %v1669, %v1701
  %v1706 = vadd.f32 %v1670, %v1702
  %1707 = vrot.lane.b32.xlu0 %v1315, 120
  %v1708 = vpop.permute.xlu0 %1707
  %1709 = vrot.lane.b32.xlu0 %v1316, 120
  %v1710 = vpop.permute.xlu0 %1709
  %1711 = vrot.lane.b32.xlu0 %v1317, 120
  %v1712 = vpop.permute.xlu0 %1711
  %1713 = vrot.lane.b32.xlu0 %v1318, 120
  %v1714 = vpop.permute.xlu0 %1713
  %v1715 = vmul.f32 %v1708, %v682
  %v1716 = vmul.f32 %v1710, %v682
  %v1717 = vmul.f32 %v1712, %v682
  %v1718 = vmul.f32 %v1714, %v682
  %1719 = vset.pattern.permute.xlu0 7
  %1720 = vperm.xlu0 %1719, %v1455
  %v1721 = vpop.permute.xlu0 %1720
  %1723 = vset.pattern.permute.xlu0 7
  %1724 = vperm.xlu0 %1723, %v1456
  %v1725 = vpop.permute.xlu0 %1724
  %1727 = vset.pattern.permute.xlu0 7
  %1728 = vperm.xlu0 %1727, %v1457
  %v1729 = vpop.permute.xlu0 %1728
  %1731 = vset.pattern.permute.xlu0 7
  %1732 = vperm.xlu0 %1731, %v1458
  %v1733 = vpop.permute.xlu0 %1732
  %v1735 = vmul.f32 %v1715, %v1721
  %v1736 = vmul.f32 %v1716, %v1725
  %v1737 = vmul.f32 %v1717, %v1729
  %v1738 = vmul.f32 %v1718, %v1733
  %v1739 = vadd.f32 %v1703, %v1735
  %v1740 = vadd.f32 %v1704, %v1736
  %v1741 = vadd.f32 %v1705, %v1737
  %v1742 = vadd.f32 %v1706, %v1738
  %1743 = vrot.lane.b32.xlu0 %v1315, 119
  %v1744 = vpop.permute.xlu0 %1743
  %1745 = vrot.lane.b32.xlu0 %v1316, 119
  %v1746 = vpop.permute.xlu0 %1745
  %1747 = vrot.lane.b32.xlu0 %v1317, 119
  %v1748 = vpop.permute.xlu0 %1747
  %1749 = vrot.lane.b32.xlu0 %v1318, 119
  %v1750 = vpop.permute.xlu0 %1749
  %v1751 = vmul.f32 %v1744, %v723
  %v1752 = vmul.f32 %v1746, %v723
  %v1753 = vmul.f32 %v1748, %v723
  %v1754 = vmul.f32 %v1750, %v723
  %1755 = vset.pattern.permute.xlu0 8
  %1756 = vperm.xlu0 %1755, %v1455
  %v1757 = vpop.permute.xlu0 %1756
  %1759 = vset.pattern.permute.xlu0 8
  %1760 = vperm.xlu0 %1759, %v1456
  %v1761 = vpop.permute.xlu0 %1760
  %1763 = vset.pattern.permute.xlu0 8
  %1764 = vperm.xlu0 %1763, %v1457
  %v1765 = vpop.permute.xlu0 %1764
  %1767 = vset.pattern.permute.xlu0 8
  %1768 = vperm.xlu0 %1767, %v1458
  %v1769 = vpop.permute.xlu0 %1768
  %v1771 = vmul.f32 %v1751, %v1757
  %v1772 = vmul.f32 %v1752, %v1761
  %v1773 = vmul.f32 %v1753, %v1765
  %v1774 = vmul.f32 %v1754, %v1769
  %v1775 = vadd.f32 %v1739, %v1771
  %v1776 = vadd.f32 %v1740, %v1772
  %v1777 = vadd.f32 %v1741, %v1773
  %v1778 = vadd.f32 %v1742, %v1774
  %s1779 = scalar_lea.vmem %s7, 32
  %v1780 = vld [vmem:[%s1779] sm:$0xff]
  %v1781 = vld [vmem:[%s1779 + $0x8] sm:$0xff]
  %v1782 = vld [vmem:[%s1779 + $0x10] sm:$0xff]
  %v1783 = vld [vmem:[%s1779 + $0x18] sm:$0xff]
  %1785 = vset.pattern.permute.xlu0 0
  %1786 = vperm.xlu0 %1785, %v1780
  %v1787 = vpop.permute.xlu0 %1786
  %1790 = vset.pattern.permute.xlu0 0
  %1791 = vperm.xlu0 %1790, %v1781
  %v1792 = vpop.permute.xlu0 %1791
  %1795 = vset.pattern.permute.xlu0 0
  %1796 = vperm.xlu0 %1795, %v1782
  %v1797 = vpop.permute.xlu0 %1796
  %1800 = vset.pattern.permute.xlu0 0
  %1801 = vperm.xlu0 %1800, %v1783
  %v1802 = vpop.permute.xlu0 %1801
  %v1804 = vadd.f32 %v1775, %v1787
  %v1805 = vadd.f32 %v1776, %v1792
  %v1806 = vadd.f32 %v1777, %v1797
  %v1807 = vadd.f32 %v1778, %v1802
  %v1808 = vmul.f32 %v1804, 0.5
  %v1809 = vmul.f32 %v1805, 0.5
  %v1810 = vmul.f32 %v1806, 0.5
  %v1811 = vmul.f32 %v1807, 0.5
  %v1812 = vmul.f32 %v1804, 0.70710677
  %v1813 = vmul.f32 %v1805, 0.70710677
  %v1814 = vmul.f32 %v1806, 0.70710677
  %v1815 = vmul.f32 %v1807, 0.70710677
  %v1816 = vmul.f32 %v1812, %v1812
  %v1817 = vmin.f32 16.0, %v1816
  %v1818 = vmul.f32 %v1817, 2.1237322e-06
  %v1819 = vadd.f32 %v1818, 0.00028619796
  %v1820 = vmul.f32 %v1817, %v1819
  %v1821 = vadd.f32 %v1820, 0.0036580483
  %v1822 = vmul.f32 %v1817, %v1821
  %v1823 = vadd.f32 %v1822, 0.05243302
  %v1824 = vmul.f32 %v1817, %v1823
  %v1825 = vadd.f32 %v1824, 0.18741608
  %v1826 = vmul.f32 %v1817, %v1825
  %v1827 = vadd.f32 %v1826, 1.1283791
  %v1828 = vmul.f32 %v1812, %v1827
  %v1829 = vmul.f32 %v1817, 3.8918573e-05
  %v1830 = vadd.f32 %v1829, 0.001143296
  %v1831 = vmul.f32 %v1817, %v1830
  %v1832 = vadd.f32 %v1831, 0.014752088
  %v1833 = vmul.f32 %v1817, %v1832
  %v1834 = vadd.f32 %v1833, 0.112945676
  %v1835 = vmul.f32 %v1817, %v1834
  %v1836 = vadd.f32 %v1835, 0.4994258
  %v1837 = vmul.f32 %v1817, %v1836
  %v1838 = vadd.f32 %v1837, 1.0
  %v1839 = vrcp.pop %v1838
  %v1840 = vmul.f32 %v1838, %v1839
  %v1841 = vsub.f32 1.0, %v1840
  %v1842 = vmul.f32 %v1839, %v1841
  %v1843 = vadd.f32 %v1839, %v1842
  %vm1844 = vweird.f32 %v1838
  %vm1845 = vweird.f32 %v1839
  %vm1846 = vmor %vm1844, %vm1845
  %v1847 = vsel %vm1846, %v1839, %v1843
  %v1848 = vand.u32 2147483647, %v1838
  %vm1849 = vcmp.eq.f32.partialorder %v1848, 8.507059e+37
  %v1850 = vand.u32 %v1838, 2147483648
  %v1851 = vor.u32 1.1754944e-38, %v1850
  %v1852 = vsel %vm1849, %v1851, %v1847
  %v1853 = vmul.f32 %v1828, %v1852
  %v1854 = vmin.f32 %v1853, 1.0
  %v1855 = vmax.f32 %v1854, -1.0
  %v1856 = vmul.f32 %v1813, %v1813
  %v1857 = vmin.f32 16.0, %v1856
  %v1858 = vmul.f32 %v1857, 2.1237322e-06
  %v1859 = vadd.f32 %v1858, 0.00028619796
  %v1860 = vmul.f32 %v1857, %v1859
  %v1861 = vadd.f32 %v1860, 0.0036580483
  %v1862 = vmul.f32 %v1857, %v1861
  %v1863 = vadd.f32 %v1862, 0.05243302
  %v1864 = vmul.f32 %v1857, %v1863
  %v1865 = vadd.f32 %v1864, 0.18741608
  %v1866 = vmul.f32 %v1857, %v1865
  %v1867 = vadd.f32 %v1866, 1.1283791
  %v1868 = vmul.f32 %v1813, %v1867
  %v1869 = vmul.f32 %v1857, 3.8918573e-05
  %v1870 = vadd.f32 %v1869, 0.001143296
  %v1871 = vmul.f32 %v1857, %v1870
  %v1872 = vadd.f32 %v1871, 0.014752088
  %v1873 = vmul.f32 %v1857, %v1872
  %v1874 = vadd.f32 %v1873, 0.112945676
  %v1875 = vmul.f32 %v1857, %v1874
  %v1876 = vadd.f32 %v1875, 0.4994258
  %v1877 = vmul.f32 %v1857, %v1876
  %v1878 = vadd.f32 %v1877, 1.0
  %v1879 = vrcp.pop %v1878
  %v1880 = vmul.f32 %v1878, %v1879
  %v1881 = vsub.f32 1.0, %v1880
  %v1882 = vmul.f32 %v1879, %v1881
  %v1883 = vadd.f32 %v1879, %v1882
  %vm1884 = vweird.f32 %v1878
  %vm1885 = vweird.f32 %v1879
  %vm1886 = vmor %vm1884, %vm1885
  %v1887 = vsel %vm1886, %v1879, %v1883
  %v1888 = vand.u32 2147483647, %v1878
  %vm1889 = vcmp.eq.f32.partialorder %v1888, 8.507059e+37
  %v1890 = vand.u32 %v1878, 2147483648
  %v1891 = vor.u32 1.1754944e-38, %v1890
  %v1892 = vsel %vm1889, %v1891, %v1887
  %v1893 = vmul.f32 %v1868, %v1892
  %v1894 = vmin.f32 %v1893, 1.0
  %v1895 = vmax.f32 %v1894, -1.0
  %v1896 = vmul.f32 %v1814, %v1814
  %v1897 = vmin.f32 16.0, %v1896
  %v1898 = vmul.f32 %v1897, 2.1237322e-06
  %v1899 = vadd.f32 %v1898, 0.00028619796
  %v1900 = vmul.f32 %v1897, %v1899
  %v1901 = vadd.f32 %v1900, 0.0036580483
  %v1902 = vmul.f32 %v1897, %v1901
  %v1903 = vadd.f32 %v1902, 0.05243302
  %v1904 = vmul.f32 %v1897, %v1903
  %v1905 = vadd.f32 %v1904, 0.18741608
  %v1906 = vmul.f32 %v1897, %v1905
  %v1907 = vadd.f32 %v1906, 1.1283791
  %v1908 = vmul.f32 %v1814, %v1907
  %v1909 = vmul.f32 %v1897, 3.8918573e-05
  %v1910 = vadd.f32 %v1909, 0.001143296
  %v1911 = vmul.f32 %v1897, %v1910
  %v1912 = vadd.f32 %v1911, 0.014752088
  %v1913 = vmul.f32 %v1897, %v1912
  %v1914 = vadd.f32 %v1913, 0.112945676
  %v1915 = vmul.f32 %v1897, %v1914
  %v1916 = vadd.f32 %v1915, 0.4994258
  %v1917 = vmul.f32 %v1897, %v1916
  %v1918 = vadd.f32 %v1917, 1.0
  %v1919 = vrcp.pop %v1918
  %v1920 = vmul.f32 %v1918, %v1919
  %v1921 = vsub.f32 1.0, %v1920
  %v1922 = vmul.f32 %v1919, %v1921
  %v1923 = vadd.f32 %v1919, %v1922
  %vm1924 = vweird.f32 %v1918
  %vm1925 = vweird.f32 %v1919
  %vm1926 = vmor %vm1924, %vm1925
  %v1927 = vsel %vm1926, %v1919, %v1923
  %v1928 = vand.u32 2147483647, %v1918
  %vm1929 = vcmp.eq.f32.partialorder %v1928, 8.507059e+37
  %v1930 = vand.u32 %v1918, 2147483648
  %v1931 = vor.u32 1.1754944e-38, %v1930
  %v1932 = vsel %vm1929, %v1931, %v1927
  %v1933 = vmul.f32 %v1908, %v1932
  %v1934 = vmin.f32 %v1933, 1.0
  %v1935 = vmax.f32 %v1934, -1.0
  %v1936 = vmul.f32 %v1815, %v1815
  %v1937 = vmin.f32 16.0, %v1936
  %v1938 = vmul.f32 %v1937, 2.1237322e-06
  %v1939 = vadd.f32 %v1938, 0.00028619796
  %v1940 = vmul.f32 %v1937, %v1939
  %v1941 = vadd.f32 %v1940, 0.0036580483
  %v1942 = vmul.f32 %v1937, %v1941
  %v1943 = vadd.f32 %v1942, 0.05243302
  %v1944 = vmul.f32 %v1937, %v1943
  %v1945 = vadd.f32 %v1944, 0.18741608
  %v1946 = vmul.f32 %v1937, %v1945
  %v1947 = vadd.f32 %v1946, 1.1283791
  %v1948 = vmul.f32 %v1815, %v1947
  %v1949 = vmul.f32 %v1937, 3.8918573e-05
  %v1950 = vadd.f32 %v1949, 0.001143296
  %v1951 = vmul.f32 %v1937, %v1950
  %v1952 = vadd.f32 %v1951, 0.014752088
  %v1953 = vmul.f32 %v1937, %v1952
  %v1954 = vadd.f32 %v1953, 0.112945676
  %v1955 = vmul.f32 %v1937, %v1954
  %v1956 = vadd.f32 %v1955, 0.4994258
  %v1957 = vmul.f32 %v1937, %v1956
  %v1958 = vadd.f32 %v1957, 1.0
  %v1959 = vrcp.pop %v1958
  %v1960 = vmul.f32 %v1958, %v1959
  %v1961 = vsub.f32 1.0, %v1960
  %v1962 = vmul.f32 %v1959, %v1961
  %v1963 = vadd.f32 %v1959, %v1962
  %vm1964 = vweird.f32 %v1958
  %vm1965 = vweird.f32 %v1959
  %vm1966 = vmor %vm1964, %vm1965
  %v1967 = vsel %vm1966, %v1959, %v1963
  %v1968 = vand.u32 2147483647, %v1958
  %vm1969 = vcmp.eq.f32.partialorder %v1968, 8.507059e+37
  %v1970 = vand.u32 %v1958, 2147483648
  %v1971 = vor.u32 1.1754944e-38, %v1970
  %v1972 = vsel %vm1969, %v1971, %v1967
  %v1973 = vmul.f32 %v1948, %v1972
  %v1974 = vmin.f32 %v1973, 1.0
  %v1975 = vmax.f32 %v1974, -1.0
  %v1976 = vadd.f32 %v1855, 1.0
  %v1977 = vadd.f32 %v1895, 1.0
  %v1978 = vadd.f32 %v1935, 1.0
  %v1979 = vadd.f32 %v1975, 1.0
  %v1980 = vmul.f32 %v1808, %v1976
  %v1981 = vmul.f32 %v1809, %v1977
  %v1982 = vmul.f32 %v1810, %v1978
  %v1983 = vmul.f32 %v1811, %v1979
  %s1984 = scalar_lea.vmem %s8, 32
  %v1985 = vld [vmem:[%s1984] sm:$0xff]
  %v1986 = vld [vmem:[%s1984 + $0x8] sm:$0xff]
  %v1987 = vld [vmem:[%s1984 + $0x10] sm:$0xff]
  %v1988 = vld [vmem:[%s1984 + $0x18] sm:$0xff]
  %1990 = vset.pattern.permute.xlu0 0
  %1991 = vperm.xlu0 %1990, %v1985
  %v1992 = vpop.permute.xlu0 %1991
  %1995 = vset.pattern.permute.xlu0 0
  %1996 = vperm.xlu0 %1995, %v1986
  %v1997 = vpop.permute.xlu0 %1996
  %2000 = vset.pattern.permute.xlu0 0
  %2001 = vperm.xlu0 %2000, %v1987
  %v2002 = vpop.permute.xlu0 %2001
  %2005 = vset.pattern.permute.xlu0 0
  %2006 = vperm.xlu0 %2005, %v1988
  %v2007 = vpop.permute.xlu0 %2006
  %v2009 = vmul.f32 %v1980, %v1992
  %v2010 = vmul.f32 %v1981, %v1997
  %v2011 = vmul.f32 %v1982, %v2002
  %v2012 = vmul.f32 %v1983, %v2007
  %s2013 = scalar_lea.vmem %s9, 32
  %v2014 = vld [vmem:[%s2013] sm:$0xff]
  %v2015 = vld [vmem:[%s2013 + $0x8] sm:$0xff]
  %v2016 = vld [vmem:[%s2013 + $0x10] sm:$0xff]
  %v2017 = vld [vmem:[%s2013 + $0x18] sm:$0xff]
  %2019 = vset.pattern.permute.xlu0 0
  %2020 = vperm.xlu0 %2019, %v2014
  %v2021 = vpop.permute.xlu0 %2020
  %2024 = vset.pattern.permute.xlu0 0
  %2025 = vperm.xlu0 %2024, %v2015
  %v2026 = vpop.permute.xlu0 %2025
  %2029 = vset.pattern.permute.xlu0 0
  %2030 = vperm.xlu0 %2029, %v2016
  %v2031 = vpop.permute.xlu0 %2030
  %2034 = vset.pattern.permute.xlu0 0
  %2035 = vperm.xlu0 %2034, %v2017
  %v2036 = vpop.permute.xlu0 %2035
  %v2038 = vadd.f32 %v2009, %v2021
  %v2039 = vadd.f32 %v2010, %v2026
  %v2040 = vadd.f32 %v2011, %v2031
  %v2041 = vadd.f32 %v2012, %v2036
  %v2042 = vadd.f32 %v2038, %v1315
  %v2043 = vadd.f32 %v2039, %v1316
  %v2044 = vadd.f32 %v2040, %v1317
  %v2045 = vadd.f32 %v2041, %v1318
  %s2046 = scalar_lea.vmem %s10, 32
  %v2047 = vld [vmem:[%s2046] sm:$0xff]
  %v2048 = vld [vmem:[%s2046 + $0x8] sm:$0xff]
  %v2049 = vld [vmem:[%s2046 + $0x10] sm:$0xff]
  %v2050 = vld [vmem:[%s2046 + $0x18] sm:$0xff]
  %s2051 = scalar_lea.vmem %s11, 32
  %v2052 = vld [vmem:[%s2051] sm:$0xff]
  %v2053 = vld [vmem:[%s2051 + $0x8] sm:$0xff]
  %v2054 = vld [vmem:[%s2051 + $0x10] sm:$0xff]
  %v2055 = vld [vmem:[%s2051 + $0x18] sm:$0xff]
  %2057 = vset.pattern.permute.xlu0 0
  %2058 = vperm.xlu0 %2057, %v2052
  %v2059 = vpop.permute.xlu0 %2058
  %2062 = vset.pattern.permute.xlu0 0
  %2063 = vperm.xlu0 %2062, %v2053
  %v2064 = vpop.permute.xlu0 %2063
  %2067 = vset.pattern.permute.xlu0 0
  %2068 = vperm.xlu0 %2067, %v2054
  %v2069 = vpop.permute.xlu0 %2068
  %2072 = vset.pattern.permute.xlu0 0
  %2073 = vperm.xlu0 %2072, %v2055
  %v2074 = vpop.permute.xlu0 %2073
  %v2077 = vsel %vm1045, %v2047, 0
  %v2080 = vsel %vm1045, %v2048, 0
  %v2083 = vsel %vm1045, %v2049, 0
  %v2086 = vsel %vm1045, %v2050, 0
  %2088 = vmatpush.msra.mxu0 0.0
  %2089 = vmatpush.msra.mxu0 0.0
  %2090 = vmatpush.msra.mxu0 0.0
  %2091 = vmatpush.msra.mxu0 0.0
  %2092 = vmatpush.msra.mxu0 0.0
  %2093 = vmatpush.msra.mxu0 0.0
  %2094 = vmatpush.msra.mxu0 0.0
  %2095 = vmatpush.msra.mxu0 0.0
  %2096 = vmatpush.msra.mxu0 0.0
  %2097 = vmatpush.msra.mxu0 0.0
  %2098 = vmatpush.msra.mxu0 0.0
  %2099 = vmatpush.msra.mxu0 0.0
  %2100 = vmatpush.msra.mxu0 %v2045
  %2101 = vmatpush.msra.mxu0 %v2044
  %2102 = vmatpush.msra.mxu0 %v2043
  %2103 = vmatpush.msra.mxu0 %v2042
  %2104 = vmatmul.f32.gmra.mxu0 %v2077
  %v2105 = vpop.f32.mrf.mxu0
  %v2106 = vadd.f32 %v2059, %v2105
  %2107 = vmatmul.f32.gmra.mxu0 %v2080
  %v2108 = vpop.f32.mrf.mxu0
  %v2109 = vadd.f32 %v2064, %v2108
  %2110 = vmatmul.f32.gmra.mxu0 %v2083
  %v2111 = vpop.f32.mrf.mxu0
  %v2112 = vadd.f32 %v2069, %v2111
  %2113 = vmatmul.f32.gmra.mxu0 %v2086
  %v2114 = vpop.f32.mrf.mxu0
  %v2115 = vadd.f32 %v2074, %v2114
  %2116 = vdwg.mxu0
  %v2117 = vmul.f32 %v2106, 0.5
  %v2118 = vmul.f32 %v2109, 0.5
  %v2119 = vmul.f32 %v2112, 0.5
  %v2120 = vmul.f32 %v2115, 0.5
  %v2121 = vmul.f32 %v2106, 0.70710677
  %v2122 = vmul.f32 %v2109, 0.70710677
  %v2123 = vmul.f32 %v2112, 0.70710677
  %v2124 = vmul.f32 %v2115, 0.70710677
  %v2125 = vmul.f32 %v2121, %v2121
  %v2126 = vmin.f32 16.0, %v2125
  %v2127 = vmul.f32 %v2126, 2.1237322e-06
  %v2128 = vadd.f32 %v2127, 0.00028619796
  %v2129 = vmul.f32 %v2126, %v2128
  %v2130 = vadd.f32 %v2129, 0.0036580483
  %v2131 = vmul.f32 %v2126, %v2130
  %v2132 = vadd.f32 %v2131, 0.05243302
  %v2133 = vmul.f32 %v2126, %v2132
  %v2134 = vadd.f32 %v2133, 0.18741608
  %v2135 = vmul.f32 %v2126, %v2134
  %v2136 = vadd.f32 %v2135, 1.1283791
  %v2137 = vmul.f32 %v2121, %v2136
  %v2138 = vmul.f32 %v2126, 3.8918573e-05
  %v2139 = vadd.f32 %v2138, 0.001143296
  %v2140 = vmul.f32 %v2126, %v2139
  %v2141 = vadd.f32 %v2140, 0.014752088
  %v2142 = vmul.f32 %v2126, %v2141
  %v2143 = vadd.f32 %v2142, 0.112945676
  %v2144 = vmul.f32 %v2126, %v2143
  %v2145 = vadd.f32 %v2144, 0.4994258
  %v2146 = vmul.f32 %v2126, %v2145
  %v2147 = vadd.f32 %v2146, 1.0
  %v2148 = vrcp.pop %v2147
  %v2149 = vmul.f32 %v2147, %v2148
  %v2150 = vsub.f32 1.0, %v2149
  %v2151 = vmul.f32 %v2148, %v2150
  %v2152 = vadd.f32 %v2148, %v2151
  %vm2153 = vweird.f32 %v2147
  %vm2154 = vweird.f32 %v2148
  %vm2155 = vmor %vm2153, %vm2154
  %v2156 = vsel %vm2155, %v2148, %v2152
  %v2157 = vand.u32 2147483647, %v2147
  %vm2158 = vcmp.eq.f32.partialorder %v2157, 8.507059e+37
  %v2159 = vand.u32 %v2147, 2147483648
  %v2160 = vor.u32 1.1754944e-38, %v2159
  %v2161 = vsel %vm2158, %v2160, %v2156
  %v2162 = vmul.f32 %v2137, %v2161
  %v2163 = vmin.f32 %v2162, 1.0
  %v2164 = vmax.f32 %v2163, -1.0
  %v2165 = vmul.f32 %v2122, %v2122
  %v2166 = vmin.f32 16.0, %v2165
  %v2167 = vmul.f32 %v2166, 2.1237322e-06
  %v2168 = vadd.f32 %v2167, 0.00028619796
  %v2169 = vmul.f32 %v2166, %v2168
  %v2170 = vadd.f32 %v2169, 0.0036580483
  %v2171 = vmul.f32 %v2166, %v2170
  %v2172 = vadd.f32 %v2171, 0.05243302
  %v2173 = vmul.f32 %v2166, %v2172
  %v2174 = vadd.f32 %v2173, 0.18741608
  %v2175 = vmul.f32 %v2166, %v2174
  %v2176 = vadd.f32 %v2175, 1.1283791
  %v2177 = vmul.f32 %v2122, %v2176
  %v2178 = vmul.f32 %v2166, 3.8918573e-05
  %v2179 = vadd.f32 %v2178, 0.001143296
  %v2180 = vmul.f32 %v2166, %v2179
  %v2181 = vadd.f32 %v2180, 0.014752088
  %v2182 = vmul.f32 %v2166, %v2181
  %v2183 = vadd.f32 %v2182, 0.112945676
  %v2184 = vmul.f32 %v2166, %v2183
  %v2185 = vadd.f32 %v2184, 0.4994258
  %v2186 = vmul.f32 %v2166, %v2185
  %v2187 = vadd.f32 %v2186, 1.0
  %v2188 = vrcp.pop %v2187
  %v2189 = vmul.f32 %v2187, %v2188
  %v2190 = vsub.f32 1.0, %v2189
  %v2191 = vmul.f32 %v2188, %v2190
  %v2192 = vadd.f32 %v2188, %v2191
  %vm2193 = vweird.f32 %v2187
  %vm2194 = vweird.f32 %v2188
  %vm2195 = vmor %vm2193, %vm2194
  %v2196 = vsel %vm2195, %v2188, %v2192
  %v2197 = vand.u32 2147483647, %v2187
  %vm2198 = vcmp.eq.f32.partialorder %v2197, 8.507059e+37
  %v2199 = vand.u32 %v2187, 2147483648
  %v2200 = vor.u32 1.1754944e-38, %v2199
  %v2201 = vsel %vm2198, %v2200, %v2196
  %v2202 = vmul.f32 %v2177, %v2201
  %v2203 = vmin.f32 %v2202, 1.0
  %v2204 = vmax.f32 %v2203, -1.0
  %v2205 = vmul.f32 %v2123, %v2123
  %v2206 = vmin.f32 16.0, %v2205
  %v2207 = vmul.f32 %v2206, 2.1237322e-06
  %v2208 = vadd.f32 %v2207, 0.00028619796
  %v2209 = vmul.f32 %v2206, %v2208
  %v2210 = vadd.f32 %v2209, 0.0036580483
  %v2211 = vmul.f32 %v2206, %v2210
  %v2212 = vadd.f32 %v2211, 0.05243302
  %v2213 = vmul.f32 %v2206, %v2212
  %v2214 = vadd.f32 %v2213, 0.18741608
  %v2215 = vmul.f32 %v2206, %v2214
  %v2216 = vadd.f32 %v2215, 1.1283791
  %v2217 = vmul.f32 %v2123, %v2216
  %v2218 = vmul.f32 %v2206, 3.8918573e-05
  %v2219 = vadd.f32 %v2218, 0.001143296
  %v2220 = vmul.f32 %v2206, %v2219
  %v2221 = vadd.f32 %v2220, 0.014752088
  %v2222 = vmul.f32 %v2206, %v2221
  %v2223 = vadd.f32 %v2222, 0.112945676
  %v2224 = vmul.f32 %v2206, %v2223
  %v2225 = vadd.f32 %v2224, 0.4994258
  %v2226 = vmul.f32 %v2206, %v2225
  %v2227 = vadd.f32 %v2226, 1.0
  %v2228 = vrcp.pop %v2227
  %v2229 = vmul.f32 %v2227, %v2228
  %v2230 = vsub.f32 1.0, %v2229
  %v2231 = vmul.f32 %v2228, %v2230
  %v2232 = vadd.f32 %v2228, %v2231
  %vm2233 = vweird.f32 %v2227
  %vm2234 = vweird.f32 %v2228
  %vm2235 = vmor %vm2233, %vm2234
  %v2236 = vsel %vm2235, %v2228, %v2232
  %v2237 = vand.u32 2147483647, %v2227
  %vm2238 = vcmp.eq.f32.partialorder %v2237, 8.507059e+37
  %v2239 = vand.u32 %v2227, 2147483648
  %v2240 = vor.u32 1.1754944e-38, %v2239
  %v2241 = vsel %vm2238, %v2240, %v2236
  %v2242 = vmul.f32 %v2217, %v2241
  %v2243 = vmin.f32 %v2242, 1.0
  %v2244 = vmax.f32 %v2243, -1.0
  %v2245 = vmul.f32 %v2124, %v2124
  %v2246 = vmin.f32 16.0, %v2245
  %v2247 = vmul.f32 %v2246, 2.1237322e-06
  %v2248 = vadd.f32 %v2247, 0.00028619796
  %v2249 = vmul.f32 %v2246, %v2248
  %v2250 = vadd.f32 %v2249, 0.0036580483
  %v2251 = vmul.f32 %v2246, %v2250
  %v2252 = vadd.f32 %v2251, 0.05243302
  %v2253 = vmul.f32 %v2246, %v2252
  %v2254 = vadd.f32 %v2253, 0.18741608
  %v2255 = vmul.f32 %v2246, %v2254
  %v2256 = vadd.f32 %v2255, 1.1283791
  %v2257 = vmul.f32 %v2124, %v2256
  %v2258 = vmul.f32 %v2246, 3.8918573e-05
  %v2259 = vadd.f32 %v2258, 0.001143296
  %v2260 = vmul.f32 %v2246, %v2259
  %v2261 = vadd.f32 %v2260, 0.014752088
  %v2262 = vmul.f32 %v2246, %v2261
  %v2263 = vadd.f32 %v2262, 0.112945676
  %v2264 = vmul.f32 %v2246, %v2263
  %v2265 = vadd.f32 %v2264, 0.4994258
  %v2266 = vmul.f32 %v2246, %v2265
  %v2267 = vadd.f32 %v2266, 1.0
  %v2268 = vrcp.pop %v2267
  %v2269 = vmul.f32 %v2267, %v2268
  %v2270 = vsub.f32 1.0, %v2269
  %v2271 = vmul.f32 %v2268, %v2270
  %v2272 = vadd.f32 %v2268, %v2271
  %vm2273 = vweird.f32 %v2267
  %vm2274 = vweird.f32 %v2268
  %vm2275 = vmor %vm2273, %vm2274
  %v2276 = vsel %vm2275, %v2268, %v2272
  %v2277 = vand.u32 2147483647, %v2267
  %vm2278 = vcmp.eq.f32.partialorder %v2277, 8.507059e+37
  %v2279 = vand.u32 %v2267, 2147483648
  %v2280 = vor.u32 1.1754944e-38, %v2279
  %v2281 = vsel %vm2278, %v2280, %v2276
  %v2282 = vmul.f32 %v2257, %v2281
  %v2283 = vmin.f32 %v2282, 1.0
  %v2284 = vmax.f32 %v2283, -1.0
  %v2285 = vadd.f32 %v2164, 1.0
  %v2286 = vadd.f32 %v2204, 1.0
  %v2287 = vadd.f32 %v2244, 1.0
  %v2288 = vadd.f32 %v2284, 1.0
  %v2289 = vmul.f32 %v2117, %v2285
  %v2290 = vmul.f32 %v2118, %v2286
  %v2291 = vmul.f32 %v2119, %v2287
  %v2292 = vmul.f32 %v2120, %v2288
  %s2293 = scalar_lea.vmem %s12, 32
  %v2294 = vld [vmem:[%s2293] sm:$0xff]
  %v2295 = vld [vmem:[%s2293 + $0x8] sm:$0xff]
  %v2296 = vld [vmem:[%s2293 + $0x10] sm:$0xff]
  %v2297 = vld [vmem:[%s2293 + $0x18] sm:$0xff]
  %2299 = vset.pattern.permute.xlu0 0
  %2300 = vperm.xlu0 %2299, %v2294
  %v2301 = vpop.permute.xlu0 %2300
  %2304 = vset.pattern.permute.xlu0 0
  %2305 = vperm.xlu0 %2304, %v2295
  %v2306 = vpop.permute.xlu0 %2305
  %2309 = vset.pattern.permute.xlu0 0
  %2310 = vperm.xlu0 %2309, %v2296
  %v2311 = vpop.permute.xlu0 %2310
  %2314 = vset.pattern.permute.xlu0 0
  %2315 = vperm.xlu0 %2314, %v2297
  %v2316 = vpop.permute.xlu0 %2315
  %v2318 = vmul.f32 %v2289, %v2301
  %v2319 = vmul.f32 %v2290, %v2306
  %v2320 = vmul.f32 %v2291, %v2311
  %v2321 = vmul.f32 %v2292, %v2316
  %s2322 = scalar_lea.vmem %s13, 32
  %v2323 = vld [vmem:[%s2322] sm:$0xff]
  %v2324 = vld [vmem:[%s2322 + $0x8] sm:$0xff]
  %v2325 = vld [vmem:[%s2322 + $0x10] sm:$0xff]
  %v2326 = vld [vmem:[%s2322 + $0x18] sm:$0xff]
  %2328 = vset.pattern.permute.xlu0 0
  %2329 = vperm.xlu0 %2328, %v2323
  %v2330 = vpop.permute.xlu0 %2329
  %2333 = vset.pattern.permute.xlu0 0
  %2334 = vperm.xlu0 %2333, %v2324
  %v2335 = vpop.permute.xlu0 %2334
  %2338 = vset.pattern.permute.xlu0 0
  %2339 = vperm.xlu0 %2338, %v2325
  %v2340 = vpop.permute.xlu0 %2339
  %2343 = vset.pattern.permute.xlu0 0
  %2344 = vperm.xlu0 %2343, %v2326
  %v2345 = vpop.permute.xlu0 %2344
  %v2347 = vadd.f32 %v2318, %v2330
  %v2348 = vadd.f32 %v2319, %v2335
  %v2349 = vadd.f32 %v2320, %v2340
  %v2350 = vadd.f32 %v2321, %v2345
  %2351 = vmatpush.msra.mxu0 %v384
  %2352 = vmatpush.msra.mxu0 %v383
  %2353 = vmatpush.msra.mxu0 %v382
  %2354 = vmatpush.msra.mxu0 %v381
  %2355 = vmatpush.msra.mxu0 %v380
  %2356 = vmatpush.msra.mxu0 %v379
  %2357 = vmatpush.msra.mxu0 %v378
  %2358 = vmatpush.msra.mxu0 %v377
  %2359 = vmatpush.msra.mxu0 %v376
  %2360 = vmatpush.msra.mxu0 %v375
  %2361 = vmatpush.msra.mxu0 %v374
  %2362 = vmatpush.msra.mxu0 %v373
  %2363 = vmatpush.msra.mxu0 %v372
  %2364 = vmatpush.msra.mxu0 %v371
  %2365 = vmatpush.msra.mxu0 %v370
  %2366 = vmatpush.msra.mxu0 %v369
  %2367 = vmatmul.f32.gmra.mxu0 %v2347
  %v2368 = vpop.f32.mrf.mxu0
  %v2369 = vadd.f32 0.0, %v2368
  %2370 = vmatmul.f32.gmra.mxu0 %v2348
  %v2371 = vpop.f32.mrf.mxu0
  %v2372 = vadd.f32 0.0, %v2371
  %2373 = vmatmul.f32.gmra.mxu0 %v2349
  %v2374 = vpop.f32.mrf.mxu0
  %v2375 = vadd.f32 0.0, %v2374
  %2376 = vmatmul.f32.gmra.mxu0 %v2350
  %v2377 = vpop.f32.mrf.mxu0
  %v2378 = vadd.f32 0.0, %v2377
  %2379 = vdwg.mxu0
  %s2380 = scalar_lea.vmem %s14, 16
  %v2381 = vld [vmem:[%s2380] sm:$0xff]
  %v2382 = vld [vmem:[%s2380 + $0x8] sm:$0x3]
  %s2383 = scalar_lea.vmem %s15, 16
  %v2384 = vld [vmem:[%s2383] sm:$0xff]
  %v2385 = vld [vmem:[%s2383 + $0x8] sm:$0x3]
  %2387 = vset.pattern.permute.xlu0 0
  %2388 = vperm.xlu0 %2387, %v2384
  %v2389 = vpop.permute.xlu0 %2388
  %2392 = vset.pattern.permute.xlu0 0
  %2393 = vperm.xlu0 %2392, %v2385
  %v2394 = vpop.permute.xlu0 %2393
  %v2397 = vsel %vm1045, %v2381, 0
  %v2400 = vsel %vm1045, %v2382, 0
  %2402 = vmatpush.msra.mxu0 0.0
  %2403 = vmatpush.msra.mxu0 0.0
  %2404 = vmatpush.msra.mxu0 0.0
  %2405 = vmatpush.msra.mxu0 0.0
  %2406 = vmatpush.msra.mxu0 0.0
  %2407 = vmatpush.msra.mxu0 0.0
  %2408 = vmatpush.msra.mxu0 0.0
  %2409 = vmatpush.msra.mxu0 0.0
  %2410 = vmatpush.msra.mxu0 0.0
  %2411 = vmatpush.msra.mxu0 0.0
  %2412 = vmatpush.msra.mxu0 0.0
  %2413 = vmatpush.msra.mxu0 0.0
  %2414 = vmatpush.msra.mxu0 %v2378
  %2415 = vmatpush.msra.mxu0 %v2375
  %2416 = vmatpush.msra.mxu0 %v2372
  %2417 = vmatpush.msra.mxu0 %v2369
  %2418 = vmatmul.f32.gmra.mxu0 %v2397
  %v2419 = vpop.f32.mrf.mxu0
  %v2420 = vadd.f32 %v2389, %v2419
  %2421 = vmatmul.f32.gmra.mxu0 %v2400
  %v2422 = vpop.f32.mrf.mxu0
  %v2423 = vadd.f32 %v2394, %v2422
  %2424 = vdwg.mxu0
  %v2425 = vadd.f32 %v1452, %v2420
  %v2426 = vadd.f32 %v1453, %v2423
  %v2427 = vsel %vm1393, %v2425, 0.0
  %v2428 = vsel %vm1395, %v2426, 0.0
  %v2429 = vadd.f32 %v2427, %v2428
  %v2430 = vrot.slane %v2429, 4
  %v2431 = vadd.f32 %v2429, %v2430
  %v2432 = vrot.slane %v2431, 2
  %v2433 = vadd.f32 %v2431, %v2432
  %v2434 = vrot.slane %v2433, 1
  %v2435 = vadd.f32 %v2433, %v2434
  %v2436 = vmul.f32 %v2435, %v1410
  %v2437 = vsub.f32 %v2425, %v2436
  %v2438 = vsub.f32 %v2426, %v2436
  %v2439 = vadd.f32 %v2437, %v1417
  %v2440 = vadd.f32 %v2438, %v1422
  %v2441 = vsel %vm1393, %v2439, -inf
  %v2442 = vsel %vm1395, %v2440, -inf
  %v2443 = vmax.f32 %v2441, %v2442
  %v2444 = vrot.slane %v2443, 4
  %v2445 = vmax.f32 %v2443, %v2444
  %v2446 = vrot.slane %v2445, 2
  %v2447 = vmax.f32 %v2445, %v2446
  %v2448 = vrot.slane %v2447, 1
  %v2449 = vmax.f32 %v2447, %v2448
  %v2450 = vsub.f32 %v2439, %v2449
  %v2451 = vsub.f32 %v2440, %v2449
  %v2452 = vmul.f32 %v2450, 1.442695
  %v2453 = vpow.pop %v2452
  %v2454 = vmul.f32 %v2451, 1.442695
  %v2455 = vpow.pop %v2454
  %v2456 = vsel %vm1393, %v2453, 0.0
  %v2457 = vsel %vm1395, %v2455, 0.0
  %v2458 = vadd.f32 %v2456, %v2457
  %v2459 = vrot.slane %v2458, 4
  %v2460 = vadd.f32 %v2458, %v2459
  %v2461 = vrot.slane %v2460, 2
  %v2462 = vadd.f32 %v2460, %v2461
  %v2463 = vrot.slane %v2462, 1
  %v2464 = vadd.f32 %v2462, %v2463
  %v2465 = vlog2.pop %v2464
  %v2466 = vmul.f32 %v2465, 0.6931472
  %v2467 = vsub.f32 %v2450, %v2466
  %v2468 = vsub.f32 %v2451, %v2466
  %s2469 = scalar_lea.vmem %s6, 64
  %v2470 = vld [vmem:[%s2469] sm:$0xff]
  %v2471 = vld [vmem:[%s2469 + $0x8] sm:$0xff]
  %v2472 = vld [vmem:[%s2469 + $0x10] sm:$0xff]
  %v2473 = vld [vmem:[%s2469 + $0x18] sm:$0xff]
  %2474 = vrot.lane.b32.xlu0 %v2347, 9
  %v2475 = vpop.permute.xlu0 %2474
  %2476 = vrot.lane.b32.xlu0 %v2348, 9
  %v2477 = vpop.permute.xlu0 %2476
  %2478 = vrot.lane.b32.xlu0 %v2349, 9
  %v2479 = vpop.permute.xlu0 %2478
  %2480 = vrot.lane.b32.xlu0 %v2350, 9
  %v2481 = vpop.permute.xlu0 %2480
  %v2482 = vmul.f32 %v2475, %v399
  %v2483 = vmul.f32 %v2477, %v399
  %v2484 = vmul.f32 %v2479, %v399
  %v2485 = vmul.f32 %v2481, %v399
  %2487 = vset.pattern.permute.xlu0 0
  %2488 = vperm.xlu0 %2487, %v2470
  %v2489 = vpop.permute.xlu0 %2488
  %2492 = vset.pattern.permute.xlu0 0
  %2493 = vperm.xlu0 %2492, %v2471
  %v2494 = vpop.permute.xlu0 %2493
  %2497 = vset.pattern.permute.xlu0 0
  %2498 = vperm.xlu0 %2497, %v2472
  %v2499 = vpop.permute.xlu0 %2498
  %2502 = vset.pattern.permute.xlu0 0
  %2503 = vperm.xlu0 %2502, %v2473
  %v2504 = vpop.permute.xlu0 %2503
  %v2506 = vmul.f32 %v2482, %v2489
  %v2507 = vmul.f32 %v2483, %v2494
  %v2508 = vmul.f32 %v2484, %v2499
  %v2509 = vmul.f32 %v2485, %v2504
  %v2510 = vadd.f32 %v2506, 0.0
  %v2511 = vadd.f32 %v2507, 0.0
  %v2512 = vadd.f32 %v2508, 0.0
  %v2513 = vadd.f32 %v2509, 0.0
  %2514 = vrot.lane.b32.xlu0 %v2347, 8
  %v2515 = vpop.permute.xlu0 %2514
  %2516 = vrot.lane.b32.xlu0 %v2348, 8
  %v2517 = vpop.permute.xlu0 %2516
  %2518 = vrot.lane.b32.xlu0 %v2349, 8
  %v2519 = vpop.permute.xlu0 %2518
  %2520 = vrot.lane.b32.xlu0 %v2350, 8
  %v2521 = vpop.permute.xlu0 %2520
  %v2522 = vmul.f32 %v2515, %v444
  %v2523 = vmul.f32 %v2517, %v444
  %v2524 = vmul.f32 %v2519, %v444
  %v2525 = vmul.f32 %v2521, %v444
  %2526 = vset.pattern.permute.xlu0 1
  %2527 = vperm.xlu0 %2526, %v2470
  %v2528 = vpop.permute.xlu0 %2527
  %2530 = vset.pattern.permute.xlu0 1
  %2531 = vperm.xlu0 %2530, %v2471
  %v2532 = vpop.permute.xlu0 %2531
  %2534 = vset.pattern.permute.xlu0 1
  %2535 = vperm.xlu0 %2534, %v2472
  %v2536 = vpop.permute.xlu0 %2535
  %2538 = vset.pattern.permute.xlu0 1
  %2539 = vperm.xlu0 %2538, %v2473
  %v2540 = vpop.permute.xlu0 %2539
  %v2542 = vmul.f32 %v2522, %v2528
  %v2543 = vmul.f32 %v2523, %v2532
  %v2544 = vmul.f32 %v2524, %v2536
  %v2545 = vmul.f32 %v2525, %v2540
  %v2546 = vadd.f32 %v2510, %v2542
  %v2547 = vadd.f32 %v2511, %v2543
  %v2548 = vadd.f32 %v2512, %v2544
  %v2549 = vadd.f32 %v2513, %v2545
  %2550 = vrot.lane.b32.xlu0 %v2347, 7
  %v2551 = vpop.permute.xlu0 %2550
  %2552 = vrot.lane.b32.xlu0 %v2348, 7
  %v2553 = vpop.permute.xlu0 %2552
  %2554 = vrot.lane.b32.xlu0 %v2349, 7
  %v2555 = vpop.permute.xlu0 %2554
  %2556 = vrot.lane.b32.xlu0 %v2350, 7
  %v2557 = vpop.permute.xlu0 %2556
  %v2558 = vmul.f32 %v2551, %v485
  %v2559 = vmul.f32 %v2553, %v485
  %v2560 = vmul.f32 %v2555, %v485
  %v2561 = vmul.f32 %v2557, %v485
  %2562 = vset.pattern.permute.xlu0 2
  %2563 = vperm.xlu0 %2562, %v2470
  %v2564 = vpop.permute.xlu0 %2563
  %2566 = vset.pattern.permute.xlu0 2
  %2567 = vperm.xlu0 %2566, %v2471
  %v2568 = vpop.permute.xlu0 %2567
  %2570 = vset.pattern.permute.xlu0 2
  %2571 = vperm.xlu0 %2570, %v2472
  %v2572 = vpop.permute.xlu0 %2571
  %2574 = vset.pattern.permute.xlu0 2
  %2575 = vperm.xlu0 %2574, %v2473
  %v2576 = vpop.permute.xlu0 %2575
  %v2578 = vmul.f32 %v2558, %v2564
  %v2579 = vmul.f32 %v2559, %v2568
  %v2580 = vmul.f32 %v2560, %v2572
  %v2581 = vmul.f32 %v2561, %v2576
  %v2582 = vadd.f32 %v2546, %v2578
  %v2583 = vadd.f32 %v2547, %v2579
  %v2584 = vadd.f32 %v2548, %v2580
  %v2585 = vadd.f32 %v2549, %v2581
  %2586 = vrot.lane.b32.xlu0 %v2347, 1
  %v2587 = vpop.permute.xlu0 %2586
  %2588 = vrot.lane.b32.xlu0 %v2348, 1
  %v2589 = vpop.permute.xlu0 %2588
  %2590 = vrot.lane.b32.xlu0 %v2349, 1
  %v2591 = vpop.permute.xlu0 %2590
  %2592 = vrot.lane.b32.xlu0 %v2350, 1
  %v2593 = vpop.permute.xlu0 %2592
  %v2594 = vmul.f32 %v2587, %v526
  %v2595 = vmul.f32 %v2589, %v526
  %v2596 = vmul.f32 %v2591, %v526
  %v2597 = vmul.f32 %v2593, %v526
  %2598 = vset.pattern.permute.xlu0 3
  %2599 = vperm.xlu0 %2598, %v2470
  %v2600 = vpop.permute.xlu0 %2599
  %2602 = vset.pattern.permute.xlu0 3
  %2603 = vperm.xlu0 %2602, %v2471
  %v2604 = vpop.permute.xlu0 %2603
  %2606 = vset.pattern.permute.xlu0 3
  %2607 = vperm.xlu0 %2606, %v2472
  %v2608 = vpop.permute.xlu0 %2607
  %2610 = vset.pattern.permute.xlu0 3
  %2611 = vperm.xlu0 %2610, %v2473
  %v2612 = vpop.permute.xlu0 %2611
  %v2614 = vmul.f32 %v2594, %v2600
  %v2615 = vmul.f32 %v2595, %v2604
  %v2616 = vmul.f32 %v2596, %v2608
  %v2617 = vmul.f32 %v2597, %v2612
  %v2618 = vadd.f32 %v2582, %v2614
  %v2619 = vadd.f32 %v2583, %v2615
  %v2620 = vadd.f32 %v2584, %v2616
  %v2621 = vadd.f32 %v2585, %v2617
  %v2622 = vmul.f32 %v2347, %v559
  %v2623 = vmul.f32 %v2348, %v559
  %v2624 = vmul.f32 %v2349, %v559
  %v2625 = vmul.f32 %v2350, %v559
  %2626 = vset.pattern.permute.xlu0 4
  %2627 = vperm.xlu0 %2626, %v2470
  %v2628 = vpop.permute.xlu0 %2627
  %2630 = vset.pattern.permute.xlu0 4
  %2631 = vperm.xlu0 %2630, %v2471
  %v2632 = vpop.permute.xlu0 %2631
  %2634 = vset.pattern.permute.xlu0 4
  %2635 = vperm.xlu0 %2634, %v2472
  %v2636 = vpop.permute.xlu0 %2635
  %2638 = vset.pattern.permute.xlu0 4
  %2639 = vperm.xlu0 %2638, %v2473
  %v2640 = vpop.permute.xlu0 %2639
  %v2642 = vmul.f32 %v2622, %v2628
  %v2643 = vmul.f32 %v2623, %v2632
  %v2644 = vmul.f32 %v2624, %v2636
  %v2645 = vmul.f32 %v2625, %v2640
  %v2646 = vadd.f32 %v2618, %v2642
  %v2647 = vadd.f32 %v2619, %v2643
  %v2648 = vadd.f32 %v2620, %v2644
  %v2649 = vadd.f32 %v2621, %v2645
  %2650 = vrot.lane.b32.xlu0 %v2347, 127
  %v2651 = vpop.permute.xlu0 %2650
  %2652 = vrot.lane.b32.xlu0 %v2348, 127
  %v2653 = vpop.permute.xlu0 %2652
  %2654 = vrot.lane.b32.xlu0 %v2349, 127
  %v2655 = vpop.permute.xlu0 %2654
  %2656 = vrot.lane.b32.xlu0 %v2350, 127
  %v2657 = vpop.permute.xlu0 %2656
  %v2658 = vmul.f32 %v2651, %v600
  %v2659 = vmul.f32 %v2653, %v600
  %v2660 = vmul.f32 %v2655, %v600
  %v2661 = vmul.f32 %v2657, %v600
  %2662 = vset.pattern.permute.xlu0 5
  %2663 = vperm.xlu0 %2662, %v2470
  %v2664 = vpop.permute.xlu0 %2663
  %2666 = vset.pattern.permute.xlu0 5
  %2667 = vperm.xlu0 %2666, %v2471
  %v2668 = vpop.permute.xlu0 %2667
  %2670 = vset.pattern.permute.xlu0 5
  %2671 = vperm.xlu0 %2670, %v2472
  %v2672 = vpop.permute.xlu0 %2671
  %2674 = vset.pattern.permute.xlu0 5
  %2675 = vperm.xlu0 %2674, %v2473
  %v2676 = vpop.permute.xlu0 %2675
  %v2678 = vmul.f32 %v2658, %v2664
  %v2679 = vmul.f32 %v2659, %v2668
  %v2680 = vmul.f32 %v2660, %v2672
  %v2681 = vmul.f32 %v2661, %v2676
  %v2682 = vadd.f32 %v2646, %v2678
  %v2683 = vadd.f32 %v2647, %v2679
  %v2684 = vadd.f32 %v2648, %v2680
  %v2685 = vadd.f32 %v2649, %v2681
  %2686 = vrot.lane.b32.xlu0 %v2347, 121
  %v2687 = vpop.permute.xlu0 %2686
  %2688 = vrot.lane.b32.xlu0 %v2348, 121
  %v2689 = vpop.permute.xlu0 %2688
  %2690 = vrot.lane.b32.xlu0 %v2349, 121
  %v2691 = vpop.permute.xlu0 %2690
  %2692 = vrot.lane.b32.xlu0 %v2350, 121
  %v2693 = vpop.permute.xlu0 %2692
  %v2694 = vmul.f32 %v2687, %v641
  %v2695 = vmul.f32 %v2689, %v641
  %v2696 = vmul.f32 %v2691, %v641
  %v2697 = vmul.f32 %v2693, %v641
  %2698 = vset.pattern.permute.xlu0 6
  %2699 = vperm.xlu0 %2698, %v2470
  %v2700 = vpop.permute.xlu0 %2699
  %2702 = vset.pattern.permute.xlu0 6
  %2703 = vperm.xlu0 %2702, %v2471
  %v2704 = vpop.permute.xlu0 %2703
  %2706 = vset.pattern.permute.xlu0 6
  %2707 = vperm.xlu0 %2706, %v2472
  %v2708 = vpop.permute.xlu0 %2707
  %2710 = vset.pattern.permute.xlu0 6
  %2711 = vperm.xlu0 %2710, %v2473
  %v2712 = vpop.permute.xlu0 %2711
  %v2714 = vmul.f32 %v2694, %v2700
  %v2715 = vmul.f32 %v2695, %v2704
  %v2716 = vmul.f32 %v2696, %v2708
  %v2717 = vmul.f32 %v2697, %v2712
  %v2718 = vadd.f32 %v2682, %v2714
  %v2719 = vadd.f32 %v2683, %v2715
  %v2720 = vadd.f32 %v2684, %v2716
  %v2721 = vadd.f32 %v2685, %v2717
  %2722 = vrot.lane.b32.xlu0 %v2347, 120
  %v2723 = vpop.permute.xlu0 %2722
  %2724 = vrot.lane.b32.xlu0 %v2348, 120
  %v2725 = vpop.permute.xlu0 %2724
  %2726 = vrot.lane.b32.xlu0 %v2349, 120
  %v2727 = vpop.permute.xlu0 %2726
  %2728 = vrot.lane.b32.xlu0 %v2350, 120
  %v2729 = vpop.permute.xlu0 %2728
  %v2730 = vmul.f32 %v2723, %v682
  %v2731 = vmul.f32 %v2725, %v682
  %v2732 = vmul.f32 %v2727, %v682
  %v2733 = vmul.f32 %v2729, %v682
  %2734 = vset.pattern.permute.xlu0 7
  %2735 = vperm.xlu0 %2734, %v2470
  %v2736 = vpop.permute.xlu0 %2735
  %2738 = vset.pattern.permute.xlu0 7
  %2739 = vperm.xlu0 %2738, %v2471
  %v2740 = vpop.permute.xlu0 %2739
  %2742 = vset.pattern.permute.xlu0 7
  %2743 = vperm.xlu0 %2742, %v2472
  %v2744 = vpop.permute.xlu0 %2743
  %2746 = vset.pattern.permute.xlu0 7
  %2747 = vperm.xlu0 %2746, %v2473
  %v2748 = vpop.permute.xlu0 %2747
  %v2750 = vmul.f32 %v2730, %v2736
  %v2751 = vmul.f32 %v2731, %v2740
  %v2752 = vmul.f32 %v2732, %v2744
  %v2753 = vmul.f32 %v2733, %v2748
  %v2754 = vadd.f32 %v2718, %v2750
  %v2755 = vadd.f32 %v2719, %v2751
  %v2756 = vadd.f32 %v2720, %v2752
  %v2757 = vadd.f32 %v2721, %v2753
  %2758 = vrot.lane.b32.xlu0 %v2347, 119
  %v2759 = vpop.permute.xlu0 %2758
  %2760 = vrot.lane.b32.xlu0 %v2348, 119
  %v2761 = vpop.permute.xlu0 %2760
  %2762 = vrot.lane.b32.xlu0 %v2349, 119
  %v2763 = vpop.permute.xlu0 %2762
  %2764 = vrot.lane.b32.xlu0 %v2350, 119
  %v2765 = vpop.permute.xlu0 %2764
  %v2766 = vmul.f32 %v2759, %v723
  %v2767 = vmul.f32 %v2761, %v723
  %v2768 = vmul.f32 %v2763, %v723
  %v2769 = vmul.f32 %v2765, %v723
  %2770 = vset.pattern.permute.xlu0 8
  %2771 = vperm.xlu0 %2770, %v2470
  %v2772 = vpop.permute.xlu0 %2771
  %2774 = vset.pattern.permute.xlu0 8
  %2775 = vperm.xlu0 %2774, %v2471
  %v2776 = vpop.permute.xlu0 %2775
  %2778 = vset.pattern.permute.xlu0 8
  %2779 = vperm.xlu0 %2778, %v2472
  %v2780 = vpop.permute.xlu0 %2779
  %2782 = vset.pattern.permute.xlu0 8
  %2783 = vperm.xlu0 %2782, %v2473
  %v2784 = vpop.permute.xlu0 %2783
  %v2786 = vmul.f32 %v2766, %v2772
  %v2787 = vmul.f32 %v2767, %v2776
  %v2788 = vmul.f32 %v2768, %v2780
  %v2789 = vmul.f32 %v2769, %v2784
  %v2790 = vadd.f32 %v2754, %v2786
  %v2791 = vadd.f32 %v2755, %v2787
  %v2792 = vadd.f32 %v2756, %v2788
  %v2793 = vadd.f32 %v2757, %v2789
  %s2794 = scalar_lea.vmem %s7, 64
  %v2795 = vld [vmem:[%s2794] sm:$0xff]
  %v2796 = vld [vmem:[%s2794 + $0x8] sm:$0xff]
  %v2797 = vld [vmem:[%s2794 + $0x10] sm:$0xff]
  %v2798 = vld [vmem:[%s2794 + $0x18] sm:$0xff]
  %2800 = vset.pattern.permute.xlu0 0
  %2801 = vperm.xlu0 %2800, %v2795
  %v2802 = vpop.permute.xlu0 %2801
  %2805 = vset.pattern.permute.xlu0 0
  %2806 = vperm.xlu0 %2805, %v2796
  %v2807 = vpop.permute.xlu0 %2806
  %2810 = vset.pattern.permute.xlu0 0
  %2811 = vperm.xlu0 %2810, %v2797
  %v2812 = vpop.permute.xlu0 %2811
  %2815 = vset.pattern.permute.xlu0 0
  %2816 = vperm.xlu0 %2815, %v2798
  %v2817 = vpop.permute.xlu0 %2816
  %v2819 = vadd.f32 %v2790, %v2802
  %v2820 = vadd.f32 %v2791, %v2807
  %v2821 = vadd.f32 %v2792, %v2812
  %v2822 = vadd.f32 %v2793, %v2817
  %v2823 = vmul.f32 %v2819, 0.5
  %v2824 = vmul.f32 %v2820, 0.5
  %v2825 = vmul.f32 %v2821, 0.5
  %v2826 = vmul.f32 %v2822, 0.5
  %v2827 = vmul.f32 %v2819, 0.70710677
  %v2828 = vmul.f32 %v2820, 0.70710677
  %v2829 = vmul.f32 %v2821, 0.70710677
  %v2830 = vmul.f32 %v2822, 0.70710677
  %v2831 = vmul.f32 %v2827, %v2827
  %v2832 = vmin.f32 16.0, %v2831
  %v2833 = vmul.f32 %v2832, 2.1237322e-06
  %v2834 = vadd.f32 %v2833, 0.00028619796
  %v2835 = vmul.f32 %v2832, %v2834
  %v2836 = vadd.f32 %v2835, 0.0036580483
  %v2837 = vmul.f32 %v2832, %v2836
  %v2838 = vadd.f32 %v2837, 0.05243302
  %v2839 = vmul.f32 %v2832, %v2838
  %v2840 = vadd.f32 %v2839, 0.18741608
  %v2841 = vmul.f32 %v2832, %v2840
  %v2842 = vadd.f32 %v2841, 1.1283791
  %v2843 = vmul.f32 %v2827, %v2842
  %v2844 = vmul.f32 %v2832, 3.8918573e-05
  %v2845 = vadd.f32 %v2844, 0.001143296
  %v2846 = vmul.f32 %v2832, %v2845
  %v2847 = vadd.f32 %v2846, 0.014752088
  %v2848 = vmul.f32 %v2832, %v2847
  %v2849 = vadd.f32 %v2848, 0.112945676
  %v2850 = vmul.f32 %v2832, %v2849
  %v2851 = vadd.f32 %v2850, 0.4994258
  %v2852 = vmul.f32 %v2832, %v2851
  %v2853 = vadd.f32 %v2852, 1.0
  %v2854 = vrcp.pop %v2853
  %v2855 = vmul.f32 %v2853, %v2854
  %v2856 = vsub.f32 1.0, %v2855
  %v2857 = vmul.f32 %v2854, %v2856
  %v2858 = vadd.f32 %v2854, %v2857
  %vm2859 = vweird.f32 %v2853
  %vm2860 = vweird.f32 %v2854
  %vm2861 = vmor %vm2859, %vm2860
  %v2862 = vsel %vm2861, %v2854, %v2858
  %v2863 = vand.u32 2147483647, %v2853
  %vm2864 = vcmp.eq.f32.partialorder %v2863, 8.507059e+37
  %v2865 = vand.u32 %v2853, 2147483648
  %v2866 = vor.u32 1.1754944e-38, %v2865
  %v2867 = vsel %vm2864, %v2866, %v2862
  %v2868 = vmul.f32 %v2843, %v2867
  %v2869 = vmin.f32 %v2868, 1.0
  %v2870 = vmax.f32 %v2869, -1.0
  %v2871 = vmul.f32 %v2828, %v2828
  %v2872 = vmin.f32 16.0, %v2871
  %v2873 = vmul.f32 %v2872, 2.1237322e-06
  %v2874 = vadd.f32 %v2873, 0.00028619796
  %v2875 = vmul.f32 %v2872, %v2874
  %v2876 = vadd.f32 %v2875, 0.0036580483
  %v2877 = vmul.f32 %v2872, %v2876
  %v2878 = vadd.f32 %v2877, 0.05243302
  %v2879 = vmul.f32 %v2872, %v2878
  %v2880 = vadd.f32 %v2879, 0.18741608
  %v2881 = vmul.f32 %v2872, %v2880
  %v2882 = vadd.f32 %v2881, 1.1283791
  %v2883 = vmul.f32 %v2828, %v2882
  %v2884 = vmul.f32 %v2872, 3.8918573e-05
  %v2885 = vadd.f32 %v2884, 0.001143296
  %v2886 = vmul.f32 %v2872, %v2885
  %v2887 = vadd.f32 %v2886, 0.014752088
  %v2888 = vmul.f32 %v2872, %v2887
  %v2889 = vadd.f32 %v2888, 0.112945676
  %v2890 = vmul.f32 %v2872, %v2889
  %v2891 = vadd.f32 %v2890, 0.4994258
  %v2892 = vmul.f32 %v2872, %v2891
  %v2893 = vadd.f32 %v2892, 1.0
  %v2894 = vrcp.pop %v2893
  %v2895 = vmul.f32 %v2893, %v2894
  %v2896 = vsub.f32 1.0, %v2895
  %v2897 = vmul.f32 %v2894, %v2896
  %v2898 = vadd.f32 %v2894, %v2897
  %vm2899 = vweird.f32 %v2893
  %vm2900 = vweird.f32 %v2894
  %vm2901 = vmor %vm2899, %vm2900
  %v2902 = vsel %vm2901, %v2894, %v2898
  %v2903 = vand.u32 2147483647, %v2893
  %vm2904 = vcmp.eq.f32.partialorder %v2903, 8.507059e+37
  %v2905 = vand.u32 %v2893, 2147483648
  %v2906 = vor.u32 1.1754944e-38, %v2905
  %v2907 = vsel %vm2904, %v2906, %v2902
  %v2908 = vmul.f32 %v2883, %v2907
  %v2909 = vmin.f32 %v2908, 1.0
  %v2910 = vmax.f32 %v2909, -1.0
  %v2911 = vmul.f32 %v2829, %v2829
  %v2912 = vmin.f32 16.0, %v2911
  %v2913 = vmul.f32 %v2912, 2.1237322e-06
  %v2914 = vadd.f32 %v2913, 0.00028619796
  %v2915 = vmul.f32 %v2912, %v2914
  %v2916 = vadd.f32 %v2915, 0.0036580483
  %v2917 = vmul.f32 %v2912, %v2916
  %v2918 = vadd.f32 %v2917, 0.05243302
  %v2919 = vmul.f32 %v2912, %v2918
  %v2920 = vadd.f32 %v2919, 0.18741608
  %v2921 = vmul.f32 %v2912, %v2920
  %v2922 = vadd.f32 %v2921, 1.1283791
  %v2923 = vmul.f32 %v2829, %v2922
  %v2924 = vmul.f32 %v2912, 3.8918573e-05
  %v2925 = vadd.f32 %v2924, 0.001143296
  %v2926 = vmul.f32 %v2912, %v2925
  %v2927 = vadd.f32 %v2926, 0.014752088
  %v2928 = vmul.f32 %v2912, %v2927
  %v2929 = vadd.f32 %v2928, 0.112945676
  %v2930 = vmul.f32 %v2912, %v2929
  %v2931 = vadd.f32 %v2930, 0.4994258
  %v2932 = vmul.f32 %v2912, %v2931
  %v2933 = vadd.f32 %v2932, 1.0
  %v2934 = vrcp.pop %v2933
  %v2935 = vmul.f32 %v2933, %v2934
  %v2936 = vsub.f32 1.0, %v2935
  %v2937 = vmul.f32 %v2934, %v2936
  %v2938 = vadd.f32 %v2934, %v2937
  %vm2939 = vweird.f32 %v2933
  %vm2940 = vweird.f32 %v2934
  %vm2941 = vmor %vm2939, %vm2940
  %v2942 = vsel %vm2941, %v2934, %v2938
  %v2943 = vand.u32 2147483647, %v2933
  %vm2944 = vcmp.eq.f32.partialorder %v2943, 8.507059e+37
  %v2945 = vand.u32 %v2933, 2147483648
  %v2946 = vor.u32 1.1754944e-38, %v2945
  %v2947 = vsel %vm2944, %v2946, %v2942
  %v2948 = vmul.f32 %v2923, %v2947
  %v2949 = vmin.f32 %v2948, 1.0
  %v2950 = vmax.f32 %v2949, -1.0
  %v2951 = vmul.f32 %v2830, %v2830
  %v2952 = vmin.f32 16.0, %v2951
  %v2953 = vmul.f32 %v2952, 2.1237322e-06
  %v2954 = vadd.f32 %v2953, 0.00028619796
  %v2955 = vmul.f32 %v2952, %v2954
  %v2956 = vadd.f32 %v2955, 0.0036580483
  %v2957 = vmul.f32 %v2952, %v2956
  %v2958 = vadd.f32 %v2957, 0.05243302
  %v2959 = vmul.f32 %v2952, %v2958
  %v2960 = vadd.f32 %v2959, 0.18741608
  %v2961 = vmul.f32 %v2952, %v2960
  %v2962 = vadd.f32 %v2961, 1.1283791
  %v2963 = vmul.f32 %v2830, %v2962
  %v2964 = vmul.f32 %v2952, 3.8918573e-05
  %v2965 = vadd.f32 %v2964, 0.001143296
  %v2966 = vmul.f32 %v2952, %v2965
  %v2967 = vadd.f32 %v2966, 0.014752088
  %v2968 = vmul.f32 %v2952, %v2967
  %v2969 = vadd.f32 %v2968, 0.112945676
  %v2970 = vmul.f32 %v2952, %v2969
  %v2971 = vadd.f32 %v2970, 0.4994258
  %v2972 = vmul.f32 %v2952, %v2971
  %v2973 = vadd.f32 %v2972, 1.0
  %v2974 = vrcp.pop %v2973
  %v2975 = vmul.f32 %v2973, %v2974
  %v2976 = vsub.f32 1.0, %v2975
  %v2977 = vmul.f32 %v2974, %v2976
  %v2978 = vadd.f32 %v2974, %v2977
  %vm2979 = vweird.f32 %v2973
  %vm2980 = vweird.f32 %v2974
  %vm2981 = vmor %vm2979, %vm2980
  %v2982 = vsel %vm2981, %v2974, %v2978
  %v2983 = vand.u32 2147483647, %v2973
  %vm2984 = vcmp.eq.f32.partialorder %v2983, 8.507059e+37
  %v2985 = vand.u32 %v2973, 2147483648
  %v2986 = vor.u32 1.1754944e-38, %v2985
  %v2987 = vsel %vm2984, %v2986, %v2982
  %v2988 = vmul.f32 %v2963, %v2987
  %v2989 = vmin.f32 %v2988, 1.0
  %v2990 = vmax.f32 %v2989, -1.0
  %v2991 = vadd.f32 %v2870, 1.0
  %v2992 = vadd.f32 %v2910, 1.0
  %v2993 = vadd.f32 %v2950, 1.0
  %v2994 = vadd.f32 %v2990, 1.0
  %v2995 = vmul.f32 %v2823, %v2991
  %v2996 = vmul.f32 %v2824, %v2992
  %v2997 = vmul.f32 %v2825, %v2993
  %v2998 = vmul.f32 %v2826, %v2994
  %s2999 = scalar_lea.vmem %s8, 64
  %v3000 = vld [vmem:[%s2999] sm:$0xff]
  %v3001 = vld [vmem:[%s2999 + $0x8] sm:$0xff]
  %v3002 = vld [vmem:[%s2999 + $0x10] sm:$0xff]
  %v3003 = vld [vmem:[%s2999 + $0x18] sm:$0xff]
  %3005 = vset.pattern.permute.xlu0 0
  %3006 = vperm.xlu0 %3005, %v3000
  %v3007 = vpop.permute.xlu0 %3006
  %3010 = vset.pattern.permute.xlu0 0
  %3011 = vperm.xlu0 %3010, %v3001
  %v3012 = vpop.permute.xlu0 %3011
  %3015 = vset.pattern.permute.xlu0 0
  %3016 = vperm.xlu0 %3015, %v3002
  %v3017 = vpop.permute.xlu0 %3016
  %3020 = vset.pattern.permute.xlu0 0
  %3021 = vperm.xlu0 %3020, %v3003
  %v3022 = vpop.permute.xlu0 %3021
  %v3024 = vmul.f32 %v2995, %v3007
  %v3025 = vmul.f32 %v2996, %v3012
  %v3026 = vmul.f32 %v2997, %v3017
  %v3027 = vmul.f32 %v2998, %v3022
  %s3028 = scalar_lea.vmem %s9, 64
  %v3029 = vld [vmem:[%s3028] sm:$0xff]
  %v3030 = vld [vmem:[%s3028 + $0x8] sm:$0xff]
  %v3031 = vld [vmem:[%s3028 + $0x10] sm:$0xff]
  %v3032 = vld [vmem:[%s3028 + $0x18] sm:$0xff]
  %3034 = vset.pattern.permute.xlu0 0
  %3035 = vperm.xlu0 %3034, %v3029
  %v3036 = vpop.permute.xlu0 %3035
  %3039 = vset.pattern.permute.xlu0 0
  %3040 = vperm.xlu0 %3039, %v3030
  %v3041 = vpop.permute.xlu0 %3040
  %3044 = vset.pattern.permute.xlu0 0
  %3045 = vperm.xlu0 %3044, %v3031
  %v3046 = vpop.permute.xlu0 %3045
  %3049 = vset.pattern.permute.xlu0 0
  %3050 = vperm.xlu0 %3049, %v3032
  %v3051 = vpop.permute.xlu0 %3050
  %v3053 = vadd.f32 %v3024, %v3036
  %v3054 = vadd.f32 %v3025, %v3041
  %v3055 = vadd.f32 %v3026, %v3046
  %v3056 = vadd.f32 %v3027, %v3051
  %v3057 = vadd.f32 %v3053, %v2347
  %v3058 = vadd.f32 %v3054, %v2348
  %v3059 = vadd.f32 %v3055, %v2349
  %v3060 = vadd.f32 %v3056, %v2350
  %s3061 = scalar_lea.vmem %s10, 64
  %v3062 = vld [vmem:[%s3061] sm:$0xff]
  %v3063 = vld [vmem:[%s3061 + $0x8] sm:$0xff]
  %v3064 = vld [vmem:[%s3061 + $0x10] sm:$0xff]
  %v3065 = vld [vmem:[%s3061 + $0x18] sm:$0xff]
  %s3066 = scalar_lea.vmem %s11, 64
  %v3067 = vld [vmem:[%s3066] sm:$0xff]
  %v3068 = vld [vmem:[%s3066 + $0x8] sm:$0xff]
  %v3069 = vld [vmem:[%s3066 + $0x10] sm:$0xff]
  %v3070 = vld [vmem:[%s3066 + $0x18] sm:$0xff]
  %3072 = vset.pattern.permute.xlu0 0
  %3073 = vperm.xlu0 %3072, %v3067
  %v3074 = vpop.permute.xlu0 %3073
  %3077 = vset.pattern.permute.xlu0 0
  %3078 = vperm.xlu0 %3077, %v3068
  %v3079 = vpop.permute.xlu0 %3078
  %3082 = vset.pattern.permute.xlu0 0
  %3083 = vperm.xlu0 %3082, %v3069
  %v3084 = vpop.permute.xlu0 %3083
  %3087 = vset.pattern.permute.xlu0 0
  %3088 = vperm.xlu0 %3087, %v3070
  %v3089 = vpop.permute.xlu0 %3088
  %v3092 = vsel %vm1045, %v3062, 0
  %v3095 = vsel %vm1045, %v3063, 0
  %v3098 = vsel %vm1045, %v3064, 0
  %v3101 = vsel %vm1045, %v3065, 0
  %3103 = vmatpush.msra.mxu0 0.0
  %3104 = vmatpush.msra.mxu0 0.0
  %3105 = vmatpush.msra.mxu0 0.0
  %3106 = vmatpush.msra.mxu0 0.0
  %3107 = vmatpush.msra.mxu0 0.0
  %3108 = vmatpush.msra.mxu0 0.0
  %3109 = vmatpush.msra.mxu0 0.0
  %3110 = vmatpush.msra.mxu0 0.0
  %3111 = vmatpush.msra.mxu0 0.0
  %3112 = vmatpush.msra.mxu0 0.0
  %3113 = vmatpush.msra.mxu0 0.0
  %3114 = vmatpush.msra.mxu0 0.0
  %3115 = vmatpush.msra.mxu0 %v3060
  %3116 = vmatpush.msra.mxu0 %v3059
  %3117 = vmatpush.msra.mxu0 %v3058
  %3118 = vmatpush.msra.mxu0 %v3057
  %3119 = vmatmul.f32.gmra.mxu0 %v3092
  %v3120 = vpop.f32.mrf.mxu0
  %v3121 = vadd.f32 %v3074, %v3120
  %3122 = vmatmul.f32.gmra.mxu0 %v3095
  %v3123 = vpop.f32.mrf.mxu0
  %v3124 = vadd.f32 %v3079, %v3123
  %3125 = vmatmul.f32.gmra.mxu0 %v3098
  %v3126 = vpop.f32.mrf.mxu0
  %v3127 = vadd.f32 %v3084, %v3126
  %3128 = vmatmul.f32.gmra.mxu0 %v3101
  %v3129 = vpop.f32.mrf.mxu0
  %v3130 = vadd.f32 %v3089, %v3129
  %3131 = vdwg.mxu0
  %v3132 = vmul.f32 %v3121, 0.5
  %v3133 = vmul.f32 %v3124, 0.5
  %v3134 = vmul.f32 %v3127, 0.5
  %v3135 = vmul.f32 %v3130, 0.5
  %v3136 = vmul.f32 %v3121, 0.70710677
  %v3137 = vmul.f32 %v3124, 0.70710677
  %v3138 = vmul.f32 %v3127, 0.70710677
  %v3139 = vmul.f32 %v3130, 0.70710677
  %v3140 = vmul.f32 %v3136, %v3136
  %v3141 = vmin.f32 16.0, %v3140
  %v3142 = vmul.f32 %v3141, 2.1237322e-06
  %v3143 = vadd.f32 %v3142, 0.00028619796
  %v3144 = vmul.f32 %v3141, %v3143
  %v3145 = vadd.f32 %v3144, 0.0036580483
  %v3146 = vmul.f32 %v3141, %v3145
  %v3147 = vadd.f32 %v3146, 0.05243302
  %v3148 = vmul.f32 %v3141, %v3147
  %v3149 = vadd.f32 %v3148, 0.18741608
  %v3150 = vmul.f32 %v3141, %v3149
  %v3151 = vadd.f32 %v3150, 1.1283791
  %v3152 = vmul.f32 %v3136, %v3151
  %v3153 = vmul.f32 %v3141, 3.8918573e-05
  %v3154 = vadd.f32 %v3153, 0.001143296
  %v3155 = vmul.f32 %v3141, %v3154
  %v3156 = vadd.f32 %v3155, 0.014752088
  %v3157 = vmul.f32 %v3141, %v3156
  %v3158 = vadd.f32 %v3157, 0.112945676
  %v3159 = vmul.f32 %v3141, %v3158
  %v3160 = vadd.f32 %v3159, 0.4994258
  %v3161 = vmul.f32 %v3141, %v3160
  %v3162 = vadd.f32 %v3161, 1.0
  %v3163 = vrcp.pop %v3162
  %v3164 = vmul.f32 %v3162, %v3163
  %v3165 = vsub.f32 1.0, %v3164
  %v3166 = vmul.f32 %v3163, %v3165
  %v3167 = vadd.f32 %v3163, %v3166
  %vm3168 = vweird.f32 %v3162
  %vm3169 = vweird.f32 %v3163
  %vm3170 = vmor %vm3168, %vm3169
  %v3171 = vsel %vm3170, %v3163, %v3167
  %v3172 = vand.u32 2147483647, %v3162
  %vm3173 = vcmp.eq.f32.partialorder %v3172, 8.507059e+37
  %v3174 = vand.u32 %v3162, 2147483648
  %v3175 = vor.u32 1.1754944e-38, %v3174
  %v3176 = vsel %vm3173, %v3175, %v3171
  %v3177 = vmul.f32 %v3152, %v3176
  %v3178 = vmin.f32 %v3177, 1.0
  %v3179 = vmax.f32 %v3178, -1.0
  %v3180 = vmul.f32 %v3137, %v3137
  %v3181 = vmin.f32 16.0, %v3180
  %v3182 = vmul.f32 %v3181, 2.1237322e-06
  %v3183 = vadd.f32 %v3182, 0.00028619796
  %v3184 = vmul.f32 %v3181, %v3183
  %v3185 = vadd.f32 %v3184, 0.0036580483
  %v3186 = vmul.f32 %v3181, %v3185
  %v3187 = vadd.f32 %v3186, 0.05243302
  %v3188 = vmul.f32 %v3181, %v3187
  %v3189 = vadd.f32 %v3188, 0.18741608
  %v3190 = vmul.f32 %v3181, %v3189
  %v3191 = vadd.f32 %v3190, 1.1283791
  %v3192 = vmul.f32 %v3137, %v3191
  %v3193 = vmul.f32 %v3181, 3.8918573e-05
  %v3194 = vadd.f32 %v3193, 0.001143296
  %v3195 = vmul.f32 %v3181, %v3194
  %v3196 = vadd.f32 %v3195, 0.014752088
  %v3197 = vmul.f32 %v3181, %v3196
  %v3198 = vadd.f32 %v3197, 0.112945676
  %v3199 = vmul.f32 %v3181, %v3198
  %v3200 = vadd.f32 %v3199, 0.4994258
  %v3201 = vmul.f32 %v3181, %v3200
  %v3202 = vadd.f32 %v3201, 1.0
  %v3203 = vrcp.pop %v3202
  %v3204 = vmul.f32 %v3202, %v3203
  %v3205 = vsub.f32 1.0, %v3204
  %v3206 = vmul.f32 %v3203, %v3205
  %v3207 = vadd.f32 %v3203, %v3206
  %vm3208 = vweird.f32 %v3202
  %vm3209 = vweird.f32 %v3203
  %vm3210 = vmor %vm3208, %vm3209
  %v3211 = vsel %vm3210, %v3203, %v3207
  %v3212 = vand.u32 2147483647, %v3202
  %vm3213 = vcmp.eq.f32.partialorder %v3212, 8.507059e+37
  %v3214 = vand.u32 %v3202, 2147483648
  %v3215 = vor.u32 1.1754944e-38, %v3214
  %v3216 = vsel %vm3213, %v3215, %v3211
  %v3217 = vmul.f32 %v3192, %v3216
  %v3218 = vmin.f32 %v3217, 1.0
  %v3219 = vmax.f32 %v3218, -1.0
  %v3220 = vmul.f32 %v3138, %v3138
  %v3221 = vmin.f32 16.0, %v3220
  %v3222 = vmul.f32 %v3221, 2.1237322e-06
  %v3223 = vadd.f32 %v3222, 0.00028619796
  %v3224 = vmul.f32 %v3221, %v3223
  %v3225 = vadd.f32 %v3224, 0.0036580483
  %v3226 = vmul.f32 %v3221, %v3225
  %v3227 = vadd.f32 %v3226, 0.05243302
  %v3228 = vmul.f32 %v3221, %v3227
  %v3229 = vadd.f32 %v3228, 0.18741608
  %v3230 = vmul.f32 %v3221, %v3229
  %v3231 = vadd.f32 %v3230, 1.1283791
  %v3232 = vmul.f32 %v3138, %v3231
  %v3233 = vmul.f32 %v3221, 3.8918573e-05
  %v3234 = vadd.f32 %v3233, 0.001143296
  %v3235 = vmul.f32 %v3221, %v3234
  %v3236 = vadd.f32 %v3235, 0.014752088
  %v3237 = vmul.f32 %v3221, %v3236
  %v3238 = vadd.f32 %v3237, 0.112945676
  %v3239 = vmul.f32 %v3221, %v3238
  %v3240 = vadd.f32 %v3239, 0.4994258
  %v3241 = vmul.f32 %v3221, %v3240
  %v3242 = vadd.f32 %v3241, 1.0
  %v3243 = vrcp.pop %v3242
  %v3244 = vmul.f32 %v3242, %v3243
  %v3245 = vsub.f32 1.0, %v3244
  %v3246 = vmul.f32 %v3243, %v3245
  %v3247 = vadd.f32 %v3243, %v3246
  %vm3248 = vweird.f32 %v3242
  %vm3249 = vweird.f32 %v3243
  %vm3250 = vmor %vm3248, %vm3249
  %v3251 = vsel %vm3250, %v3243, %v3247
  %v3252 = vand.u32 2147483647, %v3242
  %vm3253 = vcmp.eq.f32.partialorder %v3252, 8.507059e+37
  %v3254 = vand.u32 %v3242, 2147483648
  %v3255 = vor.u32 1.1754944e-38, %v3254
  %v3256 = vsel %vm3253, %v3255, %v3251
  %v3257 = vmul.f32 %v3232, %v3256
  %v3258 = vmin.f32 %v3257, 1.0
  %v3259 = vmax.f32 %v3258, -1.0
  %v3260 = vmul.f32 %v3139, %v3139
  %v3261 = vmin.f32 16.0, %v3260
  %v3262 = vmul.f32 %v3261, 2.1237322e-06
  %v3263 = vadd.f32 %v3262, 0.00028619796
  %v3264 = vmul.f32 %v3261, %v3263
  %v3265 = vadd.f32 %v3264, 0.0036580483
  %v3266 = vmul.f32 %v3261, %v3265
  %v3267 = vadd.f32 %v3266, 0.05243302
  %v3268 = vmul.f32 %v3261, %v3267
  %v3269 = vadd.f32 %v3268, 0.18741608
  %v3270 = vmul.f32 %v3261, %v3269
  %v3271 = vadd.f32 %v3270, 1.1283791
  %v3272 = vmul.f32 %v3139, %v3271
  %v3273 = vmul.f32 %v3261, 3.8918573e-05
  %v3274 = vadd.f32 %v3273, 0.001143296
  %v3275 = vmul.f32 %v3261, %v3274
  %v3276 = vadd.f32 %v3275, 0.014752088
  %v3277 = vmul.f32 %v3261, %v3276
  %v3278 = vadd.f32 %v3277, 0.112945676
  %v3279 = vmul.f32 %v3261, %v3278
  %v3280 = vadd.f32 %v3279, 0.4994258
  %v3281 = vmul.f32 %v3261, %v3280
  %v3282 = vadd.f32 %v3281, 1.0
  %v3283 = vrcp.pop %v3282
  %v3284 = vmul.f32 %v3282, %v3283
  %v3285 = vsub.f32 1.0, %v3284
  %v3286 = vmul.f32 %v3283, %v3285
  %v3287 = vadd.f32 %v3283, %v3286
  %vm3288 = vweird.f32 %v3282
  %vm3289 = vweird.f32 %v3283
  %vm3290 = vmor %vm3288, %vm3289
  %v3291 = vsel %vm3290, %v3283, %v3287
  %v3292 = vand.u32 2147483647, %v3282
  %vm3293 = vcmp.eq.f32.partialorder %v3292, 8.507059e+37
  %v3294 = vand.u32 %v3282, 2147483648
  %v3295 = vor.u32 1.1754944e-38, %v3294
  %v3296 = vsel %vm3293, %v3295, %v3291
  %v3297 = vmul.f32 %v3272, %v3296
  %v3298 = vmin.f32 %v3297, 1.0
  %v3299 = vmax.f32 %v3298, -1.0
  %v3300 = vadd.f32 %v3179, 1.0
  %v3301 = vadd.f32 %v3219, 1.0
  %v3302 = vadd.f32 %v3259, 1.0
  %v3303 = vadd.f32 %v3299, 1.0
  %v3304 = vmul.f32 %v3132, %v3300
  %v3305 = vmul.f32 %v3133, %v3301
  %v3306 = vmul.f32 %v3134, %v3302
  %v3307 = vmul.f32 %v3135, %v3303
  %s3308 = scalar_lea.vmem %s12, 64
  %v3309 = vld [vmem:[%s3308] sm:$0xff]
  %v3310 = vld [vmem:[%s3308 + $0x8] sm:$0xff]
  %v3311 = vld [vmem:[%s3308 + $0x10] sm:$0xff]
  %v3312 = vld [vmem:[%s3308 + $0x18] sm:$0xff]
  %3314 = vset.pattern.permute.xlu0 0
  %3315 = vperm.xlu0 %3314, %v3309
  %v3316 = vpop.permute.xlu0 %3315
  %3319 = vset.pattern.permute.xlu0 0
  %3320 = vperm.xlu0 %3319, %v3310
  %v3321 = vpop.permute.xlu0 %3320
  %3324 = vset.pattern.permute.xlu0 0
  %3325 = vperm.xlu0 %3324, %v3311
  %v3326 = vpop.permute.xlu0 %3325
  %3329 = vset.pattern.permute.xlu0 0
  %3330 = vperm.xlu0 %3329, %v3312
  %v3331 = vpop.permute.xlu0 %3330
  %v3333 = vmul.f32 %v3304, %v3316
  %v3334 = vmul.f32 %v3305, %v3321
  %v3335 = vmul.f32 %v3306, %v3326
  %v3336 = vmul.f32 %v3307, %v3331
  %s3337 = scalar_lea.vmem %s13, 64
  %v3338 = vld [vmem:[%s3337] sm:$0xff]
  %v3339 = vld [vmem:[%s3337 + $0x8] sm:$0xff]
  %v3340 = vld [vmem:[%s3337 + $0x10] sm:$0xff]
  %v3341 = vld [vmem:[%s3337 + $0x18] sm:$0xff]
  %3343 = vset.pattern.permute.xlu0 0
  %3344 = vperm.xlu0 %3343, %v3338
  %v3345 = vpop.permute.xlu0 %3344
  %3348 = vset.pattern.permute.xlu0 0
  %3349 = vperm.xlu0 %3348, %v3339
  %v3350 = vpop.permute.xlu0 %3349
  %3353 = vset.pattern.permute.xlu0 0
  %3354 = vperm.xlu0 %3353, %v3340
  %v3355 = vpop.permute.xlu0 %3354
  %3358 = vset.pattern.permute.xlu0 0
  %3359 = vperm.xlu0 %3358, %v3341
  %v3360 = vpop.permute.xlu0 %3359
  %v3362 = vadd.f32 %v3333, %v3345
  %v3363 = vadd.f32 %v3334, %v3350
  %v3364 = vadd.f32 %v3335, %v3355
  %v3365 = vadd.f32 %v3336, %v3360
  %3366 = vmatpush.msra.mxu0 %v384
  %3367 = vmatpush.msra.mxu0 %v383
  %3368 = vmatpush.msra.mxu0 %v382
  %3369 = vmatpush.msra.mxu0 %v381
  %3370 = vmatpush.msra.mxu0 %v380
  %3371 = vmatpush.msra.mxu0 %v379
  %3372 = vmatpush.msra.mxu0 %v378
  %3373 = vmatpush.msra.mxu0 %v377
  %3374 = vmatpush.msra.mxu0 %v376
  %3375 = vmatpush.msra.mxu0 %v375
  %3376 = vmatpush.msra.mxu0 %v374
  %3377 = vmatpush.msra.mxu0 %v373
  %3378 = vmatpush.msra.mxu0 %v372
  %3379 = vmatpush.msra.mxu0 %v371
  %3380 = vmatpush.msra.mxu0 %v370
  %3381 = vmatpush.msra.mxu0 %v369
  %3382 = vmatmul.f32.gmra.mxu0 %v3362
  %v3383 = vpop.f32.mrf.mxu0
  %v3384 = vadd.f32 0.0, %v3383
  %3385 = vmatmul.f32.gmra.mxu0 %v3363
  %v3386 = vpop.f32.mrf.mxu0
  %v3387 = vadd.f32 0.0, %v3386
  %3388 = vmatmul.f32.gmra.mxu0 %v3364
  %v3389 = vpop.f32.mrf.mxu0
  %v3390 = vadd.f32 0.0, %v3389
  %3391 = vmatmul.f32.gmra.mxu0 %v3365
  %v3392 = vpop.f32.mrf.mxu0
  %v3393 = vadd.f32 0.0, %v3392
  %3394 = vdwg.mxu0
  %s3395 = scalar_lea.vmem %s14, 32
  %v3396 = vld [vmem:[%s3395] sm:$0xff]
  %v3397 = vld [vmem:[%s3395 + $0x8] sm:$0x3]
  %s3398 = scalar_lea.vmem %s15, 32
  %v3399 = vld [vmem:[%s3398] sm:$0xff]
  %v3400 = vld [vmem:[%s3398 + $0x8] sm:$0x3]
  %3402 = vset.pattern.permute.xlu0 0
  %3403 = vperm.xlu0 %3402, %v3399
  %v3404 = vpop.permute.xlu0 %3403
  %3407 = vset.pattern.permute.xlu0 0
  %3408 = vperm.xlu0 %3407, %v3400
  %v3409 = vpop.permute.xlu0 %3408
  %v3412 = vsel %vm1045, %v3396, 0
  %v3415 = vsel %vm1045, %v3397, 0
  %3417 = vmatpush.msra.mxu0 0.0
  %3418 = vmatpush.msra.mxu0 0.0
  %3419 = vmatpush.msra.mxu0 0.0
  %3420 = vmatpush.msra.mxu0 0.0
  %3421 = vmatpush.msra.mxu0 0.0
  %3422 = vmatpush.msra.mxu0 0.0
  %3423 = vmatpush.msra.mxu0 0.0
  %3424 = vmatpush.msra.mxu0 0.0
  %3425 = vmatpush.msra.mxu0 0.0
  %3426 = vmatpush.msra.mxu0 0.0
  %3427 = vmatpush.msra.mxu0 0.0
  %3428 = vmatpush.msra.mxu0 0.0
  %3429 = vmatpush.msra.mxu0 %v3393
  %3430 = vmatpush.msra.mxu0 %v3390
  %3431 = vmatpush.msra.mxu0 %v3387
  %3432 = vmatpush.msra.mxu0 %v3384
  %3433 = vmatmul.f32.gmra.mxu0 %v3412
  %v3434 = vpop.f32.mrf.mxu0
  %v3435 = vadd.f32 %v3404, %v3434
  %3436 = vmatmul.f32.gmra.mxu0 %v3415
  %v3437 = vpop.f32.mrf.mxu0
  %v3438 = vadd.f32 %v3409, %v3437
  %3439 = vdwg.mxu0
  %v3440 = vadd.f32 %v2467, %v3435
  %v3441 = vadd.f32 %v2468, %v3438
  %v3442 = vsel %vm1393, %v3440, 0.0
  %v3443 = vsel %vm1395, %v3441, 0.0
  %v3444 = vadd.f32 %v3442, %v3443
  %v3445 = vrot.slane %v3444, 4
  %v3446 = vadd.f32 %v3444, %v3445
  %v3447 = vrot.slane %v3446, 2
  %v3448 = vadd.f32 %v3446, %v3447
  %v3449 = vrot.slane %v3448, 1
  %v3450 = vadd.f32 %v3448, %v3449
  %v3451 = vmul.f32 %v3450, %v1410
  %v3452 = vsub.f32 %v3440, %v3451
  %v3453 = vsub.f32 %v3441, %v3451
  %v3454 = vadd.f32 %v3452, %v1417
  %v3455 = vadd.f32 %v3453, %v1422
  %v3456 = vsel %vm1393, %v3454, -inf
  %v3457 = vsel %vm1395, %v3455, -inf
  %v3458 = vmax.f32 %v3456, %v3457
  %v3459 = vrot.slane %v3458, 4
  %v3460 = vmax.f32 %v3458, %v3459
  %v3461 = vrot.slane %v3460, 2
  %v3462 = vmax.f32 %v3460, %v3461
  %v3463 = vrot.slane %v3462, 1
  %v3464 = vmax.f32 %v3462, %v3463
  %v3465 = vsub.f32 %v3454, %v3464
  %v3466 = vsub.f32 %v3455, %v3464
  %v3467 = vmul.f32 %v3465, 1.442695
  %v3468 = vpow.pop %v3467
  %v3469 = vmul.f32 %v3466, 1.442695
  %v3470 = vpow.pop %v3469
  %v3471 = vsel %vm1393, %v3468, 0.0
  %v3472 = vsel %vm1395, %v3470, 0.0
  %v3473 = vadd.f32 %v3471, %v3472
  %v3474 = vrot.slane %v3473, 4
  %v3475 = vadd.f32 %v3473, %v3474
  %v3476 = vrot.slane %v3475, 2
  %v3477 = vadd.f32 %v3475, %v3476
  %v3478 = vrot.slane %v3477, 1
  %v3479 = vadd.f32 %v3477, %v3478
  %v3480 = vlog2.pop %v3479
  %v3481 = vmul.f32 %v3480, 0.6931472
  %v3482 = vsub.f32 %v3465, %v3481
  %v3483 = vsub.f32 %v3466, %v3481
  %s3484 = scalar_lea.vmem %s6, 96
  %v3485 = vld [vmem:[%s3484] sm:$0xff]
  %v3486 = vld [vmem:[%s3484 + $0x8] sm:$0xff]
  %v3487 = vld [vmem:[%s3484 + $0x10] sm:$0xff]
  %v3488 = vld [vmem:[%s3484 + $0x18] sm:$0xff]
  %3489 = vrot.lane.b32.xlu0 %v3362, 9
  %v3490 = vpop.permute.xlu0 %3489
  %3491 = vrot.lane.b32.xlu0 %v3363, 9
  %v3492 = vpop.permute.xlu0 %3491
  %3493 = vrot.lane.b32.xlu0 %v3364, 9
  %v3494 = vpop.permute.xlu0 %3493
  %3495 = vrot.lane.b32.xlu0 %v3365, 9
  %v3496 = vpop.permute.xlu0 %3495
  %v3497 = vmul.f32 %v3490, %v399
  %v3498 = vmul.f32 %v3492, %v399
  %v3499 = vmul.f32 %v3494, %v399
  %v3500 = vmul.f32 %v3496, %v399
  %3502 = vset.pattern.permute.xlu0 0
  %3503 = vperm.xlu0 %3502, %v3485
  %v3504 = vpop.permute.xlu0 %3503
  %3507 = vset.pattern.permute.xlu0 0
  %3508 = vperm.xlu0 %3507, %v3486
  %v3509 = vpop.permute.xlu0 %3508
  %3512 = vset.pattern.permute.xlu0 0
  %3513 = vperm.xlu0 %3512, %v3487
  %v3514 = vpop.permute.xlu0 %3513
  %3517 = vset.pattern.permute.xlu0 0
  %3518 = vperm.xlu0 %3517, %v3488
  %v3519 = vpop.permute.xlu0 %3518
  %v3521 = vmul.f32 %v3497, %v3504
  %v3522 = vmul.f32 %v3498, %v3509
  %v3523 = vmul.f32 %v3499, %v3514
  %v3524 = vmul.f32 %v3500, %v3519
  %v3525 = vadd.f32 %v3521, 0.0
  %v3526 = vadd.f32 %v3522, 0.0
  %v3527 = vadd.f32 %v3523, 0.0
  %v3528 = vadd.f32 %v3524, 0.0
  %3529 = vrot.lane.b32.xlu0 %v3362, 8
  %v3530 = vpop.permute.xlu0 %3529
  %3531 = vrot.lane.b32.xlu0 %v3363, 8
  %v3532 = vpop.permute.xlu0 %3531
  %3533 = vrot.lane.b32.xlu0 %v3364, 8
  %v3534 = vpop.permute.xlu0 %3533
  %3535 = vrot.lane.b32.xlu0 %v3365, 8
  %v3536 = vpop.permute.xlu0 %3535
  %v3537 = vmul.f32 %v3530, %v444
  %v3538 = vmul.f32 %v3532, %v444
  %v3539 = vmul.f32 %v3534, %v444
  %v3540 = vmul.f32 %v3536, %v444
  %3541 = vset.pattern.permute.xlu0 1
  %3542 = vperm.xlu0 %3541, %v3485
  %v3543 = vpop.permute.xlu0 %3542
  %3545 = vset.pattern.permute.xlu0 1
  %3546 = vperm.xlu0 %3545, %v3486
  %v3547 = vpop.permute.xlu0 %3546
  %3549 = vset.pattern.permute.xlu0 1
  %3550 = vperm.xlu0 %3549, %v3487
  %v3551 = vpop.permute.xlu0 %3550
  %3553 = vset.pattern.permute.xlu0 1
  %3554 = vperm.xlu0 %3553, %v3488
  %v3555 = vpop.permute.xlu0 %3554
  %v3557 = vmul.f32 %v3537, %v3543
  %v3558 = vmul.f32 %v3538, %v3547
  %v3559 = vmul.f32 %v3539, %v3551
  %v3560 = vmul.f32 %v3540, %v3555
  %v3561 = vadd.f32 %v3525, %v3557
  %v3562 = vadd.f32 %v3526, %v3558
  %v3563 = vadd.f32 %v3527, %v3559
  %v3564 = vadd.f32 %v3528, %v3560
  %3565 = vrot.lane.b32.xlu0 %v3362, 7
  %v3566 = vpop.permute.xlu0 %3565
  %3567 = vrot.lane.b32.xlu0 %v3363, 7
  %v3568 = vpop.permute.xlu0 %3567
  %3569 = vrot.lane.b32.xlu0 %v3364, 7
  %v3570 = vpop.permute.xlu0 %3569
  %3571 = vrot.lane.b32.xlu0 %v3365, 7
  %v3572 = vpop.permute.xlu0 %3571
  %v3573 = vmul.f32 %v3566, %v485
  %v3574 = vmul.f32 %v3568, %v485
  %v3575 = vmul.f32 %v3570, %v485
  %v3576 = vmul.f32 %v3572, %v485
  %3577 = vset.pattern.permute.xlu0 2
  %3578 = vperm.xlu0 %3577, %v3485
  %v3579 = vpop.permute.xlu0 %3578
  %3581 = vset.pattern.permute.xlu0 2
  %3582 = vperm.xlu0 %3581, %v3486
  %v3583 = vpop.permute.xlu0 %3582
  %3585 = vset.pattern.permute.xlu0 2
  %3586 = vperm.xlu0 %3585, %v3487
  %v3587 = vpop.permute.xlu0 %3586
  %3589 = vset.pattern.permute.xlu0 2
  %3590 = vperm.xlu0 %3589, %v3488
  %v3591 = vpop.permute.xlu0 %3590
  %v3593 = vmul.f32 %v3573, %v3579
  %v3594 = vmul.f32 %v3574, %v3583
  %v3595 = vmul.f32 %v3575, %v3587
  %v3596 = vmul.f32 %v3576, %v3591
  %v3597 = vadd.f32 %v3561, %v3593
  %v3598 = vadd.f32 %v3562, %v3594
  %v3599 = vadd.f32 %v3563, %v3595
  %v3600 = vadd.f32 %v3564, %v3596
  %3601 = vrot.lane.b32.xlu0 %v3362, 1
  %v3602 = vpop.permute.xlu0 %3601
  %3603 = vrot.lane.b32.xlu0 %v3363, 1
  %v3604 = vpop.permute.xlu0 %3603
  %3605 = vrot.lane.b32.xlu0 %v3364, 1
  %v3606 = vpop.permute.xlu0 %3605
  %3607 = vrot.lane.b32.xlu0 %v3365, 1
  %v3608 = vpop.permute.xlu0 %3607
  %v3609 = vmul.f32 %v3602, %v526
  %v3610 = vmul.f32 %v3604, %v526
  %v3611 = vmul.f32 %v3606, %v526
  %v3612 = vmul.f32 %v3608, %v526
  %3613 = vset.pattern.permute.xlu0 3
  %3614 = vperm.xlu0 %3613, %v3485
  %v3615 = vpop.permute.xlu0 %3614
  %3617 = vset.pattern.permute.xlu0 3
  %3618 = vperm.xlu0 %3617, %v3486
  %v3619 = vpop.permute.xlu0 %3618
  %3621 = vset.pattern.permute.xlu0 3
  %3622 = vperm.xlu0 %3621, %v3487
  %v3623 = vpop.permute.xlu0 %3622
  %3625 = vset.pattern.permute.xlu0 3
  %3626 = vperm.xlu0 %3625, %v3488
  %v3627 = vpop.permute.xlu0 %3626
  %v3629 = vmul.f32 %v3609, %v3615
  %v3630 = vmul.f32 %v3610, %v3619
  %v3631 = vmul.f32 %v3611, %v3623
  %v3632 = vmul.f32 %v3612, %v3627
  %v3633 = vadd.f32 %v3597, %v3629
  %v3634 = vadd.f32 %v3598, %v3630
  %v3635 = vadd.f32 %v3599, %v3631
  %v3636 = vadd.f32 %v3600, %v3632
  %v3637 = vmul.f32 %v3362, %v559
  %v3638 = vmul.f32 %v3363, %v559
  %v3639 = vmul.f32 %v3364, %v559
  %v3640 = vmul.f32 %v3365, %v559
  %3641 = vset.pattern.permute.xlu0 4
  %3642 = vperm.xlu0 %3641, %v3485
  %v3643 = vpop.permute.xlu0 %3642
  %3645 = vset.pattern.permute.xlu0 4
  %3646 = vperm.xlu0 %3645, %v3486
  %v3647 = vpop.permute.xlu0 %3646
  %3649 = vset.pattern.permute.xlu0 4
  %3650 = vperm.xlu0 %3649, %v3487
  %v3651 = vpop.permute.xlu0 %3650
  %3653 = vset.pattern.permute.xlu0 4
  %3654 = vperm.xlu0 %3653, %v3488
  %v3655 = vpop.permute.xlu0 %3654
  %v3657 = vmul.f32 %v3637, %v3643
  %v3658 = vmul.f32 %v3638, %v3647
  %v3659 = vmul.f32 %v3639, %v3651
  %v3660 = vmul.f32 %v3640, %v3655
  %v3661 = vadd.f32 %v3633, %v3657
  %v3662 = vadd.f32 %v3634, %v3658
  %v3663 = vadd.f32 %v3635, %v3659
  %v3664 = vadd.f32 %v3636, %v3660
  %3665 = vrot.lane.b32.xlu0 %v3362, 127
  %v3666 = vpop.permute.xlu0 %3665
  %3667 = vrot.lane.b32.xlu0 %v3363, 127
  %v3668 = vpop.permute.xlu0 %3667
  %3669 = vrot.lane.b32.xlu0 %v3364, 127
  %v3670 = vpop.permute.xlu0 %3669
  %3671 = vrot.lane.b32.xlu0 %v3365, 127
  %v3672 = vpop.permute.xlu0 %3671
  %v3673 = vmul.f32 %v3666, %v600
  %v3674 = vmul.f32 %v3668, %v600
  %v3675 = vmul.f32 %v3670, %v600
  %v3676 = vmul.f32 %v3672, %v600
  %3677 = vset.pattern.permute.xlu0 5
  %3678 = vperm.xlu0 %3677, %v3485
  %v3679 = vpop.permute.xlu0 %3678
  %3681 = vset.pattern.permute.xlu0 5
  %3682 = vperm.xlu0 %3681, %v3486
  %v3683 = vpop.permute.xlu0 %3682
  %3685 = vset.pattern.permute.xlu0 5
  %3686 = vperm.xlu0 %3685, %v3487
  %v3687 = vpop.permute.xlu0 %3686
  %3689 = vset.pattern.permute.xlu0 5
  %3690 = vperm.xlu0 %3689, %v3488
  %v3691 = vpop.permute.xlu0 %3690
  %v3693 = vmul.f32 %v3673, %v3679
  %v3694 = vmul.f32 %v3674, %v3683
  %v3695 = vmul.f32 %v3675, %v3687
  %v3696 = vmul.f32 %v3676, %v3691
  %v3697 = vadd.f32 %v3661, %v3693
  %v3698 = vadd.f32 %v3662, %v3694
  %v3699 = vadd.f32 %v3663, %v3695
  %v3700 = vadd.f32 %v3664, %v3696
  %3701 = vrot.lane.b32.xlu0 %v3362, 121
  %v3702 = vpop.permute.xlu0 %3701
  %3703 = vrot.lane.b32.xlu0 %v3363, 121
  %v3704 = vpop.permute.xlu0 %3703
  %3705 = vrot.lane.b32.xlu0 %v3364, 121
  %v3706 = vpop.permute.xlu0 %3705
  %3707 = vrot.lane.b32.xlu0 %v3365, 121
  %v3708 = vpop.permute.xlu0 %3707
  %v3709 = vmul.f32 %v3702, %v641
  %v3710 = vmul.f32 %v3704, %v641
  %v3711 = vmul.f32 %v3706, %v641
  %v3712 = vmul.f32 %v3708, %v641
  %3713 = vset.pattern.permute.xlu0 6
  %3714 = vperm.xlu0 %3713, %v3485
  %v3715 = vpop.permute.xlu0 %3714
  %3717 = vset.pattern.permute.xlu0 6
  %3718 = vperm.xlu0 %3717, %v3486
  %v3719 = vpop.permute.xlu0 %3718
  %3721 = vset.pattern.permute.xlu0 6
  %3722 = vperm.xlu0 %3721, %v3487
  %v3723 = vpop.permute.xlu0 %3722
  %3725 = vset.pattern.permute.xlu0 6
  %3726 = vperm.xlu0 %3725, %v3488
  %v3727 = vpop.permute.xlu0 %3726
  %v3729 = vmul.f32 %v3709, %v3715
  %v3730 = vmul.f32 %v3710, %v3719
  %v3731 = vmul.f32 %v3711, %v3723
  %v3732 = vmul.f32 %v3712, %v3727
  %v3733 = vadd.f32 %v3697, %v3729
  %v3734 = vadd.f32 %v3698, %v3730
  %v3735 = vadd.f32 %v3699, %v3731
  %v3736 = vadd.f32 %v3700, %v3732
  %3737 = vrot.lane.b32.xlu0 %v3362, 120
  %v3738 = vpop.permute.xlu0 %3737
  %3739 = vrot.lane.b32.xlu0 %v3363, 120
  %v3740 = vpop.permute.xlu0 %3739
  %3741 = vrot.lane.b32.xlu0 %v3364, 120
  %v3742 = vpop.permute.xlu0 %3741
  %3743 = vrot.lane.b32.xlu0 %v3365, 120
  %v3744 = vpop.permute.xlu0 %3743
  %v3745 = vmul.f32 %v3738, %v682
  %v3746 = vmul.f32 %v3740, %v682
  %v3747 = vmul.f32 %v3742, %v682
  %v3748 = vmul.f32 %v3744, %v682
  %3749 = vset.pattern.permute.xlu0 7
  %3750 = vperm.xlu0 %3749, %v3485
  %v3751 = vpop.permute.xlu0 %3750
  %3753 = vset.pattern.permute.xlu0 7
  %3754 = vperm.xlu0 %3753, %v3486
  %v3755 = vpop.permute.xlu0 %3754
  %3757 = vset.pattern.permute.xlu0 7
  %3758 = vperm.xlu0 %3757, %v3487
  %v3759 = vpop.permute.xlu0 %3758
  %3761 = vset.pattern.permute.xlu0 7
  %3762 = vperm.xlu0 %3761, %v3488
  %v3763 = vpop.permute.xlu0 %3762
  %v3765 = vmul.f32 %v3745, %v3751
  %v3766 = vmul.f32 %v3746, %v3755
  %v3767 = vmul.f32 %v3747, %v3759
  %v3768 = vmul.f32 %v3748, %v3763
  %v3769 = vadd.f32 %v3733, %v3765
  %v3770 = vadd.f32 %v3734, %v3766
  %v3771 = vadd.f32 %v3735, %v3767
  %v3772 = vadd.f32 %v3736, %v3768
  %3773 = vrot.lane.b32.xlu0 %v3362, 119
  %v3774 = vpop.permute.xlu0 %3773
  %3775 = vrot.lane.b32.xlu0 %v3363, 119
  %v3776 = vpop.permute.xlu0 %3775
  %3777 = vrot.lane.b32.xlu0 %v3364, 119
  %v3778 = vpop.permute.xlu0 %3777
  %3779 = vrot.lane.b32.xlu0 %v3365, 119
  %v3780 = vpop.permute.xlu0 %3779
  %v3781 = vmul.f32 %v3774, %v723
  %v3782 = vmul.f32 %v3776, %v723
  %v3783 = vmul.f32 %v3778, %v723
  %v3784 = vmul.f32 %v3780, %v723
  %3785 = vset.pattern.permute.xlu0 8
  %3786 = vperm.xlu0 %3785, %v3485
  %v3787 = vpop.permute.xlu0 %3786
  %3789 = vset.pattern.permute.xlu0 8
  %3790 = vperm.xlu0 %3789, %v3486
  %v3791 = vpop.permute.xlu0 %3790
  %3793 = vset.pattern.permute.xlu0 8
  %3794 = vperm.xlu0 %3793, %v3487
  %v3795 = vpop.permute.xlu0 %3794
  %3797 = vset.pattern.permute.xlu0 8
  %3798 = vperm.xlu0 %3797, %v3488
  %v3799 = vpop.permute.xlu0 %3798
  %v3801 = vmul.f32 %v3781, %v3787
  %v3802 = vmul.f32 %v3782, %v3791
  %v3803 = vmul.f32 %v3783, %v3795
  %v3804 = vmul.f32 %v3784, %v3799
  %v3805 = vadd.f32 %v3769, %v3801
  %v3806 = vadd.f32 %v3770, %v3802
  %v3807 = vadd.f32 %v3771, %v3803
  %v3808 = vadd.f32 %v3772, %v3804
  %s3809 = scalar_lea.vmem %s7, 96
  %v3810 = vld [vmem:[%s3809] sm:$0xff]
  %v3811 = vld [vmem:[%s3809 + $0x8] sm:$0xff]
  %v3812 = vld [vmem:[%s3809 + $0x10] sm:$0xff]
  %v3813 = vld [vmem:[%s3809 + $0x18] sm:$0xff]
  %3815 = vset.pattern.permute.xlu0 0
  %3816 = vperm.xlu0 %3815, %v3810
  %v3817 = vpop.permute.xlu0 %3816
  %3820 = vset.pattern.permute.xlu0 0
  %3821 = vperm.xlu0 %3820, %v3811
  %v3822 = vpop.permute.xlu0 %3821
  %3825 = vset.pattern.permute.xlu0 0
  %3826 = vperm.xlu0 %3825, %v3812
  %v3827 = vpop.permute.xlu0 %3826
  %3830 = vset.pattern.permute.xlu0 0
  %3831 = vperm.xlu0 %3830, %v3813
  %v3832 = vpop.permute.xlu0 %3831
  %v3834 = vadd.f32 %v3805, %v3817
  %v3835 = vadd.f32 %v3806, %v3822
  %v3836 = vadd.f32 %v3807, %v3827
  %v3837 = vadd.f32 %v3808, %v3832
  %v3838 = vmul.f32 %v3834, 0.5
  %v3839 = vmul.f32 %v3835, 0.5
  %v3840 = vmul.f32 %v3836, 0.5
  %v3841 = vmul.f32 %v3837, 0.5
  %v3842 = vmul.f32 %v3834, 0.70710677
  %v3843 = vmul.f32 %v3835, 0.70710677
  %v3844 = vmul.f32 %v3836, 0.70710677
  %v3845 = vmul.f32 %v3837, 0.70710677
  %v3846 = vmul.f32 %v3842, %v3842
  %v3847 = vmin.f32 16.0, %v3846
  %v3848 = vmul.f32 %v3847, 2.1237322e-06
  %v3849 = vadd.f32 %v3848, 0.00028619796
  %v3850 = vmul.f32 %v3847, %v3849
  %v3851 = vadd.f32 %v3850, 0.0036580483
  %v3852 = vmul.f32 %v3847, %v3851
  %v3853 = vadd.f32 %v3852, 0.05243302
  %v3854 = vmul.f32 %v3847, %v3853
  %v3855 = vadd.f32 %v3854, 0.18741608
  %v3856 = vmul.f32 %v3847, %v3855
  %v3857 = vadd.f32 %v3856, 1.1283791
  %v3858 = vmul.f32 %v3842, %v3857
  %v3859 = vmul.f32 %v3847, 3.8918573e-05
  %v3860 = vadd.f32 %v3859, 0.001143296
  %v3861 = vmul.f32 %v3847, %v3860
  %v3862 = vadd.f32 %v3861, 0.014752088
  %v3863 = vmul.f32 %v3847, %v3862
  %v3864 = vadd.f32 %v3863, 0.112945676
  %v3865 = vmul.f32 %v3847, %v3864
  %v3866 = vadd.f32 %v3865, 0.4994258
  %v3867 = vmul.f32 %v3847, %v3866
  %v3868 = vadd.f32 %v3867, 1.0
  %v3869 = vrcp.pop %v3868
  %v3870 = vmul.f32 %v3868, %v3869
  %v3871 = vsub.f32 1.0, %v3870
  %v3872 = vmul.f32 %v3869, %v3871
  %v3873 = vadd.f32 %v3869, %v3872
  %vm3874 = vweird.f32 %v3868
  %vm3875 = vweird.f32 %v3869
  %vm3876 = vmor %vm3874, %vm3875
  %v3877 = vsel %vm3876, %v3869, %v3873
  %v3878 = vand.u32 2147483647, %v3868
  %vm3879 = vcmp.eq.f32.partialorder %v3878, 8.507059e+37
  %v3880 = vand.u32 %v3868, 2147483648
  %v3881 = vor.u32 1.1754944e-38, %v3880
  %v3882 = vsel %vm3879, %v3881, %v3877
  %v3883 = vmul.f32 %v3858, %v3882
  %v3884 = vmin.f32 %v3883, 1.0
  %v3885 = vmax.f32 %v3884, -1.0
  %v3886 = vmul.f32 %v3843, %v3843
  %v3887 = vmin.f32 16.0, %v3886
  %v3888 = vmul.f32 %v3887, 2.1237322e-06
  %v3889 = vadd.f32 %v3888, 0.00028619796
  %v3890 = vmul.f32 %v3887, %v3889
  %v3891 = vadd.f32 %v3890, 0.0036580483
  %v3892 = vmul.f32 %v3887, %v3891
  %v3893 = vadd.f32 %v3892, 0.05243302
  %v3894 = vmul.f32 %v3887, %v3893
  %v3895 = vadd.f32 %v3894, 0.18741608
  %v3896 = vmul.f32 %v3887, %v3895
  %v3897 = vadd.f32 %v3896, 1.1283791
  %v3898 = vmul.f32 %v3843, %v3897
  %v3899 = vmul.f32 %v3887, 3.8918573e-05
  %v3900 = vadd.f32 %v3899, 0.001143296
  %v3901 = vmul.f32 %v3887, %v3900
  %v3902 = vadd.f32 %v3901, 0.014752088
  %v3903 = vmul.f32 %v3887, %v3902
  %v3904 = vadd.f32 %v3903, 0.112945676
  %v3905 = vmul.f32 %v3887, %v3904
  %v3906 = vadd.f32 %v3905, 0.4994258
  %v3907 = vmul.f32 %v3887, %v3906
  %v3908 = vadd.f32 %v3907, 1.0
  %v3909 = vrcp.pop %v3908
  %v3910 = vmul.f32 %v3908, %v3909
  %v3911 = vsub.f32 1.0, %v3910
  %v3912 = vmul.f32 %v3909, %v3911
  %v3913 = vadd.f32 %v3909, %v3912
  %vm3914 = vweird.f32 %v3908
  %vm3915 = vweird.f32 %v3909
  %vm3916 = vmor %vm3914, %vm3915
  %v3917 = vsel %vm3916, %v3909, %v3913
  %v3918 = vand.u32 2147483647, %v3908
  %vm3919 = vcmp.eq.f32.partialorder %v3918, 8.507059e+37
  %v3920 = vand.u32 %v3908, 2147483648
  %v3921 = vor.u32 1.1754944e-38, %v3920
  %v3922 = vsel %vm3919, %v3921, %v3917
  %v3923 = vmul.f32 %v3898, %v3922
  %v3924 = vmin.f32 %v3923, 1.0
  %v3925 = vmax.f32 %v3924, -1.0
  %v3926 = vmul.f32 %v3844, %v3844
  %v3927 = vmin.f32 16.0, %v3926
  %v3928 = vmul.f32 %v3927, 2.1237322e-06
  %v3929 = vadd.f32 %v3928, 0.00028619796
  %v3930 = vmul.f32 %v3927, %v3929
  %v3931 = vadd.f32 %v3930, 0.0036580483
  %v3932 = vmul.f32 %v3927, %v3931
  %v3933 = vadd.f32 %v3932, 0.05243302
  %v3934 = vmul.f32 %v3927, %v3933
  %v3935 = vadd.f32 %v3934, 0.18741608
  %v3936 = vmul.f32 %v3927, %v3935
  %v3937 = vadd.f32 %v3936, 1.1283791
  %v3938 = vmul.f32 %v3844, %v3937
  %v3939 = vmul.f32 %v3927, 3.8918573e-05
  %v3940 = vadd.f32 %v3939, 0.001143296
  %v3941 = vmul.f32 %v3927, %v3940
  %v3942 = vadd.f32 %v3941, 0.014752088
  %v3943 = vmul.f32 %v3927, %v3942
  %v3944 = vadd.f32 %v3943, 0.112945676
  %v3945 = vmul.f32 %v3927, %v3944
  %v3946 = vadd.f32 %v3945, 0.4994258
  %v3947 = vmul.f32 %v3927, %v3946
  %v3948 = vadd.f32 %v3947, 1.0
  %v3949 = vrcp.pop %v3948
  %v3950 = vmul.f32 %v3948, %v3949
  %v3951 = vsub.f32 1.0, %v3950
  %v3952 = vmul.f32 %v3949, %v3951
  %v3953 = vadd.f32 %v3949, %v3952
  %vm3954 = vweird.f32 %v3948
  %vm3955 = vweird.f32 %v3949
  %vm3956 = vmor %vm3954, %vm3955
  %v3957 = vsel %vm3956, %v3949, %v3953
  %v3958 = vand.u32 2147483647, %v3948
  %vm3959 = vcmp.eq.f32.partialorder %v3958, 8.507059e+37
  %v3960 = vand.u32 %v3948, 2147483648
  %v3961 = vor.u32 1.1754944e-38, %v3960
  %v3962 = vsel %vm3959, %v3961, %v3957
  %v3963 = vmul.f32 %v3938, %v3962
  %v3964 = vmin.f32 %v3963, 1.0
  %v3965 = vmax.f32 %v3964, -1.0
  %v3966 = vmul.f32 %v3845, %v3845
  %v3967 = vmin.f32 16.0, %v3966
  %v3968 = vmul.f32 %v3967, 2.1237322e-06
  %v3969 = vadd.f32 %v3968, 0.00028619796
  %v3970 = vmul.f32 %v3967, %v3969
  %v3971 = vadd.f32 %v3970, 0.0036580483
  %v3972 = vmul.f32 %v3967, %v3971
  %v3973 = vadd.f32 %v3972, 0.05243302
  %v3974 = vmul.f32 %v3967, %v3973
  %v3975 = vadd.f32 %v3974, 0.18741608
  %v3976 = vmul.f32 %v3967, %v3975
  %v3977 = vadd.f32 %v3976, 1.1283791
  %v3978 = vmul.f32 %v3845, %v3977
  %v3979 = vmul.f32 %v3967, 3.8918573e-05
  %v3980 = vadd.f32 %v3979, 0.001143296
  %v3981 = vmul.f32 %v3967, %v3980
  %v3982 = vadd.f32 %v3981, 0.014752088
  %v3983 = vmul.f32 %v3967, %v3982
  %v3984 = vadd.f32 %v3983, 0.112945676
  %v3985 = vmul.f32 %v3967, %v3984
  %v3986 = vadd.f32 %v3985, 0.4994258
  %v3987 = vmul.f32 %v3967, %v3986
  %v3988 = vadd.f32 %v3987, 1.0
  %v3989 = vrcp.pop %v3988
  %v3990 = vmul.f32 %v3988, %v3989
  %v3991 = vsub.f32 1.0, %v3990
  %v3992 = vmul.f32 %v3989, %v3991
  %v3993 = vadd.f32 %v3989, %v3992
  %vm3994 = vweird.f32 %v3988
  %vm3995 = vweird.f32 %v3989
  %vm3996 = vmor %vm3994, %vm3995
  %v3997 = vsel %vm3996, %v3989, %v3993
  %v3998 = vand.u32 2147483647, %v3988
  %vm3999 = vcmp.eq.f32.partialorder %v3998, 8.507059e+37
  %v4000 = vand.u32 %v3988, 2147483648
  %v4001 = vor.u32 1.1754944e-38, %v4000
  %v4002 = vsel %vm3999, %v4001, %v3997
  %v4003 = vmul.f32 %v3978, %v4002
  %v4004 = vmin.f32 %v4003, 1.0
  %v4005 = vmax.f32 %v4004, -1.0
  %v4006 = vadd.f32 %v3885, 1.0
  %v4007 = vadd.f32 %v3925, 1.0
  %v4008 = vadd.f32 %v3965, 1.0
  %v4009 = vadd.f32 %v4005, 1.0
  %v4010 = vmul.f32 %v3838, %v4006
  %v4011 = vmul.f32 %v3839, %v4007
  %v4012 = vmul.f32 %v3840, %v4008
  %v4013 = vmul.f32 %v3841, %v4009
  %s4014 = scalar_lea.vmem %s8, 96
  %v4015 = vld [vmem:[%s4014] sm:$0xff]
  %v4016 = vld [vmem:[%s4014 + $0x8] sm:$0xff]
  %v4017 = vld [vmem:[%s4014 + $0x10] sm:$0xff]
  %v4018 = vld [vmem:[%s4014 + $0x18] sm:$0xff]
  %4020 = vset.pattern.permute.xlu0 0
  %4021 = vperm.xlu0 %4020, %v4015
  %v4022 = vpop.permute.xlu0 %4021
  %4025 = vset.pattern.permute.xlu0 0
  %4026 = vperm.xlu0 %4025, %v4016
  %v4027 = vpop.permute.xlu0 %4026
  %4030 = vset.pattern.permute.xlu0 0
  %4031 = vperm.xlu0 %4030, %v4017
  %v4032 = vpop.permute.xlu0 %4031
  %4035 = vset.pattern.permute.xlu0 0
  %4036 = vperm.xlu0 %4035, %v4018
  %v4037 = vpop.permute.xlu0 %4036
  %v4039 = vmul.f32 %v4010, %v4022
  %v4040 = vmul.f32 %v4011, %v4027
  %v4041 = vmul.f32 %v4012, %v4032
  %v4042 = vmul.f32 %v4013, %v4037
  %s4043 = scalar_lea.vmem %s9, 96
  %v4044 = vld [vmem:[%s4043] sm:$0xff]
  %v4045 = vld [vmem:[%s4043 + $0x8] sm:$0xff]
  %v4046 = vld [vmem:[%s4043 + $0x10] sm:$0xff]
  %v4047 = vld [vmem:[%s4043 + $0x18] sm:$0xff]
  %4049 = vset.pattern.permute.xlu0 0
  %4050 = vperm.xlu0 %4049, %v4044
  %v4051 = vpop.permute.xlu0 %4050
  %4054 = vset.pattern.permute.xlu0 0
  %4055 = vperm.xlu0 %4054, %v4045
  %v4056 = vpop.permute.xlu0 %4055
  %4059 = vset.pattern.permute.xlu0 0
  %4060 = vperm.xlu0 %4059, %v4046
  %v4061 = vpop.permute.xlu0 %4060
  %4064 = vset.pattern.permute.xlu0 0
  %4065 = vperm.xlu0 %4064, %v4047
  %v4066 = vpop.permute.xlu0 %4065
  %v4068 = vadd.f32 %v4039, %v4051
  %v4069 = vadd.f32 %v4040, %v4056
  %v4070 = vadd.f32 %v4041, %v4061
  %v4071 = vadd.f32 %v4042, %v4066
  %v4072 = vadd.f32 %v4068, %v3362
  %v4073 = vadd.f32 %v4069, %v3363
  %v4074 = vadd.f32 %v4070, %v3364
  %v4075 = vadd.f32 %v4071, %v3365
  %s4076 = scalar_lea.vmem %s10, 96
  %v4077 = vld [vmem:[%s4076] sm:$0xff]
  %v4078 = vld [vmem:[%s4076 + $0x8] sm:$0xff]
  %v4079 = vld [vmem:[%s4076 + $0x10] sm:$0xff]
  %v4080 = vld [vmem:[%s4076 + $0x18] sm:$0xff]
  %s4081 = scalar_lea.vmem %s11, 96
  %v4082 = vld [vmem:[%s4081] sm:$0xff]
  %v4083 = vld [vmem:[%s4081 + $0x8] sm:$0xff]
  %v4084 = vld [vmem:[%s4081 + $0x10] sm:$0xff]
  %v4085 = vld [vmem:[%s4081 + $0x18] sm:$0xff]
  %4087 = vset.pattern.permute.xlu0 0
  %4088 = vperm.xlu0 %4087, %v4082
  %v4089 = vpop.permute.xlu0 %4088
  %4092 = vset.pattern.permute.xlu0 0
  %4093 = vperm.xlu0 %4092, %v4083
  %v4094 = vpop.permute.xlu0 %4093
  %4097 = vset.pattern.permute.xlu0 0
  %4098 = vperm.xlu0 %4097, %v4084
  %v4099 = vpop.permute.xlu0 %4098
  %4102 = vset.pattern.permute.xlu0 0
  %4103 = vperm.xlu0 %4102, %v4085
  %v4104 = vpop.permute.xlu0 %4103
  %v4107 = vsel %vm1045, %v4077, 0
  %v4110 = vsel %vm1045, %v4078, 0
  %v4113 = vsel %vm1045, %v4079, 0
  %v4116 = vsel %vm1045, %v4080, 0
  %4118 = vmatpush.msra.mxu0 0.0
  %4119 = vmatpush.msra.mxu0 0.0
  %4120 = vmatpush.msra.mxu0 0.0
  %4121 = vmatpush.msra.mxu0 0.0
  %4122 = vmatpush.msra.mxu0 0.0
  %4123 = vmatpush.msra.mxu0 0.0
  %4124 = vmatpush.msra.mxu0 0.0
  %4125 = vmatpush.msra.mxu0 0.0
  %4126 = vmatpush.msra.mxu0 0.0
  %4127 = vmatpush.msra.mxu0 0.0
  %4128 = vmatpush.msra.mxu0 0.0
  %4129 = vmatpush.msra.mxu0 0.0
  %4130 = vmatpush.msra.mxu0 %v4075
  %4131 = vmatpush.msra.mxu0 %v4074
  %4132 = vmatpush.msra.mxu0 %v4073
  %4133 = vmatpush.msra.mxu0 %v4072
  %4134 = vmatmul.f32.gmra.mxu0 %v4107
  %v4135 = vpop.f32.mrf.mxu0
  %v4136 = vadd.f32 %v4089, %v4135
  %4137 = vmatmul.f32.gmra.mxu0 %v4110
  %v4138 = vpop.f32.mrf.mxu0
  %v4139 = vadd.f32 %v4094, %v4138
  %4140 = vmatmul.f32.gmra.mxu0 %v4113
  %v4141 = vpop.f32.mrf.mxu0
  %v4142 = vadd.f32 %v4099, %v4141
  %4143 = vmatmul.f32.gmra.mxu0 %v4116
  %v4144 = vpop.f32.mrf.mxu0
  %v4145 = vadd.f32 %v4104, %v4144
  %4146 = vdwg.mxu0
  %v4147 = vmul.f32 %v4136, 0.5
  %v4148 = vmul.f32 %v4139, 0.5
  %v4149 = vmul.f32 %v4142, 0.5
  %v4150 = vmul.f32 %v4145, 0.5
  %v4151 = vmul.f32 %v4136, 0.70710677
  %v4152 = vmul.f32 %v4139, 0.70710677
  %v4153 = vmul.f32 %v4142, 0.70710677
  %v4154 = vmul.f32 %v4145, 0.70710677
  %v4155 = vmul.f32 %v4151, %v4151
  %v4156 = vmin.f32 16.0, %v4155
  %v4157 = vmul.f32 %v4156, 2.1237322e-06
  %v4158 = vadd.f32 %v4157, 0.00028619796
  %v4159 = vmul.f32 %v4156, %v4158
  %v4160 = vadd.f32 %v4159, 0.0036580483
  %v4161 = vmul.f32 %v4156, %v4160
  %v4162 = vadd.f32 %v4161, 0.05243302
  %v4163 = vmul.f32 %v4156, %v4162
  %v4164 = vadd.f32 %v4163, 0.18741608
  %v4165 = vmul.f32 %v4156, %v4164
  %v4166 = vadd.f32 %v4165, 1.1283791
  %v4167 = vmul.f32 %v4151, %v4166
  %v4168 = vmul.f32 %v4156, 3.8918573e-05
  %v4169 = vadd.f32 %v4168, 0.001143296
  %v4170 = vmul.f32 %v4156, %v4169
  %v4171 = vadd.f32 %v4170, 0.014752088
  %v4172 = vmul.f32 %v4156, %v4171
  %v4173 = vadd.f32 %v4172, 0.112945676
  %v4174 = vmul.f32 %v4156, %v4173
  %v4175 = vadd.f32 %v4174, 0.4994258
  %v4176 = vmul.f32 %v4156, %v4175
  %v4177 = vadd.f32 %v4176, 1.0
  %v4178 = vrcp.pop %v4177
  %v4179 = vmul.f32 %v4177, %v4178
  %v4180 = vsub.f32 1.0, %v4179
  %v4181 = vmul.f32 %v4178, %v4180
  %v4182 = vadd.f32 %v4178, %v4181
  %vm4183 = vweird.f32 %v4177
  %vm4184 = vweird.f32 %v4178
  %vm4185 = vmor %vm4183, %vm4184
  %v4186 = vsel %vm4185, %v4178, %v4182
  %v4187 = vand.u32 2147483647, %v4177
  %vm4188 = vcmp.eq.f32.partialorder %v4187, 8.507059e+37
  %v4189 = vand.u32 %v4177, 2147483648
  %v4190 = vor.u32 1.1754944e-38, %v4189
  %v4191 = vsel %vm4188, %v4190, %v4186
  %v4192 = vmul.f32 %v4167, %v4191
  %v4193 = vmin.f32 %v4192, 1.0
  %v4194 = vmax.f32 %v4193, -1.0
  %v4195 = vmul.f32 %v4152, %v4152
  %v4196 = vmin.f32 16.0, %v4195
  %v4197 = vmul.f32 %v4196, 2.1237322e-06
  %v4198 = vadd.f32 %v4197, 0.00028619796
  %v4199 = vmul.f32 %v4196, %v4198
  %v4200 = vadd.f32 %v4199, 0.0036580483
  %v4201 = vmul.f32 %v4196, %v4200
  %v4202 = vadd.f32 %v4201, 0.05243302
  %v4203 = vmul.f32 %v4196, %v4202
  %v4204 = vadd.f32 %v4203, 0.18741608
  %v4205 = vmul.f32 %v4196, %v4204
  %v4206 = vadd.f32 %v4205, 1.1283791
  %v4207 = vmul.f32 %v4152, %v4206
  %v4208 = vmul.f32 %v4196, 3.8918573e-05
  %v4209 = vadd.f32 %v4208, 0.001143296
  %v4210 = vmul.f32 %v4196, %v4209
  %v4211 = vadd.f32 %v4210, 0.014752088
  %v4212 = vmul.f32 %v4196, %v4211
  %v4213 = vadd.f32 %v4212, 0.112945676
  %v4214 = vmul.f32 %v4196, %v4213
  %v4215 = vadd.f32 %v4214, 0.4994258
  %v4216 = vmul.f32 %v4196, %v4215
  %v4217 = vadd.f32 %v4216, 1.0
  %v4218 = vrcp.pop %v4217
  %v4219 = vmul.f32 %v4217, %v4218
  %v4220 = vsub.f32 1.0, %v4219
  %v4221 = vmul.f32 %v4218, %v4220
  %v4222 = vadd.f32 %v4218, %v4221
  %vm4223 = vweird.f32 %v4217
  %vm4224 = vweird.f32 %v4218
  %vm4225 = vmor %vm4223, %vm4224
  %v4226 = vsel %vm4225, %v4218, %v4222
  %v4227 = vand.u32 2147483647, %v4217
  %vm4228 = vcmp.eq.f32.partialorder %v4227, 8.507059e+37
  %v4229 = vand.u32 %v4217, 2147483648
  %v4230 = vor.u32 1.1754944e-38, %v4229
  %v4231 = vsel %vm4228, %v4230, %v4226
  %v4232 = vmul.f32 %v4207, %v4231
  %v4233 = vmin.f32 %v4232, 1.0
  %v4234 = vmax.f32 %v4233, -1.0
  %v4235 = vmul.f32 %v4153, %v4153
  %v4236 = vmin.f32 16.0, %v4235
  %v4237 = vmul.f32 %v4236, 2.1237322e-06
  %v4238 = vadd.f32 %v4237, 0.00028619796
  %v4239 = vmul.f32 %v4236, %v4238
  %v4240 = vadd.f32 %v4239, 0.0036580483
  %v4241 = vmul.f32 %v4236, %v4240
  %v4242 = vadd.f32 %v4241, 0.05243302
  %v4243 = vmul.f32 %v4236, %v4242
  %v4244 = vadd.f32 %v4243, 0.18741608
  %v4245 = vmul.f32 %v4236, %v4244
  %v4246 = vadd.f32 %v4245, 1.1283791
  %v4247 = vmul.f32 %v4153, %v4246
  %v4248 = vmul.f32 %v4236, 3.8918573e-05
  %v4249 = vadd.f32 %v4248, 0.001143296
  %v4250 = vmul.f32 %v4236, %v4249
  %v4251 = vadd.f32 %v4250, 0.014752088
  %v4252 = vmul.f32 %v4236, %v4251
  %v4253 = vadd.f32 %v4252, 0.112945676
  %v4254 = vmul.f32 %v4236, %v4253
  %v4255 = vadd.f32 %v4254, 0.4994258
  %v4256 = vmul.f32 %v4236, %v4255
  %v4257 = vadd.f32 %v4256, 1.0
  %v4258 = vrcp.pop %v4257
  %v4259 = vmul.f32 %v4257, %v4258
  %v4260 = vsub.f32 1.0, %v4259
  %v4261 = vmul.f32 %v4258, %v4260
  %v4262 = vadd.f32 %v4258, %v4261
  %vm4263 = vweird.f32 %v4257
  %vm4264 = vweird.f32 %v4258
  %vm4265 = vmor %vm4263, %vm4264
  %v4266 = vsel %vm4265, %v4258, %v4262
  %v4267 = vand.u32 2147483647, %v4257
  %vm4268 = vcmp.eq.f32.partialorder %v4267, 8.507059e+37
  %v4269 = vand.u32 %v4257, 2147483648
  %v4270 = vor.u32 1.1754944e-38, %v4269
  %v4271 = vsel %vm4268, %v4270, %v4266
  %v4272 = vmul.f32 %v4247, %v4271
  %v4273 = vmin.f32 %v4272, 1.0
  %v4274 = vmax.f32 %v4273, -1.0
  %v4275 = vmul.f32 %v4154, %v4154
  %v4276 = vmin.f32 16.0, %v4275
  %v4277 = vmul.f32 %v4276, 2.1237322e-06
  %v4278 = vadd.f32 %v4277, 0.00028619796
  %v4279 = vmul.f32 %v4276, %v4278
  %v4280 = vadd.f32 %v4279, 0.0036580483
  %v4281 = vmul.f32 %v4276, %v4280
  %v4282 = vadd.f32 %v4281, 0.05243302
  %v4283 = vmul.f32 %v4276, %v4282
  %v4284 = vadd.f32 %v4283, 0.18741608
  %v4285 = vmul.f32 %v4276, %v4284
  %v4286 = vadd.f32 %v4285, 1.1283791
  %v4287 = vmul.f32 %v4154, %v4286
  %v4288 = vmul.f32 %v4276, 3.8918573e-05
  %v4289 = vadd.f32 %v4288, 0.001143296
  %v4290 = vmul.f32 %v4276, %v4289
  %v4291 = vadd.f32 %v4290, 0.014752088
  %v4292 = vmul.f32 %v4276, %v4291
  %v4293 = vadd.f32 %v4292, 0.112945676
  %v4294 = vmul.f32 %v4276, %v4293
  %v4295 = vadd.f32 %v4294, 0.4994258
  %v4296 = vmul.f32 %v4276, %v4295
  %v4297 = vadd.f32 %v4296, 1.0
  %v4298 = vrcp.pop %v4297
  %v4299 = vmul.f32 %v4297, %v4298
  %v4300 = vsub.f32 1.0, %v4299
  %v4301 = vmul.f32 %v4298, %v4300
  %v4302 = vadd.f32 %v4298, %v4301
  %vm4303 = vweird.f32 %v4297
  %vm4304 = vweird.f32 %v4298
  %vm4305 = vmor %vm4303, %vm4304
  %v4306 = vsel %vm4305, %v4298, %v4302
  %v4307 = vand.u32 2147483647, %v4297
  %vm4308 = vcmp.eq.f32.partialorder %v4307, 8.507059e+37
  %v4309 = vand.u32 %v4297, 2147483648
  %v4310 = vor.u32 1.1754944e-38, %v4309
  %v4311 = vsel %vm4308, %v4310, %v4306
  %v4312 = vmul.f32 %v4287, %v4311
  %v4313 = vmin.f32 %v4312, 1.0
  %v4314 = vmax.f32 %v4313, -1.0
  %v4315 = vadd.f32 %v4194, 1.0
  %v4316 = vadd.f32 %v4234, 1.0
  %v4317 = vadd.f32 %v4274, 1.0
  %v4318 = vadd.f32 %v4314, 1.0
  %v4319 = vmul.f32 %v4147, %v4315
  %v4320 = vmul.f32 %v4148, %v4316
  %v4321 = vmul.f32 %v4149, %v4317
  %v4322 = vmul.f32 %v4150, %v4318
  %s4323 = scalar_lea.vmem %s12, 96
  %v4324 = vld [vmem:[%s4323] sm:$0xff]
  %v4325 = vld [vmem:[%s4323 + $0x8] sm:$0xff]
  %v4326 = vld [vmem:[%s4323 + $0x10] sm:$0xff]
  %v4327 = vld [vmem:[%s4323 + $0x18] sm:$0xff]
  %4329 = vset.pattern.permute.xlu0 0
  %4330 = vperm.xlu0 %4329, %v4324
  %v4331 = vpop.permute.xlu0 %4330
  %4334 = vset.pattern.permute.xlu0 0
  %4335 = vperm.xlu0 %4334, %v4325
  %v4336 = vpop.permute.xlu0 %4335
  %4339 = vset.pattern.permute.xlu0 0
  %4340 = vperm.xlu0 %4339, %v4326
  %v4341 = vpop.permute.xlu0 %4340
  %4344 = vset.pattern.permute.xlu0 0
  %4345 = vperm.xlu0 %4344, %v4327
  %v4346 = vpop.permute.xlu0 %4345
  %v4348 = vmul.f32 %v4319, %v4331
  %v4349 = vmul.f32 %v4320, %v4336
  %v4350 = vmul.f32 %v4321, %v4341
  %v4351 = vmul.f32 %v4322, %v4346
  %s4352 = scalar_lea.vmem %s13, 96
  %v4353 = vld [vmem:[%s4352] sm:$0xff]
  %v4354 = vld [vmem:[%s4352 + $0x8] sm:$0xff]
  %v4355 = vld [vmem:[%s4352 + $0x10] sm:$0xff]
  %v4356 = vld [vmem:[%s4352 + $0x18] sm:$0xff]
  %4358 = vset.pattern.permute.xlu0 0
  %4359 = vperm.xlu0 %4358, %v4353
  %v4360 = vpop.permute.xlu0 %4359
  %4363 = vset.pattern.permute.xlu0 0
  %4364 = vperm.xlu0 %4363, %v4354
  %v4365 = vpop.permute.xlu0 %4364
  %4368 = vset.pattern.permute.xlu0 0
  %4369 = vperm.xlu0 %4368, %v4355
  %v4370 = vpop.permute.xlu0 %4369
  %4373 = vset.pattern.permute.xlu0 0
  %4374 = vperm.xlu0 %4373, %v4356
  %v4375 = vpop.permute.xlu0 %4374
  %v4377 = vadd.f32 %v4348, %v4360
  %v4378 = vadd.f32 %v4349, %v4365
  %v4379 = vadd.f32 %v4350, %v4370
  %v4380 = vadd.f32 %v4351, %v4375
  %4381 = vmatpush.msra.mxu0 %v384
  %4382 = vmatpush.msra.mxu0 %v383
  %4383 = vmatpush.msra.mxu0 %v382
  %4384 = vmatpush.msra.mxu0 %v381
  %4385 = vmatpush.msra.mxu0 %v380
  %4386 = vmatpush.msra.mxu0 %v379
  %4387 = vmatpush.msra.mxu0 %v378
  %4388 = vmatpush.msra.mxu0 %v377
  %4389 = vmatpush.msra.mxu0 %v376
  %4390 = vmatpush.msra.mxu0 %v375
  %4391 = vmatpush.msra.mxu0 %v374
  %4392 = vmatpush.msra.mxu0 %v373
  %4393 = vmatpush.msra.mxu0 %v372
  %4394 = vmatpush.msra.mxu0 %v371
  %4395 = vmatpush.msra.mxu0 %v370
  %4396 = vmatpush.msra.mxu0 %v369
  %4397 = vmatmul.f32.gmra.mxu0 %v4377
  %v4398 = vpop.f32.mrf.mxu0
  %v4399 = vadd.f32 0.0, %v4398
  %4400 = vmatmul.f32.gmra.mxu0 %v4378
  %v4401 = vpop.f32.mrf.mxu0
  %v4402 = vadd.f32 0.0, %v4401
  %4403 = vmatmul.f32.gmra.mxu0 %v4379
  %v4404 = vpop.f32.mrf.mxu0
  %v4405 = vadd.f32 0.0, %v4404
  %4406 = vmatmul.f32.gmra.mxu0 %v4380
  %v4407 = vpop.f32.mrf.mxu0
  %v4408 = vadd.f32 0.0, %v4407
  %4409 = vdwg.mxu0
  %s4410 = scalar_lea.vmem %s14, 48
  %v4411 = vld [vmem:[%s4410] sm:$0xff]
  %v4412 = vld [vmem:[%s4410 + $0x8] sm:$0x3]
  %s4413 = scalar_lea.vmem %s15, 48
  %v4414 = vld [vmem:[%s4413] sm:$0xff]
  %v4415 = vld [vmem:[%s4413 + $0x8] sm:$0x3]
  %4417 = vset.pattern.permute.xlu0 0
  %4418 = vperm.xlu0 %4417, %v4414
  %v4419 = vpop.permute.xlu0 %4418
  %4422 = vset.pattern.permute.xlu0 0
  %4423 = vperm.xlu0 %4422, %v4415
  %v4424 = vpop.permute.xlu0 %4423
  %v4427 = vsel %vm1045, %v4411, 0
  %v4430 = vsel %vm1045, %v4412, 0
  %4432 = vmatpush.msra.mxu0 0.0
  %4433 = vmatpush.msra.mxu0 0.0
  %4434 = vmatpush.msra.mxu0 0.0
  %4435 = vmatpush.msra.mxu0 0.0
  %4436 = vmatpush.msra.mxu0 0.0
  %4437 = vmatpush.msra.mxu0 0.0
  %4438 = vmatpush.msra.mxu0 0.0
  %4439 = vmatpush.msra.mxu0 0.0
  %4440 = vmatpush.msra.mxu0 0.0
  %4441 = vmatpush.msra.mxu0 0.0
  %4442 = vmatpush.msra.mxu0 0.0
  %4443 = vmatpush.msra.mxu0 0.0
  %4444 = vmatpush.msra.mxu0 %v4408
  %4445 = vmatpush.msra.mxu0 %v4405
  %4446 = vmatpush.msra.mxu0 %v4402
  %4447 = vmatpush.msra.mxu0 %v4399
  %4448 = vmatmul.f32.gmra.mxu0 %v4427
  %v4449 = vpop.f32.mrf.mxu0
  %v4450 = vadd.f32 %v4419, %v4449
  %4451 = vmatmul.f32.gmra.mxu0 %v4430
  %v4452 = vpop.f32.mrf.mxu0
  %v4453 = vadd.f32 %v4424, %v4452
  %4454 = vdwg.mxu0
  %v4455 = vadd.f32 %v3482, %v4450
  %v4456 = vadd.f32 %v3483, %v4453
  %v4457 = vsel %vm1393, %v4455, 0.0
  %v4458 = vsel %vm1395, %v4456, 0.0
  %v4459 = vadd.f32 %v4457, %v4458
  %v4460 = vrot.slane %v4459, 4
  %v4461 = vadd.f32 %v4459, %v4460
  %v4462 = vrot.slane %v4461, 2
  %v4463 = vadd.f32 %v4461, %v4462
  %v4464 = vrot.slane %v4463, 1
  %v4465 = vadd.f32 %v4463, %v4464
  %v4466 = vmul.f32 %v4465, %v1410
  %v4467 = vsub.f32 %v4455, %v4466
  %v4468 = vsub.f32 %v4456, %v4466
  %v4469 = vadd.f32 %v4467, %v1417
  %v4470 = vadd.f32 %v4468, %v1422
  %v4471 = vsel %vm1393, %v4469, -inf
  %v4472 = vsel %vm1395, %v4470, -inf
  %v4473 = vmax.f32 %v4471, %v4472
  %v4474 = vrot.slane %v4473, 4
  %v4475 = vmax.f32 %v4473, %v4474
  %v4476 = vrot.slane %v4475, 2
  %v4477 = vmax.f32 %v4475, %v4476
  %v4478 = vrot.slane %v4477, 1
  %v4479 = vmax.f32 %v4477, %v4478
  %v4480 = vsub.f32 %v4469, %v4479
  %v4481 = vsub.f32 %v4470, %v4479
  %v4482 = vmul.f32 %v4480, 1.442695
  %v4483 = vpow.pop %v4482
  %v4484 = vmul.f32 %v4481, 1.442695
  %v4485 = vpow.pop %v4484
  %v4486 = vsel %vm1393, %v4483, 0.0
  %v4487 = vsel %vm1395, %v4485, 0.0
  %v4488 = vadd.f32 %v4486, %v4487
  %v4489 = vrot.slane %v4488, 4
  %v4490 = vadd.f32 %v4488, %v4489
  %v4491 = vrot.slane %v4490, 2
  %v4492 = vadd.f32 %v4490, %v4491
  %v4493 = vrot.slane %v4492, 1
  %v4494 = vadd.f32 %v4492, %v4493
  %v4495 = vlog2.pop %v4494
  %v4496 = vmul.f32 %v4495, 0.6931472
  %v4497 = vsub.f32 %v4480, %v4496
  %v4498 = vsub.f32 %v4481, %v4496
  %4499 = vst.msk [vmem:[%s18] sm:$0xff] %vm1393, %v4497
  %4500 = vst.msk [vmem:[%s18 + $0x8] sm:$0x3] %vm1395, %v4498
  // Predicated region
  $region74: #{bayes_convmixer2_forward.1} parent=0 // pred_check
    _
  $region75: #{bayes_convmixer2_forward.1} parent=0 // pred_check_branch
    %4502 = sbr.rel (0) target = $region77
  $region76: #{bayes_convmixer2_forward.1} parent=0 // pred_region
    _
  $region77: #{bayes_convmixer2_forward.1} parent=0 // pred_fallthru
    _
  // Predicated region
  $region78: #{bayes_convmixer2_forward.1} parent=0 // pred_check
    _
  $region79: #{bayes_convmixer2_forward.1} parent=0 // pred_check_branch
    %4504 = sbr.rel (0) target = $region81
  $region80: #{bayes_convmixer2_forward.1} parent=0 // pred_region
    _
  $region81: #{bayes_convmixer2_forward.1} parent=0 // pred_fallthru
    _

</llo_original>
